<compile_context>
chip_gen: v7x
topology: tpu7x:2x2x1
jax: 0.10.0
libtpu: 0.0.40
codegen_flags: <defaults>
</compile_context>

<pallas_src>
import functools

import jax
import jax.numpy as jnp
from jax.experimental import pallas as pl
from jax.experimental.pallas import tpu as pltpu


# 48 MiB scoped VMEM: <= v7x physical (64 MiB); v5e/v6e (128 MiB) could go higher.
VMEM_LIMIT_BYTES = 48 * 1024 * 1024


# --------------------------------------------------------------------------
# In-kernel helpers (traced Python, fused into the calling kernel)
# --------------------------------------------------------------------------

def _mha(q, k, v, keep, wo, heads, neg):
    """Masked multi-head softmax attention + single fc_out projection.

    q: (Lq, E) f32 — the 1/sqrt(E) softmax scale is already folded into the Q
    projection weights.  k, v: (Lk, E) f32.  keep: (Lq, Lk) bool (True=attend).
    wo: (E, E) bf16.  Returns (Lq, E) f32 = concat-head context @ wo (no bias).
    """
    Lq, E = q.shape
    D = E // heads
    qb = q.astype(jnp.bfloat16)
    kb = k.astype(jnp.bfloat16)
    vb = v.astype(jnp.bfloat16)
    ctx = []
    for h in range(heads):                      # static unroll over heads
        lo, hi = h * D, (h + 1) * D
        # energy[i, j] = sum_d q[i, d] * k[j, d]   (scale already in q)
        e_h = jax.lax.dot_general(qb[:, lo:hi], kb[:, lo:hi],
                                  (((1,), (1,)), ((), ())),
                                  preferred_element_type=jnp.float32)
        e_h = jnp.where(keep, e_h, neg)         # `keep` computed once by caller
        e_h = e_h - jnp.max(e_h, axis=-1, keepdims=True)
        p = jnp.exp(e_h)
        p = p * pl.reciprocal(jnp.sum(p, axis=-1, keepdims=True), approx=True)
        ctx.append(jnp.dot(p.astype(jnp.bfloat16), vb[:, lo:hi],
                           preferred_element_type=jnp.float32))
    # One full-E contraction against fc_out instead of `heads` narrow ones.
    ctx = jnp.concatenate(ctx, axis=-1).astype(jnp.bfloat16)      # (Lq, E)
    return jnp.dot(ctx, wo, preferred_element_type=jnp.float32)


def _residual_layernorm(y, resid, gamma, beta):
    """(y + resid) -> LayerNorm(eps=1e-5) with affine gamma/beta; f32 math."""
    x = y + resid.astype(jnp.float32)
    mu = jnp.mean(x, axis=-1, keepdims=True)
    var = jnp.mean((x - mu) ** 2, axis=-1, keepdims=True)
    return (x - mu) * jax.lax.rsqrt(var + 1e-5) * gamma + beta


# --------------------------------------------------------------------------
# The fused decoder-block kernel (one grid step = one (batch, q-tile))
# --------------------------------------------------------------------------

def _decoder_block_kernel(
    xf_ref, xq_ref, tm_ref, k_in_ref, v_in_ref, sm_ref,
    s_wq_ref, s_bq_ref, s_wkv_ref, s_bkv_ref, s_wo_ref, s_bo_ref, s_g_ref, s_b_ref,
    c_wq_ref, c_bq_ref, c_wk_ref, c_bk_ref, c_wv_ref, c_bv_ref,
    c_wo_ref, c_bo_ref, c_g_ref, c_b_ref,
    f_w1_ref, f_b1_ref, f_w2_ref, f_b2_ref, f_g_ref, f_b_ref,
    o_ref, *, heads, neg_fill):
    E = xf_ref.shape[-1]
    neg = jnp.float32(neg_fill)

    x_q = xq_ref[0].astype(jnp.float32)          # (TQ, E) query rows / residual
    xq_b = xq_ref[0].astype(jnp.bfloat16)
    xf_b = xf_ref[0].astype(jnp.bfloat16)        # (L, E) self-attn K/V source

    # ---- masked self-attention -> +fc_out bias -> residual -> LayerNorm ----
    q = jnp.dot(xq_b, s_wq_ref[...], preferred_element_type=jnp.float32) + s_bq_ref[...]
    kv = jnp.dot(xf_b, s_wkv_ref[...], preferred_element_type=jnp.float32) + s_bkv_ref[...]
    keep_t = tm_ref[0, 0].astype(jnp.int32) != 0                  # (TQ, L), once
    attn = _mha(q, kv[:, :E], kv[:, E:], keep_t, s_wo_ref[...], heads, neg)
    query = _residual_layernorm(attn + s_bo_ref[...], x_q, s_g_ref[...], s_b_ref[...])

    # ---- cross-attention over encoder key/value (residual = query) ----
    q2 = jnp.dot(query.astype(jnp.bfloat16), c_wq_ref[...],
                 preferred_element_type=jnp.float32) + c_bq_ref[...]
    k2 = jnp.dot(k_in_ref[0].astype(jnp.bfloat16), c_wk_ref[...],
                 preferred_element_type=jnp.float32) + c_bk_ref[...]
    v2 = jnp.dot(v_in_ref[0].astype(jnp.bfloat16), c_wv_ref[...],
                 preferred_element_type=jnp.float32) + c_bv_ref[...]
    keep_s = sm_ref[0, 0].astype(jnp.int32) != 0                  # (TQ, Lk), once
    attn2 = _mha(q2, k2, v2, keep_s, c_wo_ref[...], heads, neg)
    h = _residual_layernorm(attn2 + c_bo_ref[...], query, c_g_ref[...], c_b_ref[...])

    # ---- feed-forward: Linear -> ReLU -> Linear -> residual -> LayerNorm ----
    f1 = jnp.dot(h.astype(jnp.bfloat16), f_w1_ref[...],
                 preferred_element_type=jnp.float32) + f_b1_ref[...]
    f1 = jnp.maximum(f1, 0.0).astype(jnp.bfloat16)   # keep second matmul bf16
    f2 = jnp.dot(f1, f_w2_ref[...], preferred_element_type=jnp.float32) + f_b2_ref[...]
    out = _residual_layernorm(f2, h, f_g_ref[...], f_b_ref[...])

    o_ref[0] = out.astype(o_ref.dtype)


# --------------------------------------------------------------------------
# Wrapper
# --------------------------------------------------------------------------

def _pick_q_tile(L):
    """Full sequence per step when it comfortably fits, else a 128..512 tile."""
    if L <= 512:
        return L
    for t in (512, 256, 128):
        if L % t == 0:
            return t
    return L


def decoder_block(params, x, value, key, src_mask, trg_mask, heads, q_tile=None):
    """Fused DecoderBlock forward.

    x: (N, L, E) target sequence;  value/key: (N, Lk, E) encoder outputs;
    trg_mask: (N, 1, L, L) int8/bool;  src_mask: (N, 1, L, Lk) int8/bool.
    Dropout is identity (eval mode).
    """
    N, L, E = x.shape
    Lk = key.shape[1]
    assert value.shape == key.shape
    assert E % heads == 0
    TQ = q_tile if q_tile is not None else _pick_q_tile(L)
    assert L % TQ == 0
    F = params["ffn"]["w1"].shape[1]
    # masked_fill(-1e20) happens before the /sqrt(E) in the reference; the
    # scale is folded into the Q weights, so pre-scale the fill value.
    neg_fill = -1e20 / (E ** 0.5)
    kern = functools.partial(_decoder_block_kernel, heads=heads, neg_fill=neg_fill)

    w2 = lambda n, q: (0, 0)     # resident weights: constant block index
    in_specs = [
        pl.BlockSpec((1, L, E), lambda n, q: (n, 0, 0)),           # x (self K/V)
        pl.BlockSpec((1, TQ, E), lambda n, q: (n, q, 0)),          # x query tile
        pl.BlockSpec((1, 1, TQ, L), lambda n, q: (n, 0, q, 0)),    # trg mask tile
        pl.BlockSpec((1, Lk, E), lambda n, q: (n, 0, 0)),          # encoder key
        pl.BlockSpec((1, Lk, E), lambda n, q: (n, 0, 0)),          # encoder value
        pl.BlockSpec((1, 1, TQ, Lk), lambda n, q: (n, 0, q, 0)),   # src mask tile
        # self-attention params
        pl.BlockSpec((E, E), w2), pl.BlockSpec((1, E), w2),        # wq, bq (scaled)
        pl.BlockSpec((E, 2 * E), w2), pl.BlockSpec((1, 2 * E), w2),  # wkv, bkv
        pl.BlockSpec((E, E), w2), pl.BlockSpec((1, E), w2),        # wo, bo
        pl.BlockSpec((1, E), w2), pl.BlockSpec((1, E), w2),        # norm g, b
        # cross-attention params
        pl.BlockSpec((E, E), w2), pl.BlockSpec((1, E), w2),        # wq, bq (scaled)
        pl.BlockSpec((E, E), w2), pl.BlockSpec((1, E), w2),        # wk, bk
        pl.BlockSpec((E, E), w2), pl.BlockSpec((1, E), w2),        # wv, bv
        pl.BlockSpec((E, E), w2), pl.BlockSpec((1, E), w2),        # wo, bo
        pl.BlockSpec((1, E), w2), pl.BlockSpec((1, E), w2),        # norm1 g, b
        # feed-forward params
        pl.BlockSpec((E, F), w2), pl.BlockSpec((1, F), w2),        # w1, b1
        pl.BlockSpec((F, E), w2), pl.BlockSpec((1, E), w2),        # w2, b2
        pl.BlockSpec((1, E), w2), pl.BlockSpec((1, E), w2),        # norm2 g, b
    ]

    pa, pc, pf = params["attn"], params["tb_attn"], params["ffn"]
    return pl.pallas_call(
        kern,
        out_shape=jax.ShapeDtypeStruct((N, L, E), x.dtype),
        grid=(N, L // TQ),
        in_specs=in_specs,
        out_specs=pl.BlockSpec((1, TQ, E), lambda n, q: (n, q, 0)),
        compiler_params=pltpu.CompilerParams(
            dimension_semantics=("parallel", "parallel"),
            vmem_limit_bytes=VMEM_LIMIT_BYTES),
    )(x, x, trg_mask, key, value, src_mask,
      pa["wq"], pa["bq"], pa["wkv"], pa["bkv"], pa["wo"], pa["bo"],
      params["norm_g"], params["norm_b"],
      pc["wq"], pc["bq"], pc["wk"], pc["bk"], pc["wv"], pc["bv"],
      pc["wo"], pc["bo"], params["tb_norm1_g"], params["tb_norm1_b"],
      pf["w1"], pf["b1"], pf["w2"], pf["b2"],
      params["tb_norm2_g"], params["tb_norm2_b"])


# --------------------------------------------------------------------------
# Deterministic parameter init (mimics nn.Linear / nn.LayerNorm defaults)
# --------------------------------------------------------------------------

def _init_linear(key, fan_in, fan_out):
    kw, kb = jax.random.split(key)
    bound = 1.0 / (fan_in ** 0.5)
    # stored as (in, out) so kernels compute x @ w + b  (== x @ W_pt.T + b)
    w = jax.random.uniform(kw, (fan_in, fan_out), jnp.float32, -bound, bound)
    b = jax.random.uniform(kb, (1, fan_out), jnp.float32, -bound, bound)
    return w, b


def _init_self_attn(key, E, scale):
    ks = jax.random.split(key, 4)
    wq, bq = _init_linear(ks[0], E, E)
    wk, bk = _init_linear(ks[1], E, E)
    wv, bv = _init_linear(ks[2], E, E)
    wo, bo = _init_linear(ks[3], E, E)
    return dict(
        wq=(wq * scale).astype(jnp.bfloat16),   # softmax 1/sqrt(E) folded in
        bq=bq * scale,                          # bias scaled too (f32)
        wkv=jnp.concatenate([wk, wv], axis=1).astype(jnp.bfloat16),
        bkv=jnp.concatenate([bk, bv], axis=1),
        wo=wo.astype(jnp.bfloat16), bo=bo)


def _init_cross_attn(key, E, scale):
    ks = jax.random.split(key, 4)
    wq, bq = _init_linear(ks[0], E, E)
    wk, bk = _init_linear(ks[1], E, E)
    wv, bv = _init_linear(ks[2], E, E)
    wo, bo = _init_linear(ks[3], E, E)
    return dict(wq=(wq * scale).astype(jnp.bfloat16), bq=bq * scale,
                wk=wk.astype(jnp.bfloat16), bk=bk,
                wv=wv.astype(jnp.bfloat16), bv=bv,
                wo=wo.astype(jnp.bfloat16), bo=bo)


def init_decoder_block(key, embed_size, forward_expansion):
    E = embed_size
    scale = 1.0 / (E ** 0.5)
    ks = jax.random.split(key, 4)
    F = forward_expansion * E
    w1, b1 = _init_linear(ks[2], E, F)
    w2, b2 = _init_linear(ks[3], F, E)
    ones = jnp.ones((1, E), jnp.float32)
    zeros = jnp.zeros((1, E), jnp.float32)
    return dict(
        attn=_init_self_attn(ks[0], E, scale),
        norm_g=ones, norm_b=zeros,
        tb_attn=_init_cross_attn(ks[1], E, scale),
        tb_norm1_g=ones, tb_norm1_b=zeros,
        tb_norm2_g=ones, tb_norm2_b=zeros,
        ffn=dict(w1=w1.astype(jnp.bfloat16), b1=b1,
                 w2=w2.astype(jnp.bfloat16), b2=b2),
    )


# --------------------------------------------------------------------------
# Pure-JAX (f32) reference for validation — mirrors the kernel's math
# (same bf16-stored weights, scale folded into Q) in full f32.
# --------------------------------------------------------------------------

def _reference_decoder_block(params, x, value, key, src_mask, trg_mask, heads):
    f32 = lambda t: t.astype(jnp.float32)
    E = x.shape[-1]
    neg = jnp.float32(-1e20 / (E ** 0.5))

    def mha(q, k, v, mask, wo, bo):
        N, Lq, _ = q.shape
        Lk = k.shape[1]
        D = E // heads
        qh = q.reshape(N, Lq, heads, D)
        kh = k.reshape(N, Lk, heads, D)
        vh = v.reshape(N, Lk, heads, D)
        e = jnp.einsum('nqhd,nkhd->nhqk', qh, kh)
        e = jnp.where(mask == 0, neg, e)        # mask (N,1,Lq,Lk) broadcasts
        p = jax.nn.softmax(e, axis=-1)
        ctx = jnp.einsum('nhqk,nkhd->nqhd', p, vh).reshape(N, Lq, E)
        return ctx @ f32(wo) + bo

    def ln(t, g, b):
        mu = t.mean(-1, keepdims=True)
        var = ((t - mu) ** 2).mean(-1, keepdims=True)
        return (t - mu) * jax.lax.rsqrt(var + 1e-5) * g + b

    pa = params["attn"]
    q = x @ f32(pa["wq"]) + pa["bq"]
    kv = x @ f32(pa["wkv"]) + pa["bkv"]
    query = ln(mha(q, kv[..., :E], kv[..., E:], trg_mask, pa["wo"], pa["bo"]) + x,
               params["norm_g"], params["norm_b"])

    pc = params["tb_attn"]
    q2 = query @ f32(pc["wq"]) + pc["bq"]
    k2 = key @ f32(pc["wk"]) + pc["bk"]
    v2 = value @ f32(pc["wv"]) + pc["bv"]
    h = ln(mha(q2, k2, v2, src_mask, pc["wo"], pc["bo"]) + query,
           params["tb_norm1_g"], params["tb_norm1_b"])

    pf = params["ffn"]
    f1 = jnp.maximum(h @ f32(pf["w1"]) + pf["b1"], 0.0)
    f2 = f1 @ f32(pf["w2"]) + pf["b2"]
    return ln(f2 + h, params["tb_norm2_g"], params["tb_norm2_b"])


# --------------------------------------------------------------------------
# Demo
# --------------------------------------------------------------------------

if __name__ == "__main__":
    embed_size = 32
    heads = 4
    forward_expansion = 2
    N = 2
    L_trg = 64   # target sequence length
    L_src = 32   # encoder (source) sequence length
    Q_TILE = 32  # two query tiles per batch element -> exercises the 2-D grid

    root = jax.random.PRNGKey(0)
    k_par, k_x, k_v, k_k = jax.random.split(root, 4)

    params = init_decoder_block(k_par, embed_size, forward_expansion)

    x = jax.random.normal(k_x, (N, L_trg, embed_size), jnp.float32)
    value = jax.random.normal(k_v, (N, L_src, embed_size), jnp.float32)
    key = jax.random.normal(k_k, (N, L_src, embed_size), jnp.float32)

    # Masks as int8 (4x less mask DMA than f32): causal trg, all-ones src.
    trg_mask = jnp.broadcast_to(
        jnp.tril(jnp.ones((L_trg, L_trg), jnp.int8)), (N, 1, L_trg, L_trg))
    src_mask = jnp.ones((N, 1, L_trg, L_src), jnp.int8)

    out = decoder_block(params, x, value, key, src_mask, trg_mask, heads,
                        q_tile=Q_TILE)
    out = jax.block_until_ready(out)
    assert out.shape == (N, L_trg, embed_size)
    assert bool(jnp.all(jnp.isfinite(out)))

    # Loose check against a pure-JAX f32 reference (bf16 MXU operands and the
    # approximate EUP reciprocal introduce ~1e-2 level deviations).
    ref = _reference_decoder_block(params, x, value, key, src_mask, trg_mask, heads)
    assert float(jnp.max(jnp.abs(out - ref.astype(out.dtype)))) < 0.3

    print("KERNEL_OK")
</pallas_src>

<mosaic_0001>
module attributes {stable_mosaic.version = 11 : i64} {
  func.func @_decoder_block_kernel(%arg0: i32, %arg1: i32, %arg2: memref<1x64x32xf32, #tpu.memory_space<vmem>>, %arg3: memref<1x32x32xf32, #tpu.memory_space<vmem>>, %arg4: memref<1x1x32x64xi8, #tpu.memory_space<vmem>>, %arg5: memref<1x32x32xf32, #tpu.memory_space<vmem>>, %arg6: memref<1x32x32xf32, #tpu.memory_space<vmem>>, %arg7: memref<1x1x32x32xi8, #tpu.memory_space<vmem>>, %arg8: memref<32x32xbf16, #tpu.memory_space<vmem>>, %arg9: memref<1x32xf32, #tpu.memory_space<vmem>>, %arg10: memref<32x64xbf16, #tpu.memory_space<vmem>>, %arg11: memref<1x64xf32, #tpu.memory_space<vmem>>, %arg12: memref<32x32xbf16, #tpu.memory_space<vmem>>, %arg13: memref<1x32xf32, #tpu.memory_space<vmem>>, %arg14: memref<1x32xf32, #tpu.memory_space<vmem>>, %arg15: memref<1x32xf32, #tpu.memory_space<vmem>>, %arg16: memref<32x32xbf16, #tpu.memory_space<vmem>>, %arg17: memref<1x32xf32, #tpu.memory_space<vmem>>, %arg18: memref<32x32xbf16, #tpu.memory_space<vmem>>, %arg19: memref<1x32xf32, #tpu.memory_space<vmem>>, %arg20: memref<32x32xbf16, #tpu.memory_space<vmem>>, %arg21: memref<1x32xf32, #tpu.memory_space<vmem>>, %arg22: memref<32x32xbf16, #tpu.memory_space<vmem>>, %arg23: memref<1x32xf32, #tpu.memory_space<vmem>>, %arg24: memref<1x32xf32, #tpu.memory_space<vmem>>, %arg25: memref<1x32xf32, #tpu.memory_space<vmem>>, %arg26: memref<32x64xbf16, #tpu.memory_space<vmem>>, %arg27: memref<1x64xf32, #tpu.memory_space<vmem>>, %arg28: memref<64x32xbf16, #tpu.memory_space<vmem>>, %arg29: memref<1x32xf32, #tpu.memory_space<vmem>>, %arg30: memref<1x32xf32, #tpu.memory_space<vmem>>, %arg31: memref<1x32xf32, #tpu.memory_space<vmem>>, %arg32: memref<1x32x32xf32, #tpu.memory_space<vmem>>) attributes {dimension_semantics = [#tpu.dimension_semantics<parallel>, #tpu.dimension_semantics<parallel>], iteration_bounds = array<i64: 2, 2>, scalar_prefetch = 0 : i64, scratch_operands = 0 : i64, tpu.core_type = #tpu.core_type<tc>, window_params = [{transform_indices = @transform_0, window_bounds = array<i64: 1, 64, 32>}, {transform_indices = @transform_1, window_bounds = array<i64: 1, 32, 32>}, {transform_indices = @transform_2, window_bounds = array<i64: 1, 1, 32, 64>}, {transform_indices = @transform_3, window_bounds = array<i64: 1, 32, 32>}, {transform_indices = @transform_4, window_bounds = array<i64: 1, 32, 32>}, {transform_indices = @transform_5, window_bounds = array<i64: 1, 1, 32, 32>}, {pipeline_mode = #tpu.pipeline_mode<synchronous>, transform_indices = @transform_6, window_bounds = array<i64: 32, 32>}, {pipeline_mode = #tpu.pipeline_mode<synchronous>, transform_indices = @transform_7, window_bounds = array<i64: 1, 32>}, {pipeline_mode = #tpu.pipeline_mode<synchronous>, transform_indices = @transform_8, window_bounds = array<i64: 32, 64>}, {pipeline_mode = #tpu.pipeline_mode<synchronous>, transform_indices = @transform_9, window_bounds = array<i64: 1, 64>}, {pipeline_mode = #tpu.pipeline_mode<synchronous>, transform_indices = @transform_10, window_bounds = array<i64: 32, 32>}, {pipeline_mode = #tpu.pipeline_mode<synchronous>, transform_indices = @transform_11, window_bounds = array<i64: 1, 32>}, {pipeline_mode = #tpu.pipeline_mode<synchronous>, transform_indices = @transform_12, window_bounds = array<i64: 1, 32>}, {pipeline_mode = #tpu.pipeline_mode<synchronous>, transform_indices = @transform_13, window_bounds = array<i64: 1, 32>}, {pipeline_mode = #tpu.pipeline_mode<synchronous>, transform_indices = @transform_14, window_bounds = array<i64: 32, 32>}, {pipeline_mode = #tpu.pipeline_mode<synchronous>, transform_indices = @transform_15, window_bounds = array<i64: 1, 32>}, {pipeline_mode = #tpu.pipeline_mode<synchronous>, transform_indices = @transform_16, window_bounds = array<i64: 32, 32>}, {pipeline_mode = #tpu.pipeline_mode<synchronous>, transform_indices = @transform_17, window_bounds = array<i64: 1, 32>}, {pipeline_mode = #tpu.pipeline_mode<synchronous>, transform_indices = @transform_18, window_bounds = array<i64: 32, 32>}, {pipeline_mode = #tpu.pipeline_mode<synchronous>, transform_indices = @transform_19, window_bounds = array<i64: 1, 32>}, {pipeline_mode = #tpu.pipeline_mode<synchronous>, transform_indices = @transform_20, window_bounds = array<i64: 32, 32>}, {pipeline_mode = #tpu.pipeline_mode<synchronous>, transform_indices = @transform_21, window_bounds = array<i64: 1, 32>}, {pipeline_mode = #tpu.pipeline_mode<synchronous>, transform_indices = @transform_22, window_bounds = array<i64: 1, 32>}, {pipeline_mode = #tpu.pipeline_mode<synchronous>, transform_indices = @transform_23, window_bounds = array<i64: 1, 32>}, {pipeline_mode = #tpu.pipeline_mode<synchronous>, transform_indices = @transform_24, window_bounds = array<i64: 32, 64>}, {pipeline_mode = #tpu.pipeline_mode<synchronous>, transform_indices = @transform_25, window_bounds = array<i64: 1, 64>}, {pipeline_mode = #tpu.pipeline_mode<synchronous>, transform_indices = @transform_26, window_bounds = array<i64: 64, 32>}, {pipeline_mode = #tpu.pipeline_mode<synchronous>, transform_indices = @transform_27, window_bounds = array<i64: 1, 32>}, {pipeline_mode = #tpu.pipeline_mode<synchronous>, transform_indices = @transform_28, window_bounds = array<i64: 1, 32>}, {pipeline_mode = #tpu.pipeline_mode<synchronous>, transform_indices = @transform_29, window_bounds = array<i64: 1, 32>}, {transform_indices = @transform_30, window_bounds = array<i64: 1, 32, 32>}]} {
    %c0 = arith.constant 0 : index
    %c0_0 = arith.constant 0 : index
    %c0_1 = arith.constant 0 : index
    %0 = vector.load %arg3[%c0, %c0_0, %c0_1] : memref<1x32x32xf32, #tpu.memory_space<vmem>>, vector<1x32x32xf32>
    %1 = vector.shape_cast %0 : vector<1x32x32xf32> to vector<32x32xf32>
    %c0_2 = arith.constant 0 : index
    %c0_3 = arith.constant 0 : index
    %c0_4 = arith.constant 0 : index
    %2 = vector.load %arg3[%c0_2, %c0_3, %c0_4] : memref<1x32x32xf32, #tpu.memory_space<vmem>>, vector<1x32x32xf32>
    %3 = vector.shape_cast %2 : vector<1x32x32xf32> to vector<32x32xf32>
    %4 = arith.truncf %3 : vector<32x32xf32> to vector<32x32xbf16>
    %c0_5 = arith.constant 0 : index
    %c0_6 = arith.constant 0 : index
    %c0_7 = arith.constant 0 : index
    %5 = vector.load %arg2[%c0_5, %c0_6, %c0_7] : memref<1x64x32xf32, #tpu.memory_space<vmem>>, vector<1x64x32xf32>
    %6 = vector.shape_cast %5 : vector<1x64x32xf32> to vector<64x32xf32>
    %7 = arith.truncf %6 : vector<64x32xf32> to vector<64x32xbf16>
    %c0_8 = arith.constant 0 : index
    %c0_9 = arith.constant 0 : index
    %8 = vector.load %arg8[%c0_8, %c0_9] : memref<32x32xbf16, #tpu.memory_space<vmem>>, vector<32x32xbf16>
    %cst = arith.constant dense<0.000000e+00> : vector<32x32xf32>
    %9 = tpu.matmul %4, %8, %cst {dimension_numbers = #tpu.dot_dimension_numbers<[1], [0], [0], [1], [0, 0, 1, 1], [], []>} : vector<32x32xbf16>, vector<32x32xbf16>, vector<32x32xf32> -> vector<32x32xf32>
    %c0_10 = arith.constant 0 : index
    %c0_11 = arith.constant 0 : index
    %10 = vector.load %arg9[%c0_10, %c0_11] : memref<1x32xf32, #tpu.memory_space<vmem>>, vector<1x32xf32>
    %11 = vector.broadcast %10 : vector<1x32xf32> to vector<32x32xf32>
    %12 = arith.addf %9, %11 : vector<32x32xf32>
    %c0_12 = arith.constant 0 : index
    %c0_13 = arith.constant 0 : index
    %13 = vector.load %arg10[%c0_12, %c0_13] : memref<32x64xbf16, #tpu.memory_space<vmem>>, vector<32x64xbf16>
    %cst_14 = arith.constant dense<0.000000e+00> : vector<64x64xf32>
    %14 = tpu.matmul %7, %13, %cst_14 {dimension_numbers = #tpu.dot_dimension_numbers<[1], [0], [0], [1], [0, 0, 1, 1], [], []>} : vector<64x32xbf16>, vector<32x64xbf16>, vector<64x64xf32> -> vector<64x64xf32>
    %c0_15 = arith.constant 0 : index
    %c0_16 = arith.constant 0 : index
    %15 = vector.load %arg11[%c0_15, %c0_16] : memref<1x64xf32, #tpu.memory_space<vmem>>, vector<1x64xf32>
    %16 = vector.broadcast %15 : vector<1x64xf32> to vector<64x64xf32>
    %17 = arith.addf %14, %16 : vector<64x64xf32>
    %c0_17 = arith.constant 0 : index
    %c0_18 = arith.constant 0 : index
    %c0_19 = arith.constant 0 : index
    %c0_20 = arith.constant 0 : index
    %18 = vector.load %arg4[%c0_17, %c0_18, %c0_19, %c0_20] : memref<1x1x32x64xi8, #tpu.memory_space<vmem>>, vector<1x1x32x64xi8>
    %19 = vector.shape_cast %18 : vector<1x1x32x64xi8> to vector<32x64xi8>
    %20 = arith.extsi %19 : vector<32x64xi8> to vector<32x64xi32>
    %c0_i32 = arith.constant 0 : i32
    %21 = vector.broadcast %c0_i32 : i32 to vector<32x64xi32>
    %22 = arith.cmpi ne, %20, %21 : vector<32x64xi32>
    %23 = vector.extract_strided_slice %17 {offsets = [0, 0], sizes = [64, 32], strides = [1, 1]} : vector<64x64xf32> to vector<64x32xf32>
    %24 = vector.extract_strided_slice %17 {offsets = [0, 32], sizes = [64, 32], strides = [1, 1]} : vector<64x64xf32> to vector<64x32xf32>
    %c0_21 = arith.constant 0 : index
    %c0_22 = arith.constant 0 : index
    %25 = vector.load %arg12[%c0_21, %c0_22] : memref<32x32xbf16, #tpu.memory_space<vmem>>, vector<32x32xbf16>
    %26 = arith.truncf %12 : vector<32x32xf32> to vector<32x32xbf16>
    %27 = arith.truncf %23 : vector<64x32xf32> to vector<64x32xbf16>
    %28 = arith.truncf %24 : vector<64x32xf32> to vector<64x32xbf16>
    %29 = vector.extract_strided_slice %26 {offsets = [0, 0], sizes = [32, 8], strides = [1, 1]} : vector<32x32xbf16> to vector<32x8xbf16>
    %30 = vector.extract_strided_slice %27 {offsets = [0, 0], sizes = [64, 8], strides = [1, 1]} : vector<64x32xbf16> to vector<64x8xbf16>
    %cst_23 = arith.constant dense<0.000000e+00> : vector<32x64xf32>
    %31 = tpu.matmul %29, %30, %cst_23 {dimension_numbers = #tpu.dot_dimension_numbers<[1], [1], [0], [0], [0, 0, 1, 0], [], []>} : vector<32x8xbf16>, vector<64x8xbf16>, vector<32x64xf32> -> vector<32x64xf32>
    %cst_24 = arith.constant -1.76776698E+19 : f32
    %32 = vector.broadcast %cst_24 : f32 to vector<32x64xf32>
    %33 = arith.select %22, %31, %32 : vector<32x64xi1>, vector<32x64xf32>
    %cst_25 = arith.constant dense<0xFF800000> : vector<32xf32>
    %34 = vector.multi_reduction <maximumf>, %33, %cst_25 [1] : vector<32x64xf32> to vector<32xf32>
    %35 = vector.shape_cast %34 : vector<32xf32> to vector<32x1xf32>
    %36 = vector.broadcast %35 : vector<32x1xf32> to vector<32x64xf32>
    %37 = arith.subf %33, %36 : vector<32x64xf32>
    %38 = math.exp %37 : vector<32x64xf32>
    %cst_26 = arith.constant dense<0.000000e+00> : vector<32xf32>
    %39 = vector.multi_reduction <add>, %38, %cst_26 [1] : vector<32x64xf32> to vector<32xf32>
    %40 = vector.shape_cast %39 : vector<32xf32> to vector<32x1xf32>
    %41 = tpu.reciprocal %40 {approx = true} : vector<32x1xf32> -> vector<32x1xf32>
    %42 = vector.broadcast %41 : vector<32x1xf32> to vector<32x64xf32>
    %43 = arith.mulf %38, %42 : vector<32x64xf32>
    %44 = arith.truncf %43 : vector<32x64xf32> to vector<32x64xbf16>
    %45 = vector.extract_strided_slice %28 {offsets = [0, 0], sizes = [64, 8], strides = [1, 1]} : vector<64x32xbf16> to vector<64x8xbf16>
    %cst_27 = arith.constant dense<0.000000e+00> : vector<32x8xf32>
    %46 = tpu.matmul %44, %45, %cst_27 {dimension_numbers = #tpu.dot_dimension_numbers<[1], [0], [0], [1], [0, 0, 1, 1], [], []>} : vector<32x64xbf16>, vector<64x8xbf16>, vector<32x8xf32> -> vector<32x8xf32>
    %47 = vector.extract_strided_slice %26 {offsets = [0, 8], sizes = [32, 8], strides = [1, 1]} : vector<32x32xbf16> to vector<32x8xbf16>
    %48 = vector.extract_strided_slice %27 {offsets = [0, 8], sizes = [64, 8], strides = [1, 1]} : vector<64x32xbf16> to vector<64x8xbf16>
    %cst_28 = arith.constant dense<0.000000e+00> : vector<32x64xf32>
    %49 = tpu.matmul %47, %48, %cst_28 {dimension_numbers = #tpu.dot_dimension_numbers<[1], [1], [0], [0], [0, 0, 1, 0], [], []>} : vector<32x8xbf16>, vector<64x8xbf16>, vector<32x64xf32> -> vector<32x64xf32>
    %cst_29 = arith.constant -1.76776698E+19 : f32
    %50 = vector.broadcast %cst_29 : f32 to vector<32x64xf32>
    %51 = arith.select %22, %49, %50 : vector<32x64xi1>, vector<32x64xf32>
    %cst_30 = arith.constant dense<0xFF800000> : vector<32xf32>
    %52 = vector.multi_reduction <maximumf>, %51, %cst_30 [1] : vector<32x64xf32> to vector<32xf32>
    %53 = vector.shape_cast %52 : vector<32xf32> to vector<32x1xf32>
    %54 = vector.broadcast %53 : vector<32x1xf32> to vector<32x64xf32>
    %55 = arith.subf %51, %54 : vector<32x64xf32>
    %56 = math.exp %55 : vector<32x64xf32>
    %cst_31 = arith.constant dense<0.000000e+00> : vector<32xf32>
    %57 = vector.multi_reduction <add>, %56, %cst_31 [1] : vector<32x64xf32> to vector<32xf32>
    %58 = vector.shape_cast %57 : vector<32xf32> to vector<32x1xf32>
    %59 = tpu.reciprocal %58 {approx = true} : vector<32x1xf32> -> vector<32x1xf32>
    %60 = vector.broadcast %59 : vector<32x1xf32> to vector<32x64xf32>
    %61 = arith.mulf %56, %60 : vector<32x64xf32>
    %62 = arith.truncf %61 : vector<32x64xf32> to vector<32x64xbf16>
    %63 = vector.extract_strided_slice %28 {offsets = [0, 8], sizes = [64, 8], strides = [1, 1]} : vector<64x32xbf16> to vector<64x8xbf16>
    %cst_32 = arith.constant dense<0.000000e+00> : vector<32x8xf32>
    %64 = tpu.matmul %62, %63, %cst_32 {dimension_numbers = #tpu.dot_dimension_numbers<[1], [0], [0], [1], [0, 0, 1, 1], [], []>} : vector<32x64xbf16>, vector<64x8xbf16>, vector<32x8xf32> -> vector<32x8xf32>
    %65 = vector.extract_strided_slice %26 {offsets = [0, 16], sizes = [32, 8], strides = [1, 1]} : vector<32x32xbf16> to vector<32x8xbf16>
    %66 = vector.extract_strided_slice %27 {offsets = [0, 16], sizes = [64, 8], strides = [1, 1]} : vector<64x32xbf16> to vector<64x8xbf16>
    %cst_33 = arith.constant dense<0.000000e+00> : vector<32x64xf32>
    %67 = tpu.matmul %65, %66, %cst_33 {dimension_numbers = #tpu.dot_dimension_numbers<[1], [1], [0], [0], [0, 0, 1, 0], [], []>} : vector<32x8xbf16>, vector<64x8xbf16>, vector<32x64xf32> -> vector<32x64xf32>
    %cst_34 = arith.constant -1.76776698E+19 : f32
    %68 = vector.broadcast %cst_34 : f32 to vector<32x64xf32>
    %69 = arith.select %22, %67, %68 : vector<32x64xi1>, vector<32x64xf32>
    %cst_35 = arith.constant dense<0xFF800000> : vector<32xf32>
    %70 = vector.multi_reduction <maximumf>, %69, %cst_35 [1] : vector<32x64xf32> to vector<32xf32>
    %71 = vector.shape_cast %70 : vector<32xf32> to vector<32x1xf32>
    %72 = vector.broadcast %71 : vector<32x1xf32> to vector<32x64xf32>
    %73 = arith.subf %69, %72 : vector<32x64xf32>
    %74 = math.exp %73 : vector<32x64xf32>
    %cst_36 = arith.constant dense<0.000000e+00> : vector<32xf32>
    %75 = vector.multi_reduction <add>, %74, %cst_36 [1] : vector<32x64xf32> to vector<32xf32>
    %76 = vector.shape_cast %75 : vector<32xf32> to vector<32x1xf32>
    %77 = tpu.reciprocal %76 {approx = true} : vector<32x1xf32> -> vector<32x1xf32>
    %78 = vector.broadcast %77 : vector<32x1xf32> to vector<32x64xf32>
    %79 = arith.mulf %74, %78 : vector<32x64xf32>
    %80 = arith.truncf %79 : vector<32x64xf32> to vector<32x64xbf16>
    %81 = vector.extract_strided_slice %28 {offsets = [0, 16], sizes = [64, 8], strides = [1, 1]} : vector<64x32xbf16> to vector<64x8xbf16>
    %cst_37 = arith.constant dense<0.000000e+00> : vector<32x8xf32>
    %82 = tpu.matmul %80, %81, %cst_37 {dimension_numbers = #tpu.dot_dimension_numbers<[1], [0], [0], [1], [0, 0, 1, 1], [], []>} : vector<32x64xbf16>, vector<64x8xbf16>, vector<32x8xf32> -> vector<32x8xf32>
    %83 = vector.extract_strided_slice %26 {offsets = [0, 24], sizes = [32, 8], strides = [1, 1]} : vector<32x32xbf16> to vector<32x8xbf16>
    %84 = vector.extract_strided_slice %27 {offsets = [0, 24], sizes = [64, 8], strides = [1, 1]} : vector<64x32xbf16> to vector<64x8xbf16>
    %cst_38 = arith.constant dense<0.000000e+00> : vector<32x64xf32>
    %85 = tpu.matmul %83, %84, %cst_38 {dimension_numbers = #tpu.dot_dimension_numbers<[1], [1], [0], [0], [0, 0, 1, 0], [], []>} : vector<32x8xbf16>, vector<64x8xbf16>, vector<32x64xf32> -> vector<32x64xf32>
    %cst_39 = arith.constant -1.76776698E+19 : f32
    %86 = vector.broadcast %cst_39 : f32 to vector<32x64xf32>
    %87 = arith.select %22, %85, %86 : vector<32x64xi1>, vector<32x64xf32>
    %cst_40 = arith.constant dense<0xFF800000> : vector<32xf32>
    %88 = vector.multi_reduction <maximumf>, %87, %cst_40 [1] : vector<32x64xf32> to vector<32xf32>
    %89 = vector.shape_cast %88 : vector<32xf32> to vector<32x1xf32>
    %90 = vector.broadcast %89 : vector<32x1xf32> to vector<32x64xf32>
    %91 = arith.subf %87, %90 : vector<32x64xf32>
    %92 = math.exp %91 : vector<32x64xf32>
    %cst_41 = arith.constant dense<0.000000e+00> : vector<32xf32>
    %93 = vector.multi_reduction <add>, %92, %cst_41 [1] : vector<32x64xf32> to vector<32xf32>
    %94 = vector.shape_cast %93 : vector<32xf32> to vector<32x1xf32>
    %95 = tpu.reciprocal %94 {approx = true} : vector<32x1xf32> -> vector<32x1xf32>
    %96 = vector.broadcast %95 : vector<32x1xf32> to vector<32x64xf32>
    %97 = arith.mulf %92, %96 : vector<32x64xf32>
    %98 = arith.truncf %97 : vector<32x64xf32> to vector<32x64xbf16>
    %99 = vector.extract_strided_slice %28 {offsets = [0, 24], sizes = [64, 8], strides = [1, 1]} : vector<64x32xbf16> to vector<64x8xbf16>
    %cst_42 = arith.constant dense<0.000000e+00> : vector<32x8xf32>
    %100 = tpu.matmul %98, %99, %cst_42 {dimension_numbers = #tpu.dot_dimension_numbers<[1], [0], [0], [1], [0, 0, 1, 1], [], []>} : vector<32x64xbf16>, vector<64x8xbf16>, vector<32x8xf32> -> vector<32x8xf32>
    %101 = tpu.concatenate %46, %64, %82, %100 in 1 : vector<32x8xf32>, vector<32x8xf32>, vector<32x8xf32>, vector<32x8xf32> -> vector<32x32xf32>
    %102 = arith.truncf %101 : vector<32x32xf32> to vector<32x32xbf16>
    %cst_43 = arith.constant dense<0.000000e+00> : vector<32x32xf32>
    %103 = tpu.matmul %102, %25, %cst_43 {dimension_numbers = #tpu.dot_dimension_numbers<[1], [0], [0], [1], [0, 0, 1, 1], [], []>} : vector<32x32xbf16>, vector<32x32xbf16>, vector<32x32xf32> -> vector<32x32xf32>
    %c0_44 = arith.constant 0 : index
    %c0_45 = arith.constant 0 : index
    %104 = vector.load %arg13[%c0_44, %c0_45] : memref<1x32xf32, #tpu.memory_space<vmem>>, vector<1x32xf32>
    %105 = vector.broadcast %104 : vector<1x32xf32> to vector<32x32xf32>
    %106 = arith.addf %103, %105 : vector<32x32xf32>
    %c0_46 = arith.constant 0 : index
    %c0_47 = arith.constant 0 : index
    %107 = vector.load %arg14[%c0_46, %c0_47] : memref<1x32xf32, #tpu.memory_space<vmem>>, vector<1x32xf32>
    %c0_48 = arith.constant 0 : index
    %c0_49 = arith.constant 0 : index
    %108 = vector.load %arg15[%c0_48, %c0_49] : memref<1x32xf32, #tpu.memory_space<vmem>>, vector<1x32xf32>
    %109 = arith.addf %106, %1 : vector<32x32xf32>
    %cst_50 = arith.constant dense<0.000000e+00> : vector<32xf32>
    %110 = vector.multi_reduction <add>, %109, %cst_50 [1] : vector<32x32xf32> to vector<32xf32>
    %111 = vector.shape_cast %110 : vector<32xf32> to vector<32x1xf32>
    %cst_51 = arith.constant 3.200000e+01 : f32
    %112 = vector.broadcast %cst_51 : f32 to vector<32x1xf32>
    %113 = arith.divf %111, %112 : vector<32x1xf32>
    %114 = vector.broadcast %113 : vector<32x1xf32> to vector<32x32xf32>
    %115 = arith.subf %109, %114 : vector<32x32xf32>
    %116 = arith.mulf %115, %115 : vector<32x32xf32>
    %cst_52 = arith.constant dense<0.000000e+00> : vector<32xf32>
    %117 = vector.multi_reduction <add>, %116, %cst_52 [1] : vector<32x32xf32> to vector<32xf32>
    %118 = vector.shape_cast %117 : vector<32xf32> to vector<32x1xf32>
    %cst_53 = arith.constant 3.200000e+01 : f32
    %119 = vector.broadcast %cst_53 : f32 to vector<32x1xf32>
    %120 = arith.divf %118, %119 : vector<32x1xf32>
    %121 = vector.broadcast %113 : vector<32x1xf32> to vector<32x32xf32>
    %122 = arith.subf %109, %121 : vector<32x32xf32>
    %cst_54 = arith.constant 9.99999974E-6 : f32
    %123 = vector.broadcast %cst_54 : f32 to vector<32x1xf32>
    %124 = arith.addf %120, %123 : vector<32x1xf32>
    %125 = math.rsqrt %124 : vector<32x1xf32>
    %126 = vector.broadcast %125 : vector<32x1xf32> to vector<32x32xf32>
    %127 = arith.mulf %122, %126 : vector<32x32xf32>
    %128 = vector.broadcast %107 : vector<1x32xf32> to vector<32x32xf32>
    %129 = arith.mulf %127, %128 : vector<32x32xf32>
    %130 = vector.broadcast %108 : vector<1x32xf32> to vector<32x32xf32>
    %131 = arith.addf %129, %130 : vector<32x32xf32>
    %132 = arith.truncf %131 : vector<32x32xf32> to vector<32x32xbf16>
    %c0_55 = arith.constant 0 : index
    %c0_56 = arith.constant 0 : index
    %133 = vector.load %arg16[%c0_55, %c0_56] : memref<32x32xbf16, #tpu.memory_space<vmem>>, vector<32x32xbf16>
    %cst_57 = arith.constant dense<0.000000e+00> : vector<32x32xf32>
    %134 = tpu.matmul %132, %133, %cst_57 {dimension_numbers = #tpu.dot_dimension_numbers<[1], [0], [0], [1], [0, 0, 1, 1], [], []>} : vector<32x32xbf16>, vector<32x32xbf16>, vector<32x32xf32> -> vector<32x32xf32>
    %c0_58 = arith.constant 0 : index
    %c0_59 = arith.constant 0 : index
    %135 = vector.load %arg17[%c0_58, %c0_59] : memref<1x32xf32, #tpu.memory_space<vmem>>, vector<1x32xf32>
    %136 = vector.broadcast %135 : vector<1x32xf32> to vector<32x32xf32>
    %137 = arith.addf %134, %136 : vector<32x32xf32>
    %c0_60 = arith.constant 0 : index
    %c0_61 = arith.constant 0 : index
    %c0_62 = arith.constant 0 : index
    %138 = vector.load %arg5[%c0_60, %c0_61, %c0_62] : memref<1x32x32xf32, #tpu.memory_space<vmem>>, vector<1x32x32xf32>
    %139 = vector.shape_cast %138 : vector<1x32x32xf32> to vector<32x32xf32>
    %140 = arith.truncf %139 : vector<32x32xf32> to vector<32x32xbf16>
    %c0_63 = arith.constant 0 : index
    %c0_64 = arith.constant 0 : index
    %141 = vector.load %arg18[%c0_63, %c0_64] : memref<32x32xbf16, #tpu.memory_space<vmem>>, vector<32x32xbf16>
    %cst_65 = arith.constant dense<0.000000e+00> : vector<32x32xf32>
    %142 = tpu.matmul %140, %141, %cst_65 {dimension_numbers = #tpu.dot_dimension_numbers<[1], [0], [0], [1], [0, 0, 1, 1], [], []>} : vector<32x32xbf16>, vector<32x32xbf16>, vector<32x32xf32> -> vector<32x32xf32>
    %c0_66 = arith.constant 0 : index
    %c0_67 = arith.constant 0 : index
    %143 = vector.load %arg19[%c0_66, %c0_67] : memref<1x32xf32, #tpu.memory_space<vmem>>, vector<1x32xf32>
    %144 = vector.broadcast %143 : vector<1x32xf32> to vector<32x32xf32>
    %145 = arith.addf %142, %144 : vector<32x32xf32>
    %c0_68 = arith.constant 0 : index
    %c0_69 = arith.constant 0 : index
    %c0_70 = arith.constant 0 : index
    %146 = vector.load %arg6[%c0_68, %c0_69, %c0_70] : memref<1x32x32xf32, #tpu.memory_space<vmem>>, vector<1x32x32xf32>
    %147 = vector.shape_cast %146 : vector<1x32x32xf32> to vector<32x32xf32>
    %148 = arith.truncf %147 : vector<32x32xf32> to vector<32x32xbf16>
    %c0_71 = arith.constant 0 : index
    %c0_72 = arith.constant 0 : index
    %149 = vector.load %arg20[%c0_71, %c0_72] : memref<32x32xbf16, #tpu.memory_space<vmem>>, vector<32x32xbf16>
    %cst_73 = arith.constant dense<0.000000e+00> : vector<32x32xf32>
    %150 = tpu.matmul %148, %149, %cst_73 {dimension_numbers = #tpu.dot_dimension_numbers<[1], [0], [0], [1], [0, 0, 1, 1], [], []>} : vector<32x32xbf16>, vector<32x32xbf16>, vector<32x32xf32> -> vector<32x32xf32>
    %c0_74 = arith.constant 0 : index
    %c0_75 = arith.constant 0 : index
    %151 = vector.load %arg21[%c0_74, %c0_75] : memref<1x32xf32, #tpu.memory_space<vmem>>, vector<1x32xf32>
    %152 = vector.broadcast %151 : vector<1x32xf32> to vector<32x32xf32>
    %153 = arith.addf %150, %152 : vector<32x32xf32>
    %c0_76 = arith.constant 0 : index
    %c0_77 = arith.constant 0 : index
    %c0_78 = arith.constant 0 : index
    %c0_79 = arith.constant 0 : index
    %154 = vector.load %arg7[%c0_76, %c0_77, %c0_78, %c0_79] : memref<1x1x32x32xi8, #tpu.memory_space<vmem>>, vector<1x1x32x32xi8>
    %155 = vector.shape_cast %154 : vector<1x1x32x32xi8> to vector<32x32xi8>
    %156 = arith.extsi %155 : vector<32x32xi8> to vector<32x32xi32>
    %c0_i32_80 = arith.constant 0 : i32
    %157 = vector.broadcast %c0_i32_80 : i32 to vector<32x32xi32>
    %158 = arith.cmpi ne, %156, %157 : vector<32x32xi32>
    %c0_81 = arith.constant 0 : index
    %c0_82 = arith.constant 0 : index
    %159 = vector.load %arg22[%c0_81, %c0_82] : memref<32x32xbf16, #tpu.memory_space<vmem>>, vector<32x32xbf16>
    %160 = arith.truncf %137 : vector<32x32xf32> to vector<32x32xbf16>
    %161 = arith.truncf %145 : vector<32x32xf32> to vector<32x32xbf16>
    %162 = arith.truncf %153 : vector<32x32xf32> to vector<32x32xbf16>
    %163 = vector.extract_strided_slice %160 {offsets = [0, 0], sizes = [32, 8], strides = [1, 1]} : vector<32x32xbf16> to vector<32x8xbf16>
    %164 = vector.extract_strided_slice %161 {offsets = [0, 0], sizes = [32, 8], strides = [1, 1]} : vector<32x32xbf16> to vector<32x8xbf16>
    %cst_83 = arith.constant dense<0.000000e+00> : vector<32x32xf32>
    %165 = tpu.matmul %163, %164, %cst_83 {dimension_numbers = #tpu.dot_dimension_numbers<[1], [1], [0], [0], [0, 0, 1, 0], [], []>} : vector<32x8xbf16>, vector<32x8xbf16>, vector<32x32xf32> -> vector<32x32xf32>
    %cst_84 = arith.constant -1.76776698E+19 : f32
    %166 = vector.broadcast %cst_84 : f32 to vector<32x32xf32>
    %167 = arith.select %158, %165, %166 : vector<32x32xi1>, vector<32x32xf32>
    %cst_85 = arith.constant dense<0xFF800000> : vector<32xf32>
    %168 = vector.multi_reduction <maximumf>, %167, %cst_85 [1] : vector<32x32xf32> to vector<32xf32>
    %169 = vector.shape_cast %168 : vector<32xf32> to vector<32x1xf32>
    %170 = vector.broadcast %169 : vector<32x1xf32> to vector<32x32xf32>
    %171 = arith.subf %167, %170 : vector<32x32xf32>
    %172 = math.exp %171 : vector<32x32xf32>
    %cst_86 = arith.constant dense<0.000000e+00> : vector<32xf32>
    %173 = vector.multi_reduction <add>, %172, %cst_86 [1] : vector<32x32xf32> to vector<32xf32>
    %174 = vector.shape_cast %173 : vector<32xf32> to vector<32x1xf32>
    %175 = tpu.reciprocal %174 {approx = true} : vector<32x1xf32> -> vector<32x1xf32>
    %176 = vector.broadcast %175 : vector<32x1xf32> to vector<32x32xf32>
    %177 = arith.mulf %172, %176 : vector<32x32xf32>
    %178 = arith.truncf %177 : vector<32x32xf32> to vector<32x32xbf16>
    %179 = vector.extract_strided_slice %162 {offsets = [0, 0], sizes = [32, 8], strides = [1, 1]} : vector<32x32xbf16> to vector<32x8xbf16>
    %cst_87 = arith.constant dense<0.000000e+00> : vector<32x8xf32>
    %180 = tpu.matmul %178, %179, %cst_87 {dimension_numbers = #tpu.dot_dimension_numbers<[1], [0], [0], [1], [0, 0, 1, 1], [], []>} : vector<32x32xbf16>, vector<32x8xbf16>, vector<32x8xf32> -> vector<32x8xf32>
    %181 = vector.extract_strided_slice %160 {offsets = [0, 8], sizes = [32, 8], strides = [1, 1]} : vector<32x32xbf16> to vector<32x8xbf16>
    %182 = vector.extract_strided_slice %161 {offsets = [0, 8], sizes = [32, 8], strides = [1, 1]} : vector<32x32xbf16> to vector<32x8xbf16>
    %cst_88 = arith.constant dense<0.000000e+00> : vector<32x32xf32>
    %183 = tpu.matmul %181, %182, %cst_88 {dimension_numbers = #tpu.dot_dimension_numbers<[1], [1], [0], [0], [0, 0, 1, 0], [], []>} : vector<32x8xbf16>, vector<32x8xbf16>, vector<32x32xf32> -> vector<32x32xf32>
    %cst_89 = arith.constant -1.76776698E+19 : f32
    %184 = vector.broadcast %cst_89 : f32 to vector<32x32xf32>
    %185 = arith.select %158, %183, %184 : vector<32x32xi1>, vector<32x32xf32>
    %cst_90 = arith.constant dense<0xFF800000> : vector<32xf32>
    %186 = vector.multi_reduction <maximumf>, %185, %cst_90 [1] : vector<32x32xf32> to vector<32xf32>
    %187 = vector.shape_cast %186 : vector<32xf32> to vector<32x1xf32>
    %188 = vector.broadcast %187 : vector<32x1xf32> to vector<32x32xf32>
    %189 = arith.subf %185, %188 : vector<32x32xf32>
    %190 = math.exp %189 : vector<32x32xf32>
    %cst_91 = arith.constant dense<0.000000e+00> : vector<32xf32>
    %191 = vector.multi_reduction <add>, %190, %cst_91 [1] : vector<32x32xf32> to vector<32xf32>
    %192 = vector.shape_cast %191 : vector<32xf32> to vector<32x1xf32>
    %193 = tpu.reciprocal %192 {approx = true} : vector<32x1xf32> -> vector<32x1xf32>
    %194 = vector.broadcast %193 : vector<32x1xf32> to vector<32x32xf32>
    %195 = arith.mulf %190, %194 : vector<32x32xf32>
    %196 = arith.truncf %195 : vector<32x32xf32> to vector<32x32xbf16>
    %197 = vector.extract_strided_slice %162 {offsets = [0, 8], sizes = [32, 8], strides = [1, 1]} : vector<32x32xbf16> to vector<32x8xbf16>
    %cst_92 = arith.constant dense<0.000000e+00> : vector<32x8xf32>
    %198 = tpu.matmul %196, %197, %cst_92 {dimension_numbers = #tpu.dot_dimension_numbers<[1], [0], [0], [1], [0, 0, 1, 1], [], []>} : vector<32x32xbf16>, vector<32x8xbf16>, vector<32x8xf32> -> vector<32x8xf32>
    %199 = vector.extract_strided_slice %160 {offsets = [0, 16], sizes = [32, 8], strides = [1, 1]} : vector<32x32xbf16> to vector<32x8xbf16>
    %200 = vector.extract_strided_slice %161 {offsets = [0, 16], sizes = [32, 8], strides = [1, 1]} : vector<32x32xbf16> to vector<32x8xbf16>
    %cst_93 = arith.constant dense<0.000000e+00> : vector<32x32xf32>
    %201 = tpu.matmul %199, %200, %cst_93 {dimension_numbers = #tpu.dot_dimension_numbers<[1], [1], [0], [0], [0, 0, 1, 0], [], []>} : vector<32x8xbf16>, vector<32x8xbf16>, vector<32x32xf32> -> vector<32x32xf32>
    %cst_94 = arith.constant -1.76776698E+19 : f32
    %202 = vector.broadcast %cst_94 : f32 to vector<32x32xf32>
    %203 = arith.select %158, %201, %202 : vector<32x32xi1>, vector<32x32xf32>
    %cst_95 = arith.constant dense<0xFF800000> : vector<32xf32>
    %204 = vector.multi_reduction <maximumf>, %203, %cst_95 [1] : vector<32x32xf32> to vector<32xf32>
    %205 = vector.shape_cast %204 : vector<32xf32> to vector<32x1xf32>
    %206 = vector.broadcast %205 : vector<32x1xf32> to vector<32x32xf32>
    %207 = arith.subf %203, %206 : vector<32x32xf32>
    %208 = math.exp %207 : vector<32x32xf32>
    %cst_96 = arith.constant dense<0.000000e+00> : vector<32xf32>
    %209 = vector.multi_reduction <add>, %208, %cst_96 [1] : vector<32x32xf32> to vector<32xf32>
    %210 = vector.shape_cast %209 : vector<32xf32> to vector<32x1xf32>
    %211 = tpu.reciprocal %210 {approx = true} : vector<32x1xf32> -> vector<32x1xf32>
    %212 = vector.broadcast %211 : vector<32x1xf32> to vector<32x32xf32>
    %213 = arith.mulf %208, %212 : vector<32x32xf32>
    %214 = arith.truncf %213 : vector<32x32xf32> to vector<32x32xbf16>
    %215 = vector.extract_strided_slice %162 {offsets = [0, 16], sizes = [32, 8], strides = [1, 1]} : vector<32x32xbf16> to vector<32x8xbf16>
    %cst_97 = arith.constant dense<0.000000e+00> : vector<32x8xf32>
    %216 = tpu.matmul %214, %215, %cst_97 {dimension_numbers = #tpu.dot_dimension_numbers<[1], [0], [0], [1], [0, 0, 1, 1], [], []>} : vector<32x32xbf16>, vector<32x8xbf16>, vector<32x8xf32> -> vector<32x8xf32>
    %217 = vector.extract_strided_slice %160 {offsets = [0, 24], sizes = [32, 8], strides = [1, 1]} : vector<32x32xbf16> to vector<32x8xbf16>
    %218 = vector.extract_strided_slice %161 {offsets = [0, 24], sizes = [32, 8], strides = [1, 1]} : vector<32x32xbf16> to vector<32x8xbf16>
    %cst_98 = arith.constant dense<0.000000e+00> : vector<32x32xf32>
    %219 = tpu.matmul %217, %218, %cst_98 {dimension_numbers = #tpu.dot_dimension_numbers<[1], [1], [0], [0], [0, 0, 1, 0], [], []>} : vector<32x8xbf16>, vector<32x8xbf16>, vector<32x32xf32> -> vector<32x32xf32>
    %cst_99 = arith.constant -1.76776698E+19 : f32
    %220 = vector.broadcast %cst_99 : f32 to vector<32x32xf32>
    %221 = arith.select %158, %219, %220 : vector<32x32xi1>, vector<32x32xf32>
    %cst_100 = arith.constant dense<0xFF800000> : vector<32xf32>
    %222 = vector.multi_reduction <maximumf>, %221, %cst_100 [1] : vector<32x32xf32> to vector<32xf32>
    %223 = vector.shape_cast %222 : vector<32xf32> to vector<32x1xf32>
    %224 = vector.broadcast %223 : vector<32x1xf32> to vector<32x32xf32>
    %225 = arith.subf %221, %224 : vector<32x32xf32>
    %226 = math.exp %225 : vector<32x32xf32>
    %cst_101 = arith.constant dense<0.000000e+00> : vector<32xf32>
    %227 = vector.multi_reduction <add>, %226, %cst_101 [1] : vector<32x32xf32> to vector<32xf32>
    %228 = vector.shape_cast %227 : vector<32xf32> to vector<32x1xf32>
    %229 = tpu.reciprocal %228 {approx = true} : vector<32x1xf32> -> vector<32x1xf32>
    %230 = vector.broadcast %229 : vector<32x1xf32> to vector<32x32xf32>
    %231 = arith.mulf %226, %230 : vector<32x32xf32>
    %232 = arith.truncf %231 : vector<32x32xf32> to vector<32x32xbf16>
    %233 = vector.extract_strided_slice %162 {offsets = [0, 24], sizes = [32, 8], strides = [1, 1]} : vector<32x32xbf16> to vector<32x8xbf16>
    %cst_102 = arith.constant dense<0.000000e+00> : vector<32x8xf32>
    %234 = tpu.matmul %232, %233, %cst_102 {dimension_numbers = #tpu.dot_dimension_numbers<[1], [0], [0], [1], [0, 0, 1, 1], [], []>} : vector<32x32xbf16>, vector<32x8xbf16>, vector<32x8xf32> -> vector<32x8xf32>
    %235 = tpu.concatenate %180, %198, %216, %234 in 1 : vector<32x8xf32>, vector<32x8xf32>, vector<32x8xf32>, vector<32x8xf32> -> vector<32x32xf32>
    %236 = arith.truncf %235 : vector<32x32xf32> to vector<32x32xbf16>
    %cst_103 = arith.constant dense<0.000000e+00> : vector<32x32xf32>
    %237 = tpu.matmul %236, %159, %cst_103 {dimension_numbers = #tpu.dot_dimension_numbers<[1], [0], [0], [1], [0, 0, 1, 1], [], []>} : vector<32x32xbf16>, vector<32x32xbf16>, vector<32x32xf32> -> vector<32x32xf32>
    %c0_104 = arith.constant 0 : index
    %c0_105 = arith.constant 0 : index
    %238 = vector.load %arg23[%c0_104, %c0_105] : memref<1x32xf32, #tpu.memory_space<vmem>>, vector<1x32xf32>
    %239 = vector.broadcast %238 : vector<1x32xf32> to vector<32x32xf32>
    %240 = arith.addf %237, %239 : vector<32x32xf32>
    %c0_106 = arith.constant 0 : index
    %c0_107 = arith.constant 0 : index
    %241 = vector.load %arg24[%c0_106, %c0_107] : memref<1x32xf32, #tpu.memory_space<vmem>>, vector<1x32xf32>
    %c0_108 = arith.constant 0 : index
    %c0_109 = arith.constant 0 : index
    %242 = vector.load %arg25[%c0_108, %c0_109] : memref<1x32xf32, #tpu.memory_space<vmem>>, vector<1x32xf32>
    %243 = arith.addf %240, %131 : vector<32x32xf32>
    %cst_110 = arith.constant dense<0.000000e+00> : vector<32xf32>
    %244 = vector.multi_reduction <add>, %243, %cst_110 [1] : vector<32x32xf32> to vector<32xf32>
    %245 = vector.shape_cast %244 : vector<32xf32> to vector<32x1xf32>
    %cst_111 = arith.constant 3.200000e+01 : f32
    %246 = vector.broadcast %cst_111 : f32 to vector<32x1xf32>
    %247 = arith.divf %245, %246 : vector<32x1xf32>
    %248 = vector.broadcast %247 : vector<32x1xf32> to vector<32x32xf32>
    %249 = arith.subf %243, %248 : vector<32x32xf32>
    %250 = arith.mulf %249, %249 : vector<32x32xf32>
    %cst_112 = arith.constant dense<0.000000e+00> : vector<32xf32>
    %251 = vector.multi_reduction <add>, %250, %cst_112 [1] : vector<32x32xf32> to vector<32xf32>
    %252 = vector.shape_cast %251 : vector<32xf32> to vector<32x1xf32>
    %cst_113 = arith.constant 3.200000e+01 : f32
    %253 = vector.broadcast %cst_113 : f32 to vector<32x1xf32>
    %254 = arith.divf %252, %253 : vector<32x1xf32>
    %255 = vector.broadcast %247 : vector<32x1xf32> to vector<32x32xf32>
    %256 = arith.subf %243, %255 : vector<32x32xf32>
    %cst_114 = arith.constant 9.99999974E-6 : f32
    %257 = vector.broadcast %cst_114 : f32 to vector<32x1xf32>
    %258 = arith.addf %254, %257 : vector<32x1xf32>
    %259 = math.rsqrt %258 : vector<32x1xf32>
    %260 = vector.broadcast %259 : vector<32x1xf32> to vector<32x32xf32>
    %261 = arith.mulf %256, %260 : vector<32x32xf32>
    %262 = vector.broadcast %241 : vector<1x32xf32> to vector<32x32xf32>
    %263 = arith.mulf %261, %262 : vector<32x32xf32>
    %264 = vector.broadcast %242 : vector<1x32xf32> to vector<32x32xf32>
    %265 = arith.addf %263, %264 : vector<32x32xf32>
    %266 = arith.truncf %265 : vector<32x32xf32> to vector<32x32xbf16>
    %c0_115 = arith.constant 0 : index
    %c0_116 = arith.constant 0 : index
    %267 = vector.load %arg26[%c0_115, %c0_116] : memref<32x64xbf16, #tpu.memory_space<vmem>>, vector<32x64xbf16>
    %cst_117 = arith.constant dense<0.000000e+00> : vector<32x64xf32>
    %268 = tpu.matmul %266, %267, %cst_117 {dimension_numbers = #tpu.dot_dimension_numbers<[1], [0], [0], [1], [0, 0, 1, 1], [], []>} : vector<32x32xbf16>, vector<32x64xbf16>, vector<32x64xf32> -> vector<32x64xf32>
    %c0_118 = arith.constant 0 : index
    %c0_119 = arith.constant 0 : index
    %269 = vector.load %arg27[%c0_118, %c0_119] : memref<1x64xf32, #tpu.memory_space<vmem>>, vector<1x64xf32>
    %270 = vector.broadcast %269 : vector<1x64xf32> to vector<32x64xf32>
    %271 = arith.addf %268, %270 : vector<32x64xf32>
    %cst_120 = arith.constant 0.000000e+00 : f32
    %272 = vector.broadcast %cst_120 : f32 to vector<32x64xf32>
    %273 = arith.maximumf %271, %272 : vector<32x64xf32>
    %274 = arith.truncf %273 : vector<32x64xf32> to vector<32x64xbf16>
    %c0_121 = arith.constant 0 : index
    %c0_122 = arith.constant 0 : index
    %275 = vector.load %arg28[%c0_121, %c0_122] : memref<64x32xbf16, #tpu.memory_space<vmem>>, vector<64x32xbf16>
    %cst_123 = arith.constant dense<0.000000e+00> : vector<32x32xf32>
    %276 = tpu.matmul %274, %275, %cst_123 {dimension_numbers = #tpu.dot_dimension_numbers<[1], [0], [0], [1], [0, 0, 1, 1], [], []>} : vector<32x64xbf16>, vector<64x32xbf16>, vector<32x32xf32> -> vector<32x32xf32>
    %c0_124 = arith.constant 0 : index
    %c0_125 = arith.constant 0 : index
    %277 = vector.load %arg29[%c0_124, %c0_125] : memref<1x32xf32, #tpu.memory_space<vmem>>, vector<1x32xf32>
    %278 = vector.broadcast %277 : vector<1x32xf32> to vector<32x32xf32>
    %279 = arith.addf %276, %278 : vector<32x32xf32>
    %c0_126 = arith.constant 0 : index
    %c0_127 = arith.constant 0 : index
    %280 = vector.load %arg30[%c0_126, %c0_127] : memref<1x32xf32, #tpu.memory_space<vmem>>, vector<1x32xf32>
    %c0_128 = arith.constant 0 : index
    %c0_129 = arith.constant 0 : index
    %281 = vector.load %arg31[%c0_128, %c0_129] : memref<1x32xf32, #tpu.memory_space<vmem>>, vector<1x32xf32>
    %282 = arith.addf %279, %265 : vector<32x32xf32>
    %cst_130 = arith.constant dense<0.000000e+00> : vector<32xf32>
    %283 = vector.multi_reduction <add>, %282, %cst_130 [1] : vector<32x32xf32> to vector<32xf32>
    %284 = vector.shape_cast %283 : vector<32xf32> to vector<32x1xf32>
    %cst_131 = arith.constant 3.200000e+01 : f32
    %285 = vector.broadcast %cst_131 : f32 to vector<32x1xf32>
    %286 = arith.divf %284, %285 : vector<32x1xf32>
    %287 = vector.broadcast %286 : vector<32x1xf32> to vector<32x32xf32>
    %288 = arith.subf %282, %287 : vector<32x32xf32>
    %289 = arith.mulf %288, %288 : vector<32x32xf32>
    %cst_132 = arith.constant dense<0.000000e+00> : vector<32xf32>
    %290 = vector.multi_reduction <add>, %289, %cst_132 [1] : vector<32x32xf32> to vector<32xf32>
    %291 = vector.shape_cast %290 : vector<32xf32> to vector<32x1xf32>
    %cst_133 = arith.constant 3.200000e+01 : f32
    %292 = vector.broadcast %cst_133 : f32 to vector<32x1xf32>
    %293 = arith.divf %291, %292 : vector<32x1xf32>
    %294 = vector.broadcast %286 : vector<32x1xf32> to vector<32x32xf32>
    %295 = arith.subf %282, %294 : vector<32x32xf32>
    %cst_134 = arith.constant 9.99999974E-6 : f32
    %296 = vector.broadcast %cst_134 : f32 to vector<32x1xf32>
    %297 = arith.addf %293, %296 : vector<32x1xf32>
    %298 = math.rsqrt %297 : vector<32x1xf32>
    %299 = vector.broadcast %298 : vector<32x1xf32> to vector<32x32xf32>
    %300 = arith.mulf %295, %299 : vector<32x32xf32>
    %301 = vector.broadcast %280 : vector<1x32xf32> to vector<32x32xf32>
    %302 = arith.mulf %300, %301 : vector<32x32xf32>
    %303 = vector.broadcast %281 : vector<1x32xf32> to vector<32x32xf32>
    %304 = arith.addf %302, %303 : vector<32x32xf32>
    %c0_135 = arith.constant 0 : index
    %c0_136 = arith.constant 0 : index
    %c0_137 = arith.constant 0 : index
    %305 = vector.load %arg32[%c0_135, %c0_136, %c0_137] : memref<1x32x32xf32, #tpu.memory_space<vmem>>, vector<1x32x32xf32>
    %306 = vector.shape_cast %305 : vector<1x32x32xf32> to vector<32x32xf32>
    %307 = vector.shape_cast %304 : vector<32x32xf32> to vector<1x32x32xf32>
    tpu.vector_store %arg32[%c0_135, %c0_136, %c0_137], %307 {strides = array<i32>} : memref<1x32x32xf32, #tpu.memory_space<vmem>>, vector<1x32x32xf32>,
    return
  }
  func.func @transform_0(%arg0: i32, %arg1: i32) -> (i32, i32, i32) {
    %c0_i32 = arith.constant 0 : i32
    %c0_i32_0 = arith.constant 0 : i32
    %c0_i32_1 = arith.constant 0 : i32
    return %arg0, %c0_i32, %c0_i32_0 : i32, i32, i32
  }
  func.func @transform_1(%arg0: i32, %arg1: i32) -> (i32, i32, i32) {
    %c0_i32 = arith.constant 0 : i32
    %c0_i32_0 = arith.constant 0 : i32
    return %arg0, %arg1, %c0_i32 : i32, i32, i32
  }
  func.func @transform_2(%arg0: i32, %arg1: i32) -> (i32, i32, i32, i32) {
    %c0_i32 = arith.constant 0 : i32
    %c0_i32_0 = arith.constant 0 : i32
    %c0_i32_1 = arith.constant 0 : i32
    return %arg0, %c0_i32, %arg1, %c0_i32_0 : i32, i32, i32, i32
  }
  func.func @transform_3(%arg0: i32, %arg1: i32) -> (i32, i32, i32) {
    %c0_i32 = arith.constant 0 : i32
    %c0_i32_0 = arith.constant 0 : i32
    %c0_i32_1 = arith.constant 0 : i32
    return %arg0, %c0_i32, %c0_i32_0 : i32, i32, i32
  }
  func.func @transform_4(%arg0: i32, %arg1: i32) -> (i32, i32, i32) {
    %c0_i32 = arith.constant 0 : i32
    %c0_i32_0 = arith.constant 0 : i32
    %c0_i32_1 = arith.constant 0 : i32
    return %arg0, %c0_i32, %c0_i32_0 : i32, i32, i32
  }
  func.func @transform_5(%arg0: i32, %arg1: i32) -> (i32, i32, i32, i32) {
    %c0_i32 = arith.constant 0 : i32
    %c0_i32_0 = arith.constant 0 : i32
    %c0_i32_1 = arith.constant 0 : i32
    return %arg0, %c0_i32, %arg1, %c0_i32_0 : i32, i32, i32, i32
  }
  func.func @transform_6(%arg0: i32, %arg1: i32) -> (i32, i32) {
    %c0_i32 = arith.constant 0 : i32
    %c0_i32_0 = arith.constant 0 : i32
    %c0_i32_1 = arith.constant 0 : i32
    return %c0_i32, %c0_i32_0 : i32, i32
  }
  func.func @transform_7(%arg0: i32, %arg1: i32) -> (i32, i32) {
    %c0_i32 = arith.constant 0 : i32
    %c0_i32_0 = arith.constant 0 : i32
    %c0_i32_1 = arith.constant 0 : i32
    return %c0_i32, %c0_i32_0 : i32, i32
  }
  func.func @transform_8(%arg0: i32, %arg1: i32) -> (i32, i32) {
    %c0_i32 = arith.constant 0 : i32
    %c0_i32_0 = arith.constant 0 : i32
    %c0_i32_1 = arith.constant 0 : i32
    return %c0_i32, %c0_i32_0 : i32, i32
  }
  func.func @transform_9(%arg0: i32, %arg1: i32) -> (i32, i32) {
    %c0_i32 = arith.constant 0 : i32
    %c0_i32_0 = arith.constant 0 : i32
    %c0_i32_1 = arith.constant 0 : i32
    return %c0_i32, %c0_i32_0 : i32, i32
  }
  func.func @transform_10(%arg0: i32, %arg1: i32) -> (i32, i32) {
    %c0_i32 = arith.constant 0 : i32
    %c0_i32_0 = arith.constant 0 : i32
    %c0_i32_1 = arith.constant 0 : i32
    return %c0_i32, %c0_i32_0 : i32, i32
  }
  func.func @transform_11(%arg0: i32, %arg1: i32) -> (i32, i32) {
    %c0_i32 = arith.constant 0 : i32
    %c0_i32_0 = arith.constant 0 : i32
    %c0_i32_1 = arith.constant 0 : i32
    return %c0_i32, %c0_i32_0 : i32, i32
  }
  func.func @transform_12(%arg0: i32, %arg1: i32) -> (i32, i32) {
    %c0_i32 = arith.constant 0 : i32
    %c0_i32_0 = arith.constant 0 : i32
    %c0_i32_1 = arith.constant 0 : i32
    return %c0_i32, %c0_i32_0 : i32, i32
  }
  func.func @transform_13(%arg0: i32, %arg1: i32) -> (i32, i32) {
    %c0_i32 = arith.constant 0 : i32
    %c0_i32_0 = arith.constant 0 : i32
    %c0_i32_1 = arith.constant 0 : i32
    return %c0_i32, %c0_i32_0 : i32, i32
  }
  func.func @transform_14(%arg0: i32, %arg1: i32) -> (i32, i32) {
    %c0_i32 = arith.constant 0 : i32
    %c0_i32_0 = arith.constant 0 : i32
    %c0_i32_1 = arith.constant 0 : i32
    return %c0_i32, %c0_i32_0 : i32, i32
  }
  func.func @transform_15(%arg0: i32, %arg1: i32) -> (i32, i32) {
    %c0_i32 = arith.constant 0 : i32
    %c0_i32_0 = arith.constant 0 : i32
    %c0_i32_1 = arith.constant 0 : i32
    return %c0_i32, %c0_i32_0 : i32, i32
  }
  func.func @transform_16(%arg0: i32, %arg1: i32) -> (i32, i32) {
    %c0_i32 = arith.constant 0 : i32
    %c0_i32_0 = arith.constant 0 : i32
    %c0_i32_1 = arith.constant 0 : i32
    return %c0_i32, %c0_i32_0 : i32, i32
  }
  func.func @transform_17(%arg0: i32, %arg1: i32) -> (i32, i32) {
    %c0_i32 = arith.constant 0 : i32
    %c0_i32_0 = arith.constant 0 : i32
    %c0_i32_1 = arith.constant 0 : i32
    return %c0_i32, %c0_i32_0 : i32, i32
  }
  func.func @transform_18(%arg0: i32, %arg1: i32) -> (i32, i32) {
    %c0_i32 = arith.constant 0 : i32
    %c0_i32_0 = arith.constant 0 : i32
    %c0_i32_1 = arith.constant 0 : i32
    return %c0_i32, %c0_i32_0 : i32, i32
  }
  func.func @transform_19(%arg0: i32, %arg1: i32) -> (i32, i32) {
    %c0_i32 = arith.constant 0 : i32
    %c0_i32_0 = arith.constant 0 : i32
    %c0_i32_1 = arith.constant 0 : i32
    return %c0_i32, %c0_i32_0 : i32, i32
  }
  func.func @transform_20(%arg0: i32, %arg1: i32) -> (i32, i32) {
    %c0_i32 = arith.constant 0 : i32
    %c0_i32_0 = arith.constant 0 : i32
    %c0_i32_1 = arith.constant 0 : i32
    return %c0_i32, %c0_i32_0 : i32, i32
  }
  func.func @transform_21(%arg0: i32, %arg1: i32) -> (i32, i32) {
    %c0_i32 = arith.constant 0 : i32
    %c0_i32_0 = arith.constant 0 : i32
    %c0_i32_1 = arith.constant 0 : i32
    return %c0_i32, %c0_i32_0 : i32, i32
  }
  func.func @transform_22(%arg0: i32, %arg1: i32) -> (i32, i32) {
    %c0_i32 = arith.constant 0 : i32
    %c0_i32_0 = arith.constant 0 : i32
    %c0_i32_1 = arith.constant 0 : i32
    return %c0_i32, %c0_i32_0 : i32, i32
  }
  func.func @transform_23(%arg0: i32, %arg1: i32) -> (i32, i32) {
    %c0_i32 = arith.constant 0 : i32
    %c0_i32_0 = arith.constant 0 : i32
    %c0_i32_1 = arith.constant 0 : i32
    return %c0_i32, %c0_i32_0 : i32, i32
  }
  func.func @transform_24(%arg0: i32, %arg1: i32) -> (i32, i32) {
    %c0_i32 = arith.constant 0 : i32
    %c0_i32_0 = arith.constant 0 : i32
    %c0_i32_1 = arith.constant 0 : i32
    return %c0_i32, %c0_i32_0 : i32, i32
  }
  func.func @transform_25(%arg0: i32, %arg1: i32) -> (i32, i32) {
    %c0_i32 = arith.constant 0 : i32
    %c0_i32_0 = arith.constant 0 : i32
    %c0_i32_1 = arith.constant 0 : i32
    return %c0_i32, %c0_i32_0 : i32, i32
  }
  func.func @transform_26(%arg0: i32, %arg1: i32) -> (i32, i32) {
    %c0_i32 = arith.constant 0 : i32
    %c0_i32_0 = arith.constant 0 : i32
    %c0_i32_1 = arith.constant 0 : i32
    return %c0_i32, %c0_i32_0 : i32, i32
  }
  func.func @transform_27(%arg0: i32, %arg1: i32) -> (i32, i32) {
    %c0_i32 = arith.constant 0 : i32
    %c0_i32_0 = arith.constant 0 : i32
    %c0_i32_1 = arith.constant 0 : i32
    return %c0_i32, %c0_i32_0 : i32, i32
  }
  func.func @transform_28(%arg0: i32, %arg1: i32) -> (i32, i32) {
    %c0_i32 = arith.constant 0 : i32
    %c0_i32_0 = arith.constant 0 : i32
    %c0_i32_1 = arith.constant 0 : i32
    return %c0_i32, %c0_i32_0 : i32, i32
  }
  func.func @transform_29(%arg0: i32, %arg1: i32) -> (i32, i32) {
    %c0_i32 = arith.constant 0 : i32
    %c0_i32_0 = arith.constant 0 : i32
    %c0_i32_1 = arith.constant 0 : i32
    return %c0_i32, %c0_i32_0 : i32, i32
  }
  func.func @transform_30(%arg0: i32, %arg1: i32) -> (i32, i32, i32) {
    %c0_i32 = arith.constant 0 : i32
    %c0_i32_0 = arith.constant 0 : i32
    return %arg0, %arg1, %c0_i32 : i32, i32, i32
  }
}

</mosaic_0001>

<llo_original>
// kernel: tpu_custom_call.1
$region0: #{tpu_custom_call.1}
  #allocation0 [shape = 'u32[]', space=smem, size = 0x4, offset = 0x4, fixed_abs, tag = 'smem constant byte address 0x4 - core index']
  #allocation1 [shape = 'u32[144,128]{1,0:T(1,128)}', space=vmem, size = 0x12000, scoped, tag = 'internal scratch']
  %s0 = inlined_call_operand.smem [shape: u32[31], index: -1, kind: input, shape index: {}]
  %s1 = sld [smem:[%s0]]
  %s2 = scalar_lea.smem %s0, 1
  %s3 = sld [smem:[%s2]]
  %s4 = scalar_lea.smem %s0, 2
  %s5 = sld [smem:[%s4]]
  %s6 = scalar_lea.smem %s0, 3
  %s7 = sld [smem:[%s6]]
  %s8 = scalar_lea.smem %s0, 4
  %s9 = sld [smem:[%s8]]
  %s10 = scalar_lea.smem %s0, 5
  %s11 = sld [smem:[%s10]]
  %s12 = scalar_lea.smem %s0, 6
  %s13 = sld [smem:[%s12]]
  %s14 = scalar_lea.smem %s0, 7
  %s15 = sld [smem:[%s14]]
  %s16 = scalar_lea.smem %s0, 8
  %s17 = sld [smem:[%s16]]
  %s18 = scalar_lea.smem %s0, 9
  %s19 = sld [smem:[%s18]]
  %s20 = scalar_lea.smem %s0, 10
  %s21 = sld [smem:[%s20]]
  %s22 = scalar_lea.smem %s0, 11
  %s23 = sld [smem:[%s22]]
  %s24 = scalar_lea.smem %s0, 12
  %s25 = sld [smem:[%s24]]
  %s26 = scalar_lea.smem %s0, 13
  %s27 = sld [smem:[%s26]]
  %s28 = scalar_lea.smem %s0, 14
  %s29 = sld [smem:[%s28]]
  %s30 = scalar_lea.smem %s0, 15
  %s31 = sld [smem:[%s30]]
  %s32 = scalar_lea.smem %s0, 16
  %s33 = sld [smem:[%s32]]
  %s34 = scalar_lea.smem %s0, 17
  %s35 = sld [smem:[%s34]]
  %s36 = scalar_lea.smem %s0, 18
  %s37 = sld [smem:[%s36]]
  %s38 = scalar_lea.smem %s0, 19
  %s39 = sld [smem:[%s38]]
  %s40 = scalar_lea.smem %s0, 20
  %s41 = sld [smem:[%s40]]
  %s42 = scalar_lea.smem %s0, 21
  %s43 = sld [smem:[%s42]]
  %s44 = scalar_lea.smem %s0, 22
  %s45 = sld [smem:[%s44]]
  %s46 = scalar_lea.smem %s0, 23
  %s47 = sld [smem:[%s46]]
  %s48 = scalar_lea.smem %s0, 24
  %s49 = sld [smem:[%s48]]
  %s50 = scalar_lea.smem %s0, 25
  %s51 = sld [smem:[%s50]]
  %s52 = scalar_lea.smem %s0, 26
  %s53 = sld [smem:[%s52]]
  %s54 = scalar_lea.smem %s0, 27
  %s55 = sld [smem:[%s54]]
  %s56 = scalar_lea.smem %s0, 28
  %s57 = sld [smem:[%s56]]
  %s58 = scalar_lea.smem %s0, 29
  %s59 = sld [smem:[%s58]]
  %s60 = scalar_lea.smem %s0, 30
  %s61 = sld [smem:[%s60]]
  %s62 = sld [smem:[#allocation0]]
  $region153: #{tpu_custom_call.1} parent=0
    _
  %s64 = ssub.s32 1, %s62
  %s65 = scalar_select 0, %s64, %s62
  loop: start=0, step=1, limit=6
  $region2: #{tpu_custom_call.1} parent=0 // loop_pre_header
    _
  $region3: #{tpu_custom_call.1} parent=0 // loop_header
    %s67 = sphi 0, %s71
    %p68 = scmp.ge.s32.totalorder %s67, 6
    %s74 = sphi 0, %s86
    %s75 = sphi 0, %s82
    %s76 = sphi 0, %s74
    %s77 = sphi 0, %s75
    %s78 = sphi 0, %s76
    %s79 = sphi 0, %s77
    %s89 = sphi 0, %s91
    %s92 = sphi 0, %s89
    %s93 = sphi 0, %s92
    %s109 = sphi 0, %s93
    %s117 = sphi 0, %s119
    %s120 = sphi 0, %s117
    %s121 = sphi 0, %s120
    %s137 = sphi 0, %s121
    %s145 = sphi 0, %s147
    %s148 = sphi 0, %s145
    %s149 = sphi 0, %s148
    %s165 = sphi 0, %s149
    %s171 = sphi 0, %s173
    %s174 = sphi 0, %s171
    %s175 = sphi 0, %s174
    %s191 = sphi 0, %s175
    %s197 = sphi 0, %s199
    %s200 = sphi 0, %s197
    %s201 = sphi 0, %s200
    %s217 = sphi 0, %s201
    %s225 = sphi 0, %s227
    %s228 = sphi 0, %s225
    %s229 = sphi 0, %s228
    %s245 = sphi 0, %s229
    %s249 = sphi 0, %s249
    %s251 = sphi 0, %s249
    %s252 = sphi 0, %s251
    %s266 = sphi 0, %s252
    %s270 = sphi 0, %s270
    %s272 = sphi 0, %s270
    %s273 = sphi 0, %s272
    %s287 = sphi 0, %s273
    %s291 = sphi 0, %s291
    %s293 = sphi 0, %s291
    %s294 = sphi 0, %s293
    %s308 = sphi 0, %s294
    %s312 = sphi 0, %s312
    %s314 = sphi 0, %s312
    %s315 = sphi 0, %s314
    %s329 = sphi 0, %s315
    %s333 = sphi 0, %s333
    %s335 = sphi 0, %s333
    %s336 = sphi 0, %s335
    %s350 = sphi 0, %s336
    %s354 = sphi 0, %s354
    %s356 = sphi 0, %s354
    %s357 = sphi 0, %s356
    %s371 = sphi 0, %s357
    %s375 = sphi 0, %s375
    %s377 = sphi 0, %s375
    %s378 = sphi 0, %s377
    %s392 = sphi 0, %s378
    %s396 = sphi 0, %s396
    %s398 = sphi 0, %s396
    %s399 = sphi 0, %s398
    %s413 = sphi 0, %s399
    %s417 = sphi 0, %s417
    %s419 = sphi 0, %s417
    %s420 = sphi 0, %s419
    %s434 = sphi 0, %s420
    %s438 = sphi 0, %s438
    %s440 = sphi 0, %s438
    %s441 = sphi 0, %s440
    %s455 = sphi 0, %s441
    %s459 = sphi 0, %s459
    %s461 = sphi 0, %s459
    %s462 = sphi 0, %s461
    %s476 = sphi 0, %s462
    %s480 = sphi 0, %s480
    %s482 = sphi 0, %s480
    %s483 = sphi 0, %s482
    %s497 = sphi 0, %s483
    %s501 = sphi 0, %s501
    %s503 = sphi 0, %s501
    %s504 = sphi 0, %s503
    %s518 = sphi 0, %s504
    %s522 = sphi 0, %s522
    %s524 = sphi 0, %s522
    %s525 = sphi 0, %s524
    %s539 = sphi 0, %s525
    %s543 = sphi 0, %s543
    %s545 = sphi 0, %s543
    %s546 = sphi 0, %s545
    %s560 = sphi 0, %s546
    %s564 = sphi 0, %s564
    %s566 = sphi 0, %s564
    %s567 = sphi 0, %s566
    %s581 = sphi 0, %s567
    %s585 = sphi 0, %s585
    %s587 = sphi 0, %s585
    %s588 = sphi 0, %s587
    %s602 = sphi 0, %s588
    %s606 = sphi 0, %s606
    %s608 = sphi 0, %s606
    %s609 = sphi 0, %s608
    %s623 = sphi 0, %s609
    %s627 = sphi 0, %s627
    %s629 = sphi 0, %s627
    %s630 = sphi 0, %s629
    %s644 = sphi 0, %s630
    %s648 = sphi 0, %s648
    %s650 = sphi 0, %s648
    %s651 = sphi 0, %s650
    %s665 = sphi 0, %s651
    %s669 = sphi 0, %s669
    %s671 = sphi 0, %s669
    %s672 = sphi 0, %s671
    %s686 = sphi 0, %s672
    %s690 = sphi 0, %s690
    %s692 = sphi 0, %s690
    %s693 = sphi 0, %s692
    %s707 = sphi 0, %s693
    %s711 = sphi 0, %s711
    %s713 = sphi 0, %s711
    %s714 = sphi 0, %s713
    %s728 = sphi 0, %s714
    %s732 = sphi 0, %s732
    %s734 = sphi 0, %s732
    %s735 = sphi 0, %s734
    %s749 = sphi 0, %s735
    %s757 = sphi 0, %s759
    %s760 = sphi 0, %s757
    %s761 = sphi 0, %s760
    %s777 = sphi 0, %s761
  $region4: #{tpu_custom_call.1} parent=0 // loop_header_branch
    %70 = sbr.rel (%p68) target = $region8
  $region5: #{tpu_custom_call.1} parent=0 // loop_body
    %s72 = ssub.s32 %s67, 1
    %s73 = ssub.s32 %s67, 2
    %s80 = sadd.s32 1, %s75
    %p81 = scmp.ge.s32.totalorder %s80, 2
    %s82 = scalar_select %p81, 0, %s80
    %s83 = sadd.s32 1, %s74
    %s84 = scalar_select %p81, %s83, %s74
    %p85 = scmp.ge.s32.totalorder %s84, 2
    %s86 = scalar_select %p85, 0, %s84
    %s87 = ssub.s32 %s74, %s86
    %p88 = scmp.eq.s32.totalorder %s87, 0
    %s90 = sadd.s32 %s89, 1
    %s91 = scalar_select %p88, %s89, %s90
    %p94 = pneg %p88
    %p95 = scmp.eq.s32.totalorder %s67, 3
    %p96 = por %p94, %p95
    %p97 = scmp.ne.s32.totalorder %s89, %s92
    %p98 = scmp.eq.s32.totalorder %s67, 0
    %p99 = por %p97, %p98
    %p100 = scmp.ne.s32.totalorder %s89, %s92
    %p101 = scmp.eq.s32.totalorder %s72, 3
    %p102 = por %p100, %p101
    %p103 = scmp.ne.s32.totalorder %s92, %s93
    %p104 = scmp.eq.s32.totalorder %s72, 0
    %p105 = por %p103, %p104
    %p106 = scmp.ne.s32.totalorder %s92, %s93
    %p107 = scmp.eq.s32.totalorder %s73, 3
    %p108 = por %p106, %p107
    %p110 = scmp.ne.s32.totalorder %s93, %s109
    %p111 = scmp.eq.s32.totalorder %s73, 0
    %p112 = por %p110, %p111
    %s113 = ssub.s32 %s74, %s86
    %s114 = ssub.s32 %s75, %s82
    %s115 = sor.u32 %s113, %s114
    %p116 = scmp.eq.s32.totalorder %s115, 0
    %s118 = sadd.s32 %s117, 1
    %s119 = scalar_select %p116, %s117, %s118
    %p122 = pneg %p116
    %p123 = scmp.eq.s32.totalorder %s67, 3
    %p124 = por %p122, %p123
    %p125 = scmp.ne.s32.totalorder %s117, %s120
    %p126 = scmp.eq.s32.totalorder %s67, 0
    %p127 = por %p125, %p126
    %p128 = scmp.ne.s32.totalorder %s117, %s120
    %p129 = scmp.eq.s32.totalorder %s72, 3
    %p130 = por %p128, %p129
    %p131 = scmp.ne.s32.totalorder %s120, %s121
    %p132 = scmp.eq.s32.totalorder %s72, 0
    %p133 = por %p131, %p132
    %p134 = scmp.ne.s32.totalorder %s120, %s121
    %p135 = scmp.eq.s32.totalorder %s73, 3
    %p136 = por %p134, %p135
    %p138 = scmp.ne.s32.totalorder %s121, %s137
    %p139 = scmp.eq.s32.totalorder %s73, 0
    %p140 = por %p138, %p139
    %s141 = ssub.s32 %s74, %s86
    %s142 = ssub.s32 %s75, %s82
    %s143 = sor.u32 %s141, %s142
    %p144 = scmp.eq.s32.totalorder %s143, 0
    %s146 = sadd.s32 %s145, 1
    %s147 = scalar_select %p144, %s145, %s146
    %p150 = pneg %p144
    %p151 = scmp.eq.s32.totalorder %s67, 3
    %p152 = por %p150, %p151
    %p153 = scmp.ne.s32.totalorder %s145, %s148
    %p154 = scmp.eq.s32.totalorder %s67, 0
    %p155 = por %p153, %p154
    %p156 = scmp.ne.s32.totalorder %s145, %s148
    %p157 = scmp.eq.s32.totalorder %s72, 3
    %p158 = por %p156, %p157
    %p159 = scmp.ne.s32.totalorder %s148, %s149
    %p160 = scmp.eq.s32.totalorder %s72, 0
    %p161 = por %p159, %p160
    %p162 = scmp.ne.s32.totalorder %s148, %s149
    %p163 = scmp.eq.s32.totalorder %s73, 3
    %p164 = por %p162, %p163
    %p166 = scmp.ne.s32.totalorder %s149, %s165
    %p167 = scmp.eq.s32.totalorder %s73, 0
    %p168 = por %p166, %p167
    %s169 = ssub.s32 %s74, %s86
    %p170 = scmp.eq.s32.totalorder %s169, 0
    %s172 = sadd.s32 %s171, 1
    %s173 = scalar_select %p170, %s171, %s172
    %p176 = pneg %p170
    %p177 = scmp.eq.s32.totalorder %s67, 3
    %p178 = por %p176, %p177
    %p179 = scmp.ne.s32.totalorder %s171, %s174
    %p180 = scmp.eq.s32.totalorder %s67, 0
    %p181 = por %p179, %p180
    %p182 = scmp.ne.s32.totalorder %s171, %s174
    %p183 = scmp.eq.s32.totalorder %s72, 3
    %p184 = por %p182, %p183
    %p185 = scmp.ne.s32.totalorder %s174, %s175
    %p186 = scmp.eq.s32.totalorder %s72, 0
    %p187 = por %p185, %p186
    %p188 = scmp.ne.s32.totalorder %s174, %s175
    %p189 = scmp.eq.s32.totalorder %s73, 3
    %p190 = por %p188, %p189
    %p192 = scmp.ne.s32.totalorder %s175, %s191
    %p193 = scmp.eq.s32.totalorder %s73, 0
    %p194 = por %p192, %p193
    %s195 = ssub.s32 %s74, %s86
    %p196 = scmp.eq.s32.totalorder %s195, 0
    %s198 = sadd.s32 %s197, 1
    %s199 = scalar_select %p196, %s197, %s198
    %p202 = pneg %p196
    %p203 = scmp.eq.s32.totalorder %s67, 3
    %p204 = por %p202, %p203
    %p205 = scmp.ne.s32.totalorder %s197, %s200
    %p206 = scmp.eq.s32.totalorder %s67, 0
    %p207 = por %p205, %p206
    %p208 = scmp.ne.s32.totalorder %s197, %s200
    %p209 = scmp.eq.s32.totalorder %s72, 3
    %p210 = por %p208, %p209
    %p211 = scmp.ne.s32.totalorder %s200, %s201
    %p212 = scmp.eq.s32.totalorder %s72, 0
    %p213 = por %p211, %p212
    %p214 = scmp.ne.s32.totalorder %s200, %s201
    %p215 = scmp.eq.s32.totalorder %s73, 3
    %p216 = por %p214, %p215
    %p218 = scmp.ne.s32.totalorder %s201, %s217
    %p219 = scmp.eq.s32.totalorder %s73, 0
    %p220 = por %p218, %p219
    %s221 = ssub.s32 %s74, %s86
    %s222 = ssub.s32 %s75, %s82
    %s223 = sor.u32 %s221, %s222
    %p224 = scmp.eq.s32.totalorder %s223, 0
    %s226 = sadd.s32 %s225, 1
    %s227 = scalar_select %p224, %s225, %s226
    %p230 = pneg %p224
    %p231 = scmp.eq.s32.totalorder %s67, 3
    %p232 = por %p230, %p231
    %p233 = scmp.ne.s32.totalorder %s225, %s228
    %p234 = scmp.eq.s32.totalorder %s67, 0
    %p235 = por %p233, %p234
    %p236 = scmp.ne.s32.totalorder %s225, %s228
    %p237 = scmp.eq.s32.totalorder %s72, 3
    %p238 = por %p236, %p237
    %p239 = scmp.ne.s32.totalorder %s228, %s229
    %p240 = scmp.eq.s32.totalorder %s72, 0
    %p241 = por %p239, %p240
    %p242 = scmp.ne.s32.totalorder %s228, %s229
    %p243 = scmp.eq.s32.totalorder %s73, 3
    %p244 = por %p242, %p243
    %p246 = scmp.ne.s32.totalorder %s229, %s245
    %p247 = scmp.eq.s32.totalorder %s73, 0
    %p248 = por %p246, %p247
    %s250 = sadd.s32 %s249, 1
    %p253 = scmp.eq.s32.totalorder %s67, 3
    %p254 = scmp.ne.s32.totalorder %s249, %s251
    %p255 = scmp.eq.s32.totalorder %s67, 0
    %p256 = por %p254, %p255
    %p257 = scmp.ne.s32.totalorder %s249, %s251
    %p258 = scmp.eq.s32.totalorder %s72, 3
    %p259 = por %p257, %p258
    %p260 = scmp.ne.s32.totalorder %s251, %s252
    %p261 = scmp.eq.s32.totalorder %s72, 0
    %p262 = por %p260, %p261
    %p263 = scmp.ne.s32.totalorder %s251, %s252
    %p264 = scmp.eq.s32.totalorder %s73, 3
    %p265 = por %p263, %p264
    %p267 = scmp.ne.s32.totalorder %s252, %s266
    %p268 = scmp.eq.s32.totalorder %s73, 0
    %p269 = por %p267, %p268
    %s271 = sadd.s32 %s270, 1
    %p274 = scmp.eq.s32.totalorder %s67, 3
    %p275 = scmp.ne.s32.totalorder %s270, %s272
    %p276 = scmp.eq.s32.totalorder %s67, 0
    %p277 = por %p275, %p276
    %p278 = scmp.ne.s32.totalorder %s270, %s272
    %p279 = scmp.eq.s32.totalorder %s72, 3
    %p280 = por %p278, %p279
    %p281 = scmp.ne.s32.totalorder %s272, %s273
    %p282 = scmp.eq.s32.totalorder %s72, 0
    %p283 = por %p281, %p282
    %p284 = scmp.ne.s32.totalorder %s272, %s273
    %p285 = scmp.eq.s32.totalorder %s73, 3
    %p286 = por %p284, %p285
    %p288 = scmp.ne.s32.totalorder %s273, %s287
    %p289 = scmp.eq.s32.totalorder %s73, 0
    %p290 = por %p288, %p289
    %s292 = sadd.s32 %s291, 1
    %p295 = scmp.eq.s32.totalorder %s67, 3
    %p296 = scmp.ne.s32.totalorder %s291, %s293
    %p297 = scmp.eq.s32.totalorder %s67, 0
    %p298 = por %p296, %p297
    %p299 = scmp.ne.s32.totalorder %s291, %s293
    %p300 = scmp.eq.s32.totalorder %s72, 3
    %p301 = por %p299, %p300
    %p302 = scmp.ne.s32.totalorder %s293, %s294
    %p303 = scmp.eq.s32.totalorder %s72, 0
    %p304 = por %p302, %p303
    %p305 = scmp.ne.s32.totalorder %s293, %s294
    %p306 = scmp.eq.s32.totalorder %s73, 3
    %p307 = por %p305, %p306
    %p309 = scmp.ne.s32.totalorder %s294, %s308
    %p310 = scmp.eq.s32.totalorder %s73, 0
    %p311 = por %p309, %p310
    %s313 = sadd.s32 %s312, 1
    %p316 = scmp.eq.s32.totalorder %s67, 3
    %p317 = scmp.ne.s32.totalorder %s312, %s314
    %p318 = scmp.eq.s32.totalorder %s67, 0
    %p319 = por %p317, %p318
    %p320 = scmp.ne.s32.totalorder %s312, %s314
    %p321 = scmp.eq.s32.totalorder %s72, 3
    %p322 = por %p320, %p321
    %p323 = scmp.ne.s32.totalorder %s314, %s315
    %p324 = scmp.eq.s32.totalorder %s72, 0
    %p325 = por %p323, %p324
    %p326 = scmp.ne.s32.totalorder %s314, %s315
    %p327 = scmp.eq.s32.totalorder %s73, 3
    %p328 = por %p326, %p327
    %p330 = scmp.ne.s32.totalorder %s315, %s329
    %p331 = scmp.eq.s32.totalorder %s73, 0
    %p332 = por %p330, %p331
    %s334 = sadd.s32 %s333, 1
    %p337 = scmp.eq.s32.totalorder %s67, 3
    %p338 = scmp.ne.s32.totalorder %s333, %s335
    %p339 = scmp.eq.s32.totalorder %s67, 0
    %p340 = por %p338, %p339
    %p341 = scmp.ne.s32.totalorder %s333, %s335
    %p342 = scmp.eq.s32.totalorder %s72, 3
    %p343 = por %p341, %p342
    %p344 = scmp.ne.s32.totalorder %s335, %s336
    %p345 = scmp.eq.s32.totalorder %s72, 0
    %p346 = por %p344, %p345
    %p347 = scmp.ne.s32.totalorder %s335, %s336
    %p348 = scmp.eq.s32.totalorder %s73, 3
    %p349 = por %p347, %p348
    %p351 = scmp.ne.s32.totalorder %s336, %s350
    %p352 = scmp.eq.s32.totalorder %s73, 0
    %p353 = por %p351, %p352
    %s355 = sadd.s32 %s354, 1
    %p358 = scmp.eq.s32.totalorder %s67, 3
    %p359 = scmp.ne.s32.totalorder %s354, %s356
    %p360 = scmp.eq.s32.totalorder %s67, 0
    %p361 = por %p359, %p360
    %p362 = scmp.ne.s32.totalorder %s354, %s356
    %p363 = scmp.eq.s32.totalorder %s72, 3
    %p364 = por %p362, %p363
    %p365 = scmp.ne.s32.totalorder %s356, %s357
    %p366 = scmp.eq.s32.totalorder %s72, 0
    %p367 = por %p365, %p366
    %p368 = scmp.ne.s32.totalorder %s356, %s357
    %p369 = scmp.eq.s32.totalorder %s73, 3
    %p370 = por %p368, %p369
    %p372 = scmp.ne.s32.totalorder %s357, %s371
    %p373 = scmp.eq.s32.totalorder %s73, 0
    %p374 = por %p372, %p373
    %s376 = sadd.s32 %s375, 1
    %p379 = scmp.eq.s32.totalorder %s67, 3
    %p380 = scmp.ne.s32.totalorder %s375, %s377
    %p381 = scmp.eq.s32.totalorder %s67, 0
    %p382 = por %p380, %p381
    %p383 = scmp.ne.s32.totalorder %s375, %s377
    %p384 = scmp.eq.s32.totalorder %s72, 3
    %p385 = por %p383, %p384
    %p386 = scmp.ne.s32.totalorder %s377, %s378
    %p387 = scmp.eq.s32.totalorder %s72, 0
    %p388 = por %p386, %p387
    %p389 = scmp.ne.s32.totalorder %s377, %s378
    %p390 = scmp.eq.s32.totalorder %s73, 3
    %p391 = por %p389, %p390
    %p393 = scmp.ne.s32.totalorder %s378, %s392
    %p394 = scmp.eq.s32.totalorder %s73, 0
    %p395 = por %p393, %p394
    %s397 = sadd.s32 %s396, 1
    %p400 = scmp.eq.s32.totalorder %s67, 3
    %p401 = scmp.ne.s32.totalorder %s396, %s398
    %p402 = scmp.eq.s32.totalorder %s67, 0
    %p403 = por %p401, %p402
    %p404 = scmp.ne.s32.totalorder %s396, %s398
    %p405 = scmp.eq.s32.totalorder %s72, 3
    %p406 = por %p404, %p405
    %p407 = scmp.ne.s32.totalorder %s398, %s399
    %p408 = scmp.eq.s32.totalorder %s72, 0
    %p409 = por %p407, %p408
    %p410 = scmp.ne.s32.totalorder %s398, %s399
    %p411 = scmp.eq.s32.totalorder %s73, 3
    %p412 = por %p410, %p411
    %p414 = scmp.ne.s32.totalorder %s399, %s413
    %p415 = scmp.eq.s32.totalorder %s73, 0
    %p416 = por %p414, %p415
    %s418 = sadd.s32 %s417, 1
    %p421 = scmp.eq.s32.totalorder %s67, 3
    %p422 = scmp.ne.s32.totalorder %s417, %s419
    %p423 = scmp.eq.s32.totalorder %s67, 0
    %p424 = por %p422, %p423
    %p425 = scmp.ne.s32.totalorder %s417, %s419
    %p426 = scmp.eq.s32.totalorder %s72, 3
    %p427 = por %p425, %p426
    %p428 = scmp.ne.s32.totalorder %s419, %s420
    %p429 = scmp.eq.s32.totalorder %s72, 0
    %p430 = por %p428, %p429
    %p431 = scmp.ne.s32.totalorder %s419, %s420
    %p432 = scmp.eq.s32.totalorder %s73, 3
    %p433 = por %p431, %p432
    %p435 = scmp.ne.s32.totalorder %s420, %s434
    %p436 = scmp.eq.s32.totalorder %s73, 0
    %p437 = por %p435, %p436
    %s439 = sadd.s32 %s438, 1
    %p442 = scmp.eq.s32.totalorder %s67, 3
    %p443 = scmp.ne.s32.totalorder %s438, %s440
    %p444 = scmp.eq.s32.totalorder %s67, 0
    %p445 = por %p443, %p444
    %p446 = scmp.ne.s32.totalorder %s438, %s440
    %p447 = scmp.eq.s32.totalorder %s72, 3
    %p448 = por %p446, %p447
    %p449 = scmp.ne.s32.totalorder %s440, %s441
    %p450 = scmp.eq.s32.totalorder %s72, 0
    %p451 = por %p449, %p450
    %p452 = scmp.ne.s32.totalorder %s440, %s441
    %p453 = scmp.eq.s32.totalorder %s73, 3
    %p454 = por %p452, %p453
    %p456 = scmp.ne.s32.totalorder %s441, %s455
    %p457 = scmp.eq.s32.totalorder %s73, 0
    %p458 = por %p456, %p457
    %s460 = sadd.s32 %s459, 1
    %p463 = scmp.eq.s32.totalorder %s67, 3
    %p464 = scmp.ne.s32.totalorder %s459, %s461
    %p465 = scmp.eq.s32.totalorder %s67, 0
    %p466 = por %p464, %p465
    %p467 = scmp.ne.s32.totalorder %s459, %s461
    %p468 = scmp.eq.s32.totalorder %s72, 3
    %p469 = por %p467, %p468
    %p470 = scmp.ne.s32.totalorder %s461, %s462
    %p471 = scmp.eq.s32.totalorder %s72, 0
    %p472 = por %p470, %p471
    %p473 = scmp.ne.s32.totalorder %s461, %s462
    %p474 = scmp.eq.s32.totalorder %s73, 3
    %p475 = por %p473, %p474
    %p477 = scmp.ne.s32.totalorder %s462, %s476
    %p478 = scmp.eq.s32.totalorder %s73, 0
    %p479 = por %p477, %p478
    %s481 = sadd.s32 %s480, 1
    %p484 = scmp.eq.s32.totalorder %s67, 3
    %p485 = scmp.ne.s32.totalorder %s480, %s482
    %p486 = scmp.eq.s32.totalorder %s67, 0
    %p487 = por %p485, %p486
    %p488 = scmp.ne.s32.totalorder %s480, %s482
    %p489 = scmp.eq.s32.totalorder %s72, 3
    %p490 = por %p488, %p489
    %p491 = scmp.ne.s32.totalorder %s482, %s483
    %p492 = scmp.eq.s32.totalorder %s72, 0
    %p493 = por %p491, %p492
    %p494 = scmp.ne.s32.totalorder %s482, %s483
    %p495 = scmp.eq.s32.totalorder %s73, 3
    %p496 = por %p494, %p495
    %p498 = scmp.ne.s32.totalorder %s483, %s497
    %p499 = scmp.eq.s32.totalorder %s73, 0
    %p500 = por %p498, %p499
    %s502 = sadd.s32 %s501, 1
    %p505 = scmp.eq.s32.totalorder %s67, 3
    %p506 = scmp.ne.s32.totalorder %s501, %s503
    %p507 = scmp.eq.s32.totalorder %s67, 0
    %p508 = por %p506, %p507
    %p509 = scmp.ne.s32.totalorder %s501, %s503
    %p510 = scmp.eq.s32.totalorder %s72, 3
    %p511 = por %p509, %p510
    %p512 = scmp.ne.s32.totalorder %s503, %s504
    %p513 = scmp.eq.s32.totalorder %s72, 0
    %p514 = por %p512, %p513
    %p515 = scmp.ne.s32.totalorder %s503, %s504
    %p516 = scmp.eq.s32.totalorder %s73, 3
    %p517 = por %p515, %p516
    %p519 = scmp.ne.s32.totalorder %s504, %s518
    %p520 = scmp.eq.s32.totalorder %s73, 0
    %p521 = por %p519, %p520
    %s523 = sadd.s32 %s522, 1
    %p526 = scmp.eq.s32.totalorder %s67, 3
    %p527 = scmp.ne.s32.totalorder %s522, %s524
    %p528 = scmp.eq.s32.totalorder %s67, 0
    %p529 = por %p527, %p528
    %p530 = scmp.ne.s32.totalorder %s522, %s524
    %p531 = scmp.eq.s32.totalorder %s72, 3
    %p532 = por %p530, %p531
    %p533 = scmp.ne.s32.totalorder %s524, %s525
    %p534 = scmp.eq.s32.totalorder %s72, 0
    %p535 = por %p533, %p534
    %p536 = scmp.ne.s32.totalorder %s524, %s525
    %p537 = scmp.eq.s32.totalorder %s73, 3
    %p538 = por %p536, %p537
    %p540 = scmp.ne.s32.totalorder %s525, %s539
    %p541 = scmp.eq.s32.totalorder %s73, 0
    %p542 = por %p540, %p541
    %s544 = sadd.s32 %s543, 1
    %p547 = scmp.eq.s32.totalorder %s67, 3
    %p548 = scmp.ne.s32.totalorder %s543, %s545
    %p549 = scmp.eq.s32.totalorder %s67, 0
    %p550 = por %p548, %p549
    %p551 = scmp.ne.s32.totalorder %s543, %s545
    %p552 = scmp.eq.s32.totalorder %s72, 3
    %p553 = por %p551, %p552
    %p554 = scmp.ne.s32.totalorder %s545, %s546
    %p555 = scmp.eq.s32.totalorder %s72, 0
    %p556 = por %p554, %p555
    %p557 = scmp.ne.s32.totalorder %s545, %s546
    %p558 = scmp.eq.s32.totalorder %s73, 3
    %p559 = por %p557, %p558
    %p561 = scmp.ne.s32.totalorder %s546, %s560
    %p562 = scmp.eq.s32.totalorder %s73, 0
    %p563 = por %p561, %p562
    %s565 = sadd.s32 %s564, 1
    %p568 = scmp.eq.s32.totalorder %s67, 3
    %p569 = scmp.ne.s32.totalorder %s564, %s566
    %p570 = scmp.eq.s32.totalorder %s67, 0
    %p571 = por %p569, %p570
    %p572 = scmp.ne.s32.totalorder %s564, %s566
    %p573 = scmp.eq.s32.totalorder %s72, 3
    %p574 = por %p572, %p573
    %p575 = scmp.ne.s32.totalorder %s566, %s567
    %p576 = scmp.eq.s32.totalorder %s72, 0
    %p577 = por %p575, %p576
    %p578 = scmp.ne.s32.totalorder %s566, %s567
    %p579 = scmp.eq.s32.totalorder %s73, 3
    %p580 = por %p578, %p579
    %p582 = scmp.ne.s32.totalorder %s567, %s581
    %p583 = scmp.eq.s32.totalorder %s73, 0
    %p584 = por %p582, %p583
    %s586 = sadd.s32 %s585, 1
    %p589 = scmp.eq.s32.totalorder %s67, 3
    %p590 = scmp.ne.s32.totalorder %s585, %s587
    %p591 = scmp.eq.s32.totalorder %s67, 0
    %p592 = por %p590, %p591
    %p593 = scmp.ne.s32.totalorder %s585, %s587
    %p594 = scmp.eq.s32.totalorder %s72, 3
    %p595 = por %p593, %p594
    %p596 = scmp.ne.s32.totalorder %s587, %s588
    %p597 = scmp.eq.s32.totalorder %s72, 0
    %p598 = por %p596, %p597
    %p599 = scmp.ne.s32.totalorder %s587, %s588
    %p600 = scmp.eq.s32.totalorder %s73, 3
    %p601 = por %p599, %p600
    %p603 = scmp.ne.s32.totalorder %s588, %s602
    %p604 = scmp.eq.s32.totalorder %s73, 0
    %p605 = por %p603, %p604
    %s607 = sadd.s32 %s606, 1
    %p610 = scmp.eq.s32.totalorder %s67, 3
    %p611 = scmp.ne.s32.totalorder %s606, %s608
    %p612 = scmp.eq.s32.totalorder %s67, 0
    %p613 = por %p611, %p612
    %p614 = scmp.ne.s32.totalorder %s606, %s608
    %p615 = scmp.eq.s32.totalorder %s72, 3
    %p616 = por %p614, %p615
    %p617 = scmp.ne.s32.totalorder %s608, %s609
    %p618 = scmp.eq.s32.totalorder %s72, 0
    %p619 = por %p617, %p618
    %p620 = scmp.ne.s32.totalorder %s608, %s609
    %p621 = scmp.eq.s32.totalorder %s73, 3
    %p622 = por %p620, %p621
    %p624 = scmp.ne.s32.totalorder %s609, %s623
    %p625 = scmp.eq.s32.totalorder %s73, 0
    %p626 = por %p624, %p625
    %s628 = sadd.s32 %s627, 1
    %p631 = scmp.eq.s32.totalorder %s67, 3
    %p632 = scmp.ne.s32.totalorder %s627, %s629
    %p633 = scmp.eq.s32.totalorder %s67, 0
    %p634 = por %p632, %p633
    %p635 = scmp.ne.s32.totalorder %s627, %s629
    %p636 = scmp.eq.s32.totalorder %s72, 3
    %p637 = por %p635, %p636
    %p638 = scmp.ne.s32.totalorder %s629, %s630
    %p639 = scmp.eq.s32.totalorder %s72, 0
    %p640 = por %p638, %p639
    %p641 = scmp.ne.s32.totalorder %s629, %s630
    %p642 = scmp.eq.s32.totalorder %s73, 3
    %p643 = por %p641, %p642
    %p645 = scmp.ne.s32.totalorder %s630, %s644
    %p646 = scmp.eq.s32.totalorder %s73, 0
    %p647 = por %p645, %p646
    %s649 = sadd.s32 %s648, 1
    %p652 = scmp.eq.s32.totalorder %s67, 3
    %p653 = scmp.ne.s32.totalorder %s648, %s650
    %p654 = scmp.eq.s32.totalorder %s67, 0
    %p655 = por %p653, %p654
    %p656 = scmp.ne.s32.totalorder %s648, %s650
    %p657 = scmp.eq.s32.totalorder %s72, 3
    %p658 = por %p656, %p657
    %p659 = scmp.ne.s32.totalorder %s650, %s651
    %p660 = scmp.eq.s32.totalorder %s72, 0
    %p661 = por %p659, %p660
    %p662 = scmp.ne.s32.totalorder %s650, %s651
    %p663 = scmp.eq.s32.totalorder %s73, 3
    %p664 = por %p662, %p663
    %p666 = scmp.ne.s32.totalorder %s651, %s665
    %p667 = scmp.eq.s32.totalorder %s73, 0
    %p668 = por %p666, %p667
    %s670 = sadd.s32 %s669, 1
    %p673 = scmp.eq.s32.totalorder %s67, 3
    %p674 = scmp.ne.s32.totalorder %s669, %s671
    %p675 = scmp.eq.s32.totalorder %s67, 0
    %p676 = por %p674, %p675
    %p677 = scmp.ne.s32.totalorder %s669, %s671
    %p678 = scmp.eq.s32.totalorder %s72, 3
    %p679 = por %p677, %p678
    %p680 = scmp.ne.s32.totalorder %s671, %s672
    %p681 = scmp.eq.s32.totalorder %s72, 0
    %p682 = por %p680, %p681
    %p683 = scmp.ne.s32.totalorder %s671, %s672
    %p684 = scmp.eq.s32.totalorder %s73, 3
    %p685 = por %p683, %p684
    %p687 = scmp.ne.s32.totalorder %s672, %s686
    %p688 = scmp.eq.s32.totalorder %s73, 0
    %p689 = por %p687, %p688
    %s691 = sadd.s32 %s690, 1
    %p694 = scmp.eq.s32.totalorder %s67, 3
    %p695 = scmp.ne.s32.totalorder %s690, %s692
    %p696 = scmp.eq.s32.totalorder %s67, 0
    %p697 = por %p695, %p696
    %p698 = scmp.ne.s32.totalorder %s690, %s692
    %p699 = scmp.eq.s32.totalorder %s72, 3
    %p700 = por %p698, %p699
    %p701 = scmp.ne.s32.totalorder %s692, %s693
    %p702 = scmp.eq.s32.totalorder %s72, 0
    %p703 = por %p701, %p702
    %p704 = scmp.ne.s32.totalorder %s692, %s693
    %p705 = scmp.eq.s32.totalorder %s73, 3
    %p706 = por %p704, %p705
    %p708 = scmp.ne.s32.totalorder %s693, %s707
    %p709 = scmp.eq.s32.totalorder %s73, 0
    %p710 = por %p708, %p709
    %s712 = sadd.s32 %s711, 1
    %p715 = scmp.eq.s32.totalorder %s67, 3
    %p716 = scmp.ne.s32.totalorder %s711, %s713
    %p717 = scmp.eq.s32.totalorder %s67, 0
    %p718 = por %p716, %p717
    %p719 = scmp.ne.s32.totalorder %s711, %s713
    %p720 = scmp.eq.s32.totalorder %s72, 3
    %p721 = por %p719, %p720
    %p722 = scmp.ne.s32.totalorder %s713, %s714
    %p723 = scmp.eq.s32.totalorder %s72, 0
    %p724 = por %p722, %p723
    %p725 = scmp.ne.s32.totalorder %s713, %s714
    %p726 = scmp.eq.s32.totalorder %s73, 3
    %p727 = por %p725, %p726
    %p729 = scmp.ne.s32.totalorder %s714, %s728
    %p730 = scmp.eq.s32.totalorder %s73, 0
    %p731 = por %p729, %p730
    %s733 = sadd.s32 %s732, 1
    %p736 = scmp.eq.s32.totalorder %s67, 3
    %p737 = scmp.ne.s32.totalorder %s732, %s734
    %p738 = scmp.eq.s32.totalorder %s67, 0
    %p739 = por %p737, %p738
    %p740 = scmp.ne.s32.totalorder %s732, %s734
    %p741 = scmp.eq.s32.totalorder %s72, 3
    %p742 = por %p740, %p741
    %p743 = scmp.ne.s32.totalorder %s734, %s735
    %p744 = scmp.eq.s32.totalorder %s72, 0
    %p745 = por %p743, %p744
    %p746 = scmp.ne.s32.totalorder %s734, %s735
    %p747 = scmp.eq.s32.totalorder %s73, 3
    %p748 = por %p746, %p747
    %p750 = scmp.ne.s32.totalorder %s735, %s749
    %p751 = scmp.eq.s32.totalorder %s73, 0
    %p752 = por %p750, %p751
    %s753 = ssub.s32 %s74, %s86
    %s754 = ssub.s32 %s75, %s82
    %s755 = sor.u32 %s753, %s754
    %p756 = scmp.eq.s32.totalorder %s755, 0
    %s758 = sadd.s32 %s757, 1
    %s759 = scalar_select %p756, %s757, %s758
    %p762 = pneg %p756
    %p763 = scmp.eq.s32.totalorder %s67, 3
    %p764 = por %p762, %p763
    %p765 = scmp.ne.s32.totalorder %s757, %s760
    %p766 = scmp.eq.s32.totalorder %s67, 0
    %p767 = por %p765, %p766
    %p768 = scmp.ne.s32.totalorder %s757, %s760
    %p769 = scmp.eq.s32.totalorder %s72, 3
    %p770 = por %p768, %p769
    %p771 = scmp.ne.s32.totalorder %s760, %s761
    %p772 = scmp.eq.s32.totalorder %s72, 0
    %p773 = por %p771, %p772
    %p774 = scmp.ne.s32.totalorder %s760, %s761
    %p775 = scmp.eq.s32.totalorder %s73, 3
    %p776 = por %p774, %p775
    %p778 = scmp.ne.s32.totalorder %s761, %s777
    %p779 = scmp.eq.s32.totalorder %s73, 0
    %p780 = por %p778, %p779
    %p781 = scmp.le.s32.totalorder 1, %s67
    %p782 = scmp.lt.s32.totalorder %s67, 5
    %p783 = pnand %p781, %p782
    %p784 = pneg %p783
    // Predicated region
    $region9: #{tpu_custom_call.1} parent=5 // pred_check
      _
    $region10: #{tpu_custom_call.1} parent=5 // pred_check_branch
      %786 = sbr.rel (%p783) target = $region12
    $region11: #{tpu_custom_call.1} parent=5 // pred_region
      %s787 = ssub.s32 %s67, 1
      // Predicated region
      $region13: #{tpu_custom_call.1} parent=11 // pred_check
        %p788 = pneg %p262
      $region14: #{tpu_custom_call.1} parent=11 // pred_check_branch
        %790 = sbr.rel (%p788) target = $region16
      $region15: #{tpu_custom_call.1} parent=11 // pred_region
        _
      $region16: #{tpu_custom_call.1} parent=11 // pred_fallthru
        _
      // Predicated region
      $region17: #{tpu_custom_call.1} parent=11 // pred_check
        %p791 = pneg %p283
      $region18: #{tpu_custom_call.1} parent=11 // pred_check_branch
        %793 = sbr.rel (%p791) target = $region20
      $region19: #{tpu_custom_call.1} parent=11 // pred_region
        _
      $region20: #{tpu_custom_call.1} parent=11 // pred_fallthru
        _
      // Predicated region
      $region21: #{tpu_custom_call.1} parent=11 // pred_check
        %p794 = pneg %p304
      $region22: #{tpu_custom_call.1} parent=11 // pred_check_branch
        %796 = sbr.rel (%p794) target = $region24
      $region23: #{tpu_custom_call.1} parent=11 // pred_region
        _
      $region24: #{tpu_custom_call.1} parent=11 // pred_fallthru
        _
      // Predicated region
      $region25: #{tpu_custom_call.1} parent=11 // pred_check
        %p797 = pneg %p325
      $region26: #{tpu_custom_call.1} parent=11 // pred_check_branch
        %799 = sbr.rel (%p797) target = $region28
      $region27: #{tpu_custom_call.1} parent=11 // pred_region
        _
      $region28: #{tpu_custom_call.1} parent=11 // pred_fallthru
        _
      // Predicated region
      $region29: #{tpu_custom_call.1} parent=11 // pred_check
        %p800 = pneg %p346
      $region30: #{tpu_custom_call.1} parent=11 // pred_check_branch
        %802 = sbr.rel (%p800) target = $region32
      $region31: #{tpu_custom_call.1} parent=11 // pred_region
        _
      $region32: #{tpu_custom_call.1} parent=11 // pred_fallthru
        _
      // Predicated region
      $region33: #{tpu_custom_call.1} parent=11 // pred_check
        %p803 = pneg %p367
      $region34: #{tpu_custom_call.1} parent=11 // pred_check_branch
        %805 = sbr.rel (%p803) target = $region36
      $region35: #{tpu_custom_call.1} parent=11 // pred_region
        _
      $region36: #{tpu_custom_call.1} parent=11 // pred_fallthru
        _
      // Predicated region
      $region37: #{tpu_custom_call.1} parent=11 // pred_check
        %p806 = pneg %p388
      $region38: #{tpu_custom_call.1} parent=11 // pred_check_branch
        %808 = sbr.rel (%p806) target = $region40
      $region39: #{tpu_custom_call.1} parent=11 // pred_region
        _
      $region40: #{tpu_custom_call.1} parent=11 // pred_fallthru
        _
      // Predicated region
      $region41: #{tpu_custom_call.1} parent=11 // pred_check
        %p809 = pneg %p409
      $region42: #{tpu_custom_call.1} parent=11 // pred_check_branch
        %811 = sbr.rel (%p809) target = $region44
      $region43: #{tpu_custom_call.1} parent=11 // pred_region
        _
      $region44: #{tpu_custom_call.1} parent=11 // pred_fallthru
        _
      // Predicated region
      $region45: #{tpu_custom_call.1} parent=11 // pred_check
        %p812 = pneg %p430
      $region46: #{tpu_custom_call.1} parent=11 // pred_check_branch
        %814 = sbr.rel (%p812) target = $region48
      $region47: #{tpu_custom_call.1} parent=11 // pred_region
        _
      $region48: #{tpu_custom_call.1} parent=11 // pred_fallthru
        _
      // Predicated region
      $region49: #{tpu_custom_call.1} parent=11 // pred_check
        %p815 = pneg %p451
      $region50: #{tpu_custom_call.1} parent=11 // pred_check_branch
        %817 = sbr.rel (%p815) target = $region52
      $region51: #{tpu_custom_call.1} parent=11 // pred_region
        _
      $region52: #{tpu_custom_call.1} parent=11 // pred_fallthru
        _
      // Predicated region
      $region53: #{tpu_custom_call.1} parent=11 // pred_check
        %p818 = pneg %p472
      $region54: #{tpu_custom_call.1} parent=11 // pred_check_branch
        %820 = sbr.rel (%p818) target = $region56
      $region55: #{tpu_custom_call.1} parent=11 // pred_region
        _
      $region56: #{tpu_custom_call.1} parent=11 // pred_fallthru
        _
      // Predicated region
      $region57: #{tpu_custom_call.1} parent=11 // pred_check
        %p821 = pneg %p493
      $region58: #{tpu_custom_call.1} parent=11 // pred_check_branch
        %823 = sbr.rel (%p821) target = $region60
      $region59: #{tpu_custom_call.1} parent=11 // pred_region
        _
      $region60: #{tpu_custom_call.1} parent=11 // pred_fallthru
        _
      // Predicated region
      $region61: #{tpu_custom_call.1} parent=11 // pred_check
        %p824 = pneg %p514
      $region62: #{tpu_custom_call.1} parent=11 // pred_check_branch
        %826 = sbr.rel (%p824) target = $region64
      $region63: #{tpu_custom_call.1} parent=11 // pred_region
        _
      $region64: #{tpu_custom_call.1} parent=11 // pred_fallthru
        _
      // Predicated region
      $region65: #{tpu_custom_call.1} parent=11 // pred_check
        %p827 = pneg %p535
      $region66: #{tpu_custom_call.1} parent=11 // pred_check_branch
        %829 = sbr.rel (%p827) target = $region68
      $region67: #{tpu_custom_call.1} parent=11 // pred_region
        _
      $region68: #{tpu_custom_call.1} parent=11 // pred_fallthru
        _
      // Predicated region
      $region69: #{tpu_custom_call.1} parent=11 // pred_check
        %p830 = pneg %p556
      $region70: #{tpu_custom_call.1} parent=11 // pred_check_branch
        %832 = sbr.rel (%p830) target = $region72
      $region71: #{tpu_custom_call.1} parent=11 // pred_region
        _
      $region72: #{tpu_custom_call.1} parent=11 // pred_fallthru
        _
      // Predicated region
      $region73: #{tpu_custom_call.1} parent=11 // pred_check
        %p833 = pneg %p577
      $region74: #{tpu_custom_call.1} parent=11 // pred_check_branch
        %835 = sbr.rel (%p833) target = $region76
      $region75: #{tpu_custom_call.1} parent=11 // pred_region
        _
      $region76: #{tpu_custom_call.1} parent=11 // pred_fallthru
        _
      // Predicated region
      $region77: #{tpu_custom_call.1} parent=11 // pred_check
        %p836 = pneg %p598
      $region78: #{tpu_custom_call.1} parent=11 // pred_check_branch
        %838 = sbr.rel (%p836) target = $region80
      $region79: #{tpu_custom_call.1} parent=11 // pred_region
        _
      $region80: #{tpu_custom_call.1} parent=11 // pred_fallthru
        _
      // Predicated region
      $region81: #{tpu_custom_call.1} parent=11 // pred_check
        %p839 = pneg %p619
      $region82: #{tpu_custom_call.1} parent=11 // pred_check_branch
        %841 = sbr.rel (%p839) target = $region84
      $region83: #{tpu_custom_call.1} parent=11 // pred_region
        _
      $region84: #{tpu_custom_call.1} parent=11 // pred_fallthru
        _
      // Predicated region
      $region85: #{tpu_custom_call.1} parent=11 // pred_check
        %p842 = pneg %p640
      $region86: #{tpu_custom_call.1} parent=11 // pred_check_branch
        %844 = sbr.rel (%p842) target = $region88
      $region87: #{tpu_custom_call.1} parent=11 // pred_region
        _
      $region88: #{tpu_custom_call.1} parent=11 // pred_fallthru
        _
      // Predicated region
      $region89: #{tpu_custom_call.1} parent=11 // pred_check
        %p845 = pneg %p661
      $region90: #{tpu_custom_call.1} parent=11 // pred_check_branch
        %847 = sbr.rel (%p845) target = $region92
      $region91: #{tpu_custom_call.1} parent=11 // pred_region
        _
      $region92: #{tpu_custom_call.1} parent=11 // pred_fallthru
        _
      // Predicated region
      $region93: #{tpu_custom_call.1} parent=11 // pred_check
        %p848 = pneg %p682
      $region94: #{tpu_custom_call.1} parent=11 // pred_check_branch
        %850 = sbr.rel (%p848) target = $region96
      $region95: #{tpu_custom_call.1} parent=11 // pred_region
        _
      $region96: #{tpu_custom_call.1} parent=11 // pred_fallthru
        _
      // Predicated region
      $region97: #{tpu_custom_call.1} parent=11 // pred_check
        %p851 = pneg %p703
      $region98: #{tpu_custom_call.1} parent=11 // pred_check_branch
        %853 = sbr.rel (%p851) target = $region100
      $region99: #{tpu_custom_call.1} parent=11 // pred_region
        _
      $region100: #{tpu_custom_call.1} parent=11 // pred_fallthru
        _
      // Predicated region
      $region101: #{tpu_custom_call.1} parent=11 // pred_check
        %p854 = pneg %p724
      $region102: #{tpu_custom_call.1} parent=11 // pred_check_branch
        %856 = sbr.rel (%p854) target = $region104
      $region103: #{tpu_custom_call.1} parent=11 // pred_region
        _
      $region104: #{tpu_custom_call.1} parent=11 // pred_fallthru
        _
      // Predicated region
      $region105: #{tpu_custom_call.1} parent=11 // pred_check
        %p857 = pneg %p745
      $region106: #{tpu_custom_call.1} parent=11 // pred_check_branch
        %859 = sbr.rel (%p857) target = $region108
      $region107: #{tpu_custom_call.1} parent=11 // pred_region
        _
      $region108: #{tpu_custom_call.1} parent=11 // pred_fallthru
        _
    $region12: #{tpu_custom_call.1} parent=5 // pred_fallthru
      _
    %p860 = scmp.lt.s32.totalorder %s67, 4
    // Predicated region
    $region109: #{tpu_custom_call.1} parent=5 // pred_check
      %p861 = pneg %p860
    $region110: #{tpu_custom_call.1} parent=5 // pred_check_branch
      %863 = sbr.rel (%p861) target = $region112
    $region111: #{tpu_custom_call.1} parent=5 // pred_region
      // Predicated region
      $region113: #{tpu_custom_call.1} parent=111 // pred_check
        %p864 = pneg %p99
      $region114: #{tpu_custom_call.1} parent=111 // pred_check_branch
        %866 = sbr.rel (%p864) target = $region116
      $region115: #{tpu_custom_call.1} parent=111 // pred_region
        %p867 = scmp.lt.s32.totalorder %s74, 1
        %s868 = scalar_select %p867, %s74, 1
        %s869 = smul.addr %s868, 8
        %s870 = smul.addr %s869, 8
        %s871 = scalar_lea.vmem %s1, %s870
      $region116: #{tpu_custom_call.1} parent=111 // pred_fallthru
        _
      // Predicated region
      $region117: #{tpu_custom_call.1} parent=111 // pred_check
        %p872 = pneg %p127
      $region118: #{tpu_custom_call.1} parent=111 // pred_check_branch
        %874 = sbr.rel (%p872) target = $region120
      $region119: #{tpu_custom_call.1} parent=111 // pred_region
        %s875 = smul.u32 4, %s75
        %p876 = scmp.lt.s32.totalorder %s74, 1
        %s877 = scalar_select %p876, %s74, 1
        %p878 = scmp.lt.s32.totalorder %s875, 7
        %s879 = scalar_select %p878, %s875, 7
        %s880 = smul.addr %s877, 8
        %s881 = sadd.s32 %s879, %s880
        %s882 = smul.addr %s881, 8
        %s883 = scalar_lea.vmem %s3, %s882
        %s884 = smul.u32 4, %s75
      $region120: #{tpu_custom_call.1} parent=111 // pred_fallthru
        _
      // Predicated region
      $region121: #{tpu_custom_call.1} parent=111 // pred_check
        %p885 = pneg %p155
      $region122: #{tpu_custom_call.1} parent=111 // pred_check_branch
        %887 = sbr.rel (%p885) target = $region124
      $region123: #{tpu_custom_call.1} parent=111 // pred_region
        %p888 = scmp.lt.s32.totalorder %s74, 1
        %s889 = scalar_select %p888, %s74, 1
        %p890 = scmp.lt.s32.totalorder %s75, 1
        %s891 = scalar_select %p890, %s75, 1
        %s892 = smul.addr %s889, 2
        %s893 = sadd.s32 %s891, %s892
        %s894 = smul.addr %s893, 8
        %s895 = scalar_lea.vmem %s5, %s894
      $region124: #{tpu_custom_call.1} parent=111 // pred_fallthru
        _
      // Predicated region
      $region125: #{tpu_custom_call.1} parent=111 // pred_check
        %p896 = pneg %p181
      $region126: #{tpu_custom_call.1} parent=111 // pred_check_branch
        %898 = sbr.rel (%p896) target = $region128
      $region127: #{tpu_custom_call.1} parent=111 // pred_region
        %p899 = scmp.lt.s32.totalorder %s74, 1
        %s900 = scalar_select %p899, %s74, 1
        %s901 = smul.addr %s900, 4
        %s902 = smul.addr %s901, 8
        %s903 = scalar_lea.vmem %s7, %s902
      $region128: #{tpu_custom_call.1} parent=111 // pred_fallthru
        _
      // Predicated region
      $region129: #{tpu_custom_call.1} parent=111 // pred_check
        %p904 = pneg %p207
      $region130: #{tpu_custom_call.1} parent=111 // pred_check_branch
        %906 = sbr.rel (%p904) target = $region132
      $region131: #{tpu_custom_call.1} parent=111 // pred_region
        %p907 = scmp.lt.s32.totalorder %s74, 1
        %s908 = scalar_select %p907, %s74, 1
        %s909 = smul.addr %s908, 4
        %s910 = smul.addr %s909, 8
        %s911 = scalar_lea.vmem %s9, %s910
      $region132: #{tpu_custom_call.1} parent=111 // pred_fallthru
        _
      // Predicated region
      $region133: #{tpu_custom_call.1} parent=111 // pred_check
        %p912 = pneg %p235
      $region134: #{tpu_custom_call.1} parent=111 // pred_check_branch
        %914 = sbr.rel (%p912) target = $region136
      $region135: #{tpu_custom_call.1} parent=111 // pred_region
        %p915 = scmp.lt.s32.totalorder %s74, 1
        %s916 = scalar_select %p915, %s74, 1
        %p917 = scmp.lt.s32.totalorder %s75, 1
        %s918 = scalar_select %p917, %s75, 1
        %s919 = smul.addr %s916, 2
        %s920 = sadd.s32 %s918, %s919
        %s921 = smul.addr %s920, 8
        %s922 = scalar_lea.vmem %s11, %s921
      $region136: #{tpu_custom_call.1} parent=111 // pred_fallthru
        _
    $region112: #{tpu_custom_call.1} parent=5 // pred_fallthru
      _
    %p923 = scmp.le.s32.totalorder 1, %s67
    %p924 = scmp.lt.s32.totalorder %s67, 5
    %p925 = pnand %p923, %p924
    %p926 = pneg %p925
    // Predicated region
    $region137: #{tpu_custom_call.1} parent=5 // pred_check
      _
    $region138: #{tpu_custom_call.1} parent=5 // pred_check_branch
      %928 = sbr.rel (%p925) target = $region140
    $region139: #{tpu_custom_call.1} parent=5 // pred_region
      %s929 = ssub.s32 %s67, 1
      %p930 = scmp.lt.s32.totalorder %s76, 1
      %s931 = scalar_select %p930, %s76, 1
      %s932 = smul.addr %s931, 8
      %s933 = smul.addr %s932, 8
      %s934 = scalar_lea.vmem %s1, %s933
      %p935 = pneg %p105
      %p936 = pneg %p102
      %s937 = smul.u32 4, %s77
      %p938 = scmp.lt.s32.totalorder %s76, 1
      %s939 = scalar_select %p938, %s76, 1
      %p940 = scmp.lt.s32.totalorder %s937, 7
      %s941 = scalar_select %p940, %s937, 7
      %s942 = smul.addr %s939, 8
      %s943 = sadd.s32 %s941, %s942
      %s944 = smul.addr %s943, 8
      %s945 = scalar_lea.vmem %s3, %s944
      %p946 = pneg %p133
      %p947 = pneg %p130
      %p948 = scmp.lt.s32.totalorder %s76, 1
      %s949 = scalar_select %p948, %s76, 1
      %p950 = scmp.lt.s32.totalorder %s77, 1
      %s951 = scalar_select %p950, %s77, 1
      %s952 = smul.addr %s949, 2
      %s953 = sadd.s32 %s951, %s952
      %s954 = smul.addr %s953, 8
      %s955 = scalar_lea.vmem %s5, %s954
      %p956 = pneg %p161
      %p957 = pneg %p158
      %p958 = scmp.lt.s32.totalorder %s76, 1
      %s959 = scalar_select %p958, %s76, 1
      %s960 = smul.addr %s959, 4
      %s961 = smul.addr %s960, 8
      %s962 = scalar_lea.vmem %s7, %s961
      %p963 = pneg %p187
      %p964 = pneg %p184
      %p965 = scmp.lt.s32.totalorder %s76, 1
      %s966 = scalar_select %p965, %s76, 1
      %s967 = smul.addr %s966, 4
      %s968 = smul.addr %s967, 8
      %s969 = scalar_lea.vmem %s9, %s968
      %p970 = pneg %p213
      %p971 = pneg %p210
      %p972 = scmp.lt.s32.totalorder %s76, 1
      %s973 = scalar_select %p972, %s76, 1
      %p974 = scmp.lt.s32.totalorder %s77, 1
      %s975 = scalar_select %p974, %s77, 1
      %s976 = smul.addr %s973, 2
      %s977 = sadd.s32 %s975, %s976
      %s978 = smul.addr %s977, 8
      %s979 = scalar_lea.vmem %s11, %s978
      %p980 = pneg %p241
      %p981 = pneg %p238
      %p982 = pneg %p262
      %p983 = pneg %p259
      %p984 = pneg %p283
      %p985 = pneg %p280
      %p986 = pneg %p304
      %p987 = pneg %p301
      %p988 = pneg %p325
      %p989 = pneg %p322
      %p990 = pneg %p346
      %p991 = pneg %p343
      %p992 = pneg %p367
      %p993 = pneg %p364
      %p994 = pneg %p388
      %p995 = pneg %p385
      %p996 = pneg %p409
      %p997 = pneg %p406
      %p998 = pneg %p430
      %p999 = pneg %p427
      %p1000 = pneg %p451
      %p1001 = pneg %p448
      %p1002 = pneg %p472
      %p1003 = pneg %p469
      %p1004 = pneg %p493
      %p1005 = pneg %p490
      %p1006 = pneg %p514
      %p1007 = pneg %p511
      %p1008 = pneg %p535
      %p1009 = pneg %p532
      %p1010 = pneg %p556
      %p1011 = pneg %p553
      %p1012 = pneg %p577
      %p1013 = pneg %p574
      %p1014 = pneg %p598
      %p1015 = pneg %p595
      %p1016 = pneg %p619
      %p1017 = pneg %p616
      %p1018 = pneg %p640
      %p1019 = pneg %p637
      %p1020 = pneg %p661
      %p1021 = pneg %p658
      %p1022 = pneg %p682
      %p1023 = pneg %p679
      %p1024 = pneg %p703
      %p1025 = pneg %p700
      %p1026 = pneg %p724
      %p1027 = pneg %p721
      %p1028 = pneg %p745
      %p1029 = pneg %p742
      %p1030 = pneg %p773
      %p1031 = pneg %p770
      %s1032 = smul.u32 4, %s77
      %p1033 = scmp.lt.s32.totalorder %s76, 1
      %s1034 = scalar_select %p1033, %s76, 1
      %p1035 = scmp.lt.s32.totalorder %s1032, 7
      %s1036 = scalar_select %p1035, %s1032, 7
      %s1037 = smul.addr %s1034, 8
      %s1038 = sadd.s32 %s1036, %s1037
      %s1039 = smul.addr %s1038, 8
      %s1040 = scalar_lea.vmem %s61, %s1039
      %p1041 = scmp.lt.s32.totalorder %s76, 1
      %s1042 = scalar_select %p1041, %s76, 1
      %s1043 = smul.addr %s1042, 8
      %s1044 = smul.addr %s1043, 8
      %s1045 = scalar_lea.vmem %s1, %s1044
      %s1046 = smul.u32 4, %s77
      %p1047 = scmp.lt.s32.totalorder %s76, 1
      %s1048 = scalar_select %p1047, %s76, 1
      %p1049 = scmp.lt.s32.totalorder %s1046, 7
      %s1050 = scalar_select %p1049, %s1046, 7
      %s1051 = smul.addr %s1048, 8
      %s1052 = sadd.s32 %s1050, %s1051
      %s1053 = smul.addr %s1052, 8
      %s1054 = scalar_lea.vmem %s3, %s1053
      %s1055 = smul.u32 4, %s77
      %p1056 = scmp.lt.s32.totalorder %s76, 1
      %s1057 = scalar_select %p1056, %s76, 1
      %p1058 = scmp.lt.s32.totalorder %s77, 1
      %s1059 = scalar_select %p1058, %s77, 1
      %s1060 = smul.addr %s1057, 2
      %s1061 = sadd.s32 %s1059, %s1060
      %s1062 = smul.addr %s1061, 8
      %s1063 = scalar_lea.vmem %s5, %s1062
      %p1064 = scmp.lt.s32.totalorder %s76, 1
      %s1065 = scalar_select %p1064, %s76, 1
      %s1066 = smul.addr %s1065, 4
      %s1067 = smul.addr %s1066, 8
      %s1068 = scalar_lea.vmem %s7, %s1067
      %p1069 = scmp.lt.s32.totalorder %s76, 1
      %s1070 = scalar_select %p1069, %s76, 1
      %s1071 = smul.addr %s1070, 4
      %s1072 = smul.addr %s1071, 8
      %s1073 = scalar_lea.vmem %s9, %s1072
      %p1074 = scmp.lt.s32.totalorder %s76, 1
      %s1075 = scalar_select %p1074, %s76, 1
      %p1076 = scmp.lt.s32.totalorder %s77, 1
      %s1077 = scalar_select %p1076, %s77, 1
      %s1078 = smul.addr %s1075, 2
      %s1079 = sadd.s32 %s1077, %s1078
      %s1080 = smul.addr %s1079, 8
      %s1081 = scalar_lea.vmem %s11, %s1080
      %s1082 = smul.u32 4, %s77
      %p1083 = scmp.lt.s32.totalorder %s76, 1
      %s1084 = scalar_select %p1083, %s76, 1
      %p1085 = scmp.lt.s32.totalorder %s1082, 7
      %s1086 = scalar_select %p1085, %s1082, 7
      %s1087 = smul.addr %s1084, 8
      %s1088 = sadd.s32 %s1086, %s1087
      %s1089 = smul.addr %s1088, 8
      %s1090 = scalar_lea.vmem %s61, %s1089
      %s1091 = smul.u32 4, %s77
      %v1093 = vld [vmem:[%s1054] sm:$0xff]
      %v1094 = vld [vmem:[%s1054 + $0x8] sm:$0xff]
      %v1095 = vld [vmem:[%s1054 + $0x10] sm:$0xff]
      %v1096 = vld [vmem:[%s1054 + $0x18] sm:$0xff]
      %v1097 = vpack.c.bf16 %v1094, %v1093
      %v1098 = vpack.c.bf16 %v1096, %v1095
      %v1099 = vld [vmem:[%s1045] sm:$0xff]
      %v1100 = vld [vmem:[%s1045 + $0x8] sm:$0xff]
      %v1101 = vld [vmem:[%s1045 + $0x10] sm:$0xff]
      %v1102 = vld [vmem:[%s1045 + $0x18] sm:$0xff]
      %v1103 = vld [vmem:[%s1045 + $0x20] sm:$0xff]
      %v1104 = vld [vmem:[%s1045 + $0x28] sm:$0xff]
      %v1105 = vld [vmem:[%s1045 + $0x30] sm:$0xff]
      %v1106 = vld [vmem:[%s1045 + $0x38] sm:$0xff]
      %v1107 = vpack.c.bf16 %v1100, %v1099
      %v1108 = vpack.c.bf16 %v1102, %v1101
      %v1109 = vpack.c.bf16 %v1104, %v1103
      %v1110 = vpack.c.bf16 %v1106, %v1105
      %v1111 = vld [vmem:[%s13] sm:$0xf]
      %v1112 = vld [vmem:[%s13 + $0x4] sm:$0xf]
      %v1113 = vld [vmem:[%s13 + $0x8] sm:$0xf]
      %v1114 = vld [vmem:[%s13 + $0xc] sm:$0xf]
      %v1115 = vld [vmem:[%s15] sm:$0x1]
      %v1117 = vlaneseq
      %v1118 = vshrl.u32 %v1117, 7
      %v1119 = vsub.s32 0, %v1118
      %v1120 = vrot.slane %v1115, %v1119
      %v1126 = vunpack.c.l.b16 %v1111
      %v1127 = vunpack.c.l.b16 %v1112
      %v1128 = vunpack.c.l.b16 %v1113
      %v1129 = vunpack.c.l.b16 %v1114
      %v1130 = vpack.c.b16 %v1127, %v1126
      %v1131 = vpack.c.b16 %v1129, %v1128
      %vm1134 = vcmask 261120
      %v1136 = vsel %vm1134, %v1097, 0
      %v1139 = vsel %vm1134, %v1098, 0
      %1141 = vmatprep.subr.bf16.mxu0 0
      %1142 = vmatpush1.bf16.msra.mxu0 %v1130
      %1143 = vmatprep.subr.bf16.mxu0 0
      %1144 = vmatpush1.bf16.msra.mxu0 %v1131
      %1145 = vmatprep.subr.bf16.mxu0 0
      %1146 = vmatpush1.bf16.msra.mxu0 0
      %1147 = vmatprep.subr.bf16.mxu0 0
      %1148 = vmatpush1.bf16.msra.mxu0 0
      %1149 = vmatprep.subr.bf16.mxu0 0
      %1150 = vmatpush1.bf16.msra.mxu0 0
      %1151 = vmatprep.subr.bf16.mxu0 0
      %1152 = vmatpush1.bf16.msra.mxu0 0
      %1153 = vmatprep.subr.bf16.mxu0 0
      %1154 = vmatpush1.bf16.msra.mxu0 0
      %1155 = vmatprep.subr.bf16.mxu0 0
      %1156 = vmatpush1.bf16.msra.mxu0 0
      %1157 = vmatprep.subr.bf16.mxu0 0
      %1158 = vmatpush1.bf16.msra.mxu0 0
      %1159 = vmatprep.subr.bf16.mxu0 0
      %1160 = vmatpush1.bf16.msra.mxu0 0
      %1161 = vmatprep.subr.bf16.mxu0 0
      %1162 = vmatpush1.bf16.msra.mxu0 0
      %1163 = vmatprep.subr.bf16.mxu0 0
      %1164 = vmatpush1.bf16.msra.mxu0 0
      %1165 = vmatprep.subr.bf16.mxu0 0
      %1166 = vmatpush1.bf16.msra.mxu0 0
      %1167 = vmatprep.subr.bf16.mxu0 0
      %1168 = vmatpush1.bf16.msra.mxu0 0
      %1169 = vmatprep.subr.bf16.mxu0 0
      %1170 = vmatpush1.bf16.msra.mxu0 0
      %1171 = vmatprep.subr.bf16.mxu0 0
      %1172 = vmatpush1.bf16.msra.mxu0 0
      %1173 = vmatprep.mubr.bf16.mxu0 0
      %1174 = vmatmul.mubr.bf16.gmra.mrb[0].mxu0 %v1136
      %v1175 = vpop.f32.mrb[0].mxu0
      %v1176 = vadd.f32 %v1120, %v1175
      %v1177 = vpop.f32.mrb[0].mxu0
      %v1178 = vpop.f32.mrb[0].mxu0
      %v1179 = vadd.f32 %v1120, %v1178
      %v1180 = vpop.f32.mrb[0].mxu0
      %1181 = vmatprep.mubr.bf16.mxu0 0
      %1182 = vmatmul.mubr.bf16.gmra.mrb[0].mxu0 %v1139
      %v1183 = vpop.f32.mrb[0].mxu0
      %v1184 = vadd.f32 %v1120, %v1183
      %v1185 = vpop.f32.mrb[0].mxu0
      %v1186 = vpop.f32.mrb[0].mxu0
      %v1187 = vadd.f32 %v1120, %v1186
      %v1188 = vpop.f32.mrb[0].mxu0
      %1189 = vdwg.mxu0
      %v1190 = vld [vmem:[%s17] sm:$0xf]
      %v1191 = vld [vmem:[%s17 + $0x4] sm:$0xf]
      %v1192 = vld [vmem:[%s17 + $0x8] sm:$0xf]
      %v1193 = vld [vmem:[%s17 + $0xc] sm:$0xf]
      %v1194 = vld [vmem:[%s19] sm:$0x1]
      %v1196 = vlaneseq
      %v1197 = vshrl.u32 %v1196, 7
      %v1198 = vsub.s32 0, %v1197
      %v1199 = vrot.slane %v1194, %v1198
      %v1205 = vunpack.c.l.b16 %v1190
      %v1206 = vunpack.c.l.b16 %v1191
      %v1207 = vunpack.c.l.b16 %v1192
      %v1208 = vunpack.c.l.b16 %v1193
      %v1209 = vpack.c.b16 %v1206, %v1205
      %v1210 = vpack.c.b16 %v1208, %v1207
      %v1214 = vsel %vm1134, %v1107, 0
      %v1217 = vsel %vm1134, %v1108, 0
      %v1220 = vsel %vm1134, %v1109, 0
      %v1223 = vsel %vm1134, %v1110, 0
      %1225 = vmatprep.subr.bf16.mxu0 0
      %1226 = vmatpush1.bf16.msra.mxu0 %v1209
      %1227 = vmatprep.subr.bf16.mxu0 0
      %1228 = vmatpush1.bf16.msra.mxu0 %v1210
      %1229 = vmatprep.subr.bf16.mxu0 0
      %1230 = vmatpush1.bf16.msra.mxu0 0
      %1231 = vmatprep.subr.bf16.mxu0 0
      %1232 = vmatpush1.bf16.msra.mxu0 0
      %1233 = vmatprep.subr.bf16.mxu0 0
      %1234 = vmatpush1.bf16.msra.mxu0 0
      %1235 = vmatprep.subr.bf16.mxu0 0
      %1236 = vmatpush1.bf16.msra.mxu0 0
      %1237 = vmatprep.subr.bf16.mxu0 0
      %1238 = vmatpush1.bf16.msra.mxu0 0
      %1239 = vmatprep.subr.bf16.mxu0 0
      %1240 = vmatpush1.bf16.msra.mxu0 0
      %1241 = vmatprep.subr.bf16.mxu0 0
      %1242 = vmatpush1.bf16.msra.mxu0 0
      %1243 = vmatprep.subr.bf16.mxu0 0
      %1244 = vmatpush1.bf16.msra.mxu0 0
      %1245 = vmatprep.subr.bf16.mxu0 0
      %1246 = vmatpush1.bf16.msra.mxu0 0
      %1247 = vmatprep.subr.bf16.mxu0 0
      %1248 = vmatpush1.bf16.msra.mxu0 0
      %1249 = vmatprep.subr.bf16.mxu0 0
      %1250 = vmatpush1.bf16.msra.mxu0 0
      %1251 = vmatprep.subr.bf16.mxu0 0
      %1252 = vmatpush1.bf16.msra.mxu0 0
      %1253 = vmatprep.subr.bf16.mxu0 0
      %1254 = vmatpush1.bf16.msra.mxu0 0
      %1255 = vmatprep.subr.bf16.mxu0 0
      %1256 = vmatpush1.bf16.msra.mxu0 0
      %1257 = vmatprep.mubr.bf16.mxu0 0
      %1258 = vmatmul.mubr.bf16.gmra.mrb[0].mxu0 %v1214
      %v1259 = vpop.f32.mrb[0].mxu0
      %v1260 = vadd.f32 %v1199, %v1259
      %v1261 = vpop.f32.mrb[0].mxu0
      %v1262 = vpop.f32.mrb[0].mxu0
      %v1263 = vadd.f32 %v1199, %v1262
      %v1264 = vpop.f32.mrb[0].mxu0
      %1265 = vmatprep.mubr.bf16.mxu0 0
      %1266 = vmatmul.mubr.bf16.gmra.mrb[0].mxu0 %v1217
      %v1267 = vpop.f32.mrb[0].mxu0
      %v1268 = vadd.f32 %v1199, %v1267
      %v1269 = vpop.f32.mrb[0].mxu0
      %v1270 = vpop.f32.mrb[0].mxu0
      %v1271 = vadd.f32 %v1199, %v1270
      %v1272 = vpop.f32.mrb[0].mxu0
      %1273 = vmatprep.mubr.bf16.mxu0 0
      %1274 = vmatmul.mubr.bf16.gmra.mrb[0].mxu0 %v1220
      %v1275 = vpop.f32.mrb[0].mxu0
      %v1276 = vadd.f32 %v1199, %v1275
      %v1277 = vpop.f32.mrb[0].mxu0
      %v1278 = vpop.f32.mrb[0].mxu0
      %v1279 = vadd.f32 %v1199, %v1278
      %v1280 = vpop.f32.mrb[0].mxu0
      %1281 = vmatprep.mubr.bf16.mxu0 0
      %1282 = vmatmul.mubr.bf16.gmra.mrb[0].mxu0 %v1223
      %v1283 = vpop.f32.mrb[0].mxu0
      %v1284 = vadd.f32 %v1199, %v1283
      %v1285 = vpop.f32.mrb[0].mxu0
      %v1286 = vpop.f32.mrb[0].mxu0
      %v1287 = vadd.f32 %v1199, %v1286
      %v1288 = vpop.f32.mrb[0].mxu0
      %1289 = vdwg.mxu0
      %v1290 = vld [vmem:[%s1063] sm:$0xff]
      %v1291 = vunpack.c.0.s8 %v1290
      %v1292 = vunpack.c.1.s8 %v1290
      %v1293 = vunpack.c.2.s8 %v1290
      %v1294 = vunpack.c.3.s8 %v1290
      %vm1295 = vcmp.ne.s32.totalorder %v1291, 0
      %vm1296 = vcmp.ne.s32.totalorder %v1292, 0
      %vm1297 = vcmp.ne.s32.totalorder %v1293, 0
      %vm1298 = vcmp.ne.s32.totalorder %v1294, 0
      %v1299 = vld [vmem:[%s21] sm:$0xf]
      %v1300 = vld [vmem:[%s21 + $0x4] sm:$0xf]
      %v1301 = vld [vmem:[%s21 + $0x8] sm:$0xf]
      %v1302 = vld [vmem:[%s21 + $0xc] sm:$0xf]
      %v1303 = vpack.c.bf16 %v1179, %v1176
      %v1304 = vpack.c.bf16 %v1187, %v1184
      %v1305 = vpack.c.bf16 %v1263, %v1260
      %v1306 = vpack.c.bf16 %v1271, %v1268
      %v1307 = vpack.c.bf16 %v1279, %v1276
      %v1308 = vpack.c.bf16 %v1287, %v1284
      %vm1309 = vcmask 64512
      %v1311 = vsel %vm1309, %v1303, 0
      %v1314 = vsel %vm1309, %v1304, 0
      %v1317 = vsel %vm1309, %v1305, 0
      %v1320 = vsel %vm1309, %v1306, 0
      %v1323 = vsel %vm1309, %v1307, 0
      %v1326 = vsel %vm1309, %v1308, 0
      %1328 = vmatprep.subr.bf16.mxu0 0
      %1329 = vmatpush1.bf16.xpose.msra.mxu0 %v1317
      %1330 = vmatprep.subr.bf16.mxu0 0
      %1331 = vmatpush1.bf16.xpose.msra.mxu0 %v1320
      %1332 = vmatprep.subr.bf16.mxu0 0
      %1333 = vmatpush1.bf16.xpose.msra.mxu0 %v1323
      %1334 = vmatprep.subr.bf16.mxu0 0
      %1335 = vmatpush1.bf16.xpose.msra.mxu0 %v1326
      %1336 = vmatprep.subr.bf16.mxu0 0
      %1337 = vmatpush1.bf16.xpose.msra.mxu0 0
      %1338 = vmatprep.subr.bf16.mxu0 0
      %1339 = vmatpush1.bf16.xpose.msra.mxu0 0
      %1340 = vmatprep.subr.bf16.mxu0 0
      %1341 = vmatpush1.bf16.xpose.msra.mxu0 0
      %1342 = vmatprep.subr.bf16.mxu0 0
      %1343 = vmatpush1.bf16.xpose.msra.mxu0 0
      %1344 = vmatprep.subr.bf16.mxu0 0
      %1345 = vmatpush1.bf16.xpose.msra.mxu0 0
      %1346 = vmatprep.subr.bf16.mxu0 0
      %1347 = vmatpush1.bf16.xpose.msra.mxu0 0
      %1348 = vmatprep.subr.bf16.mxu0 0
      %1349 = vmatpush1.bf16.xpose.msra.mxu0 0
      %1350 = vmatprep.subr.bf16.mxu0 0
      %1351 = vmatpush1.bf16.xpose.msra.mxu0 0
      %1352 = vmatprep.subr.bf16.mxu0 0
      %1353 = vmatpush1.bf16.xpose.msra.mxu0 0
      %1354 = vmatprep.subr.bf16.mxu0 0
      %1355 = vmatpush1.bf16.xpose.msra.mxu0 0
      %1356 = vmatprep.subr.bf16.mxu0 0
      %1357 = vmatpush1.bf16.xpose.msra.mxu0 0
      %1358 = vmatprep.subr.bf16.mxu0 0
      %1359 = vmatpush1.bf16.xpose.msra.mxu0 0
      %1360 = vmatprep.mubr.bf16.mxu0 0
      %1361 = vmatmul.mubr.bf16.gmra.mrb[0].mxu0 %v1311
      %v1362 = vpop.f32.mrb[0].mxu0
      %v1363 = vadd.f32 0.0, %v1362
      %v1364 = vpop.f32.mrb[0].mxu0
      %v1365 = vpop.f32.mrb[0].mxu0
      %v1366 = vadd.f32 0.0, %v1365
      %v1367 = vpop.f32.mrb[0].mxu0
      %1368 = vmatprep.mubr.bf16.mxu0 0
      %1369 = vmatmul.mubr.bf16.gmra.mrb[0].mxu0 %v1314
      %v1370 = vpop.f32.mrb[0].mxu0
      %v1371 = vadd.f32 0.0, %v1370
      %v1372 = vpop.f32.mrb[0].mxu0
      %v1373 = vpop.f32.mrb[0].mxu0
      %v1374 = vadd.f32 0.0, %v1373
      %v1375 = vpop.f32.mrb[0].mxu0
      %1376 = vdwg.mxu0
      %v1377 = vsel %vm1295, %v1363, -1.767767e+19
      %v1378 = vsel %vm1296, %v1366, -1.767767e+19
      %v1379 = vsel %vm1297, %v1371, -1.767767e+19
      %v1380 = vsel %vm1298, %v1374, -1.767767e+19
      %vm1381 = vcmask 523264
      %v1382 = vsel %vm1381, %v1377, -inf
      %1383 = vmax.xlane.f32.xlu0 %v1382
      %v1384 = vpop.xlane.xlu0 %1383
      %v1385 = vsel %vm1381, %v1378, -inf
      %1386 = vmax.xlane.f32.xlu0 %v1385
      %v1387 = vpop.xlane.xlu0 %1386
      %v1388 = vsel %vm1381, %v1379, -inf
      %1389 = vmax.xlane.f32.xlu0 %v1388
      %v1390 = vpop.xlane.xlu0 %1389
      %v1391 = vsel %vm1381, %v1380, -inf
      %1392 = vmax.xlane.f32.xlu0 %v1391
      %v1393 = vpop.xlane.xlu0 %1392
      %v1394 = vsub.f32 %v1377, %v1384
      %v1395 = vsub.f32 %v1378, %v1387
      %v1396 = vsub.f32 %v1379, %v1390
      %v1397 = vsub.f32 %v1380, %v1393
      %v1398 = vmul.f32 %v1394, 1.442695
      %v1399 = vpow.pop %v1398
      %v1400 = vmul.f32 %v1395, 1.442695
      %v1401 = vpow.pop %v1400
      %v1402 = vmul.f32 %v1396, 1.442695
      %v1403 = vpow.pop %v1402
      %v1404 = vmul.f32 %v1397, 1.442695
      %v1405 = vpow.pop %v1404
      %v1406 = vsel %vm1381, %v1399, 0.0
      %1407 = vadd.xlane.f32.xlu0 %v1406
      %v1408 = vpop.xlane.xlu0 %1407
      %v1409 = vsel %vm1381, %v1401, 0.0
      %1410 = vadd.xlane.f32.xlu0 %v1409
      %v1411 = vpop.xlane.xlu0 %1410
      %v1412 = vsel %vm1381, %v1403, 0.0
      %1413 = vadd.xlane.f32.xlu0 %v1412
      %v1414 = vpop.xlane.xlu0 %1413
      %v1415 = vsel %vm1381, %v1405, 0.0
      %1416 = vadd.xlane.f32.xlu0 %v1415
      %v1417 = vpop.xlane.xlu0 %1416
      %v1418 = vrcp.pop %v1408
      %v1419 = vrcp.pop %v1411
      %v1420 = vrcp.pop %v1414
      %v1421 = vrcp.pop %v1417
      %v1422 = vmul.f32 %v1399, %v1418
      %v1423 = vmul.f32 %v1401, %v1419
      %v1424 = vmul.f32 %v1403, %v1420
      %v1425 = vmul.f32 %v1405, %v1421
      %v1426 = vpack.c.bf16 %v1423, %v1422
      %v1427 = vpack.c.bf16 %v1425, %v1424
      %1432 = vrot.lane.b32.xlu0 %v1305, 96
      %v1433 = vpop.permute.xlu0 %1432
      %1434 = vrot.lane.b32.xlu0 %v1306, 96
      %v1435 = vpop.permute.xlu0 %1434
      %1436 = vrot.lane.b32.xlu0 %v1307, 96
      %v1437 = vpop.permute.xlu0 %1436
      %1438 = vrot.lane.b32.xlu0 %v1308, 96
      %v1439 = vpop.permute.xlu0 %1438
      %v1445 = vsel %vm1381, %v1426, 0
      %v1448 = vsel %vm1381, %v1427, 0
      %1450 = vmatprep.subr.bf16.mxu0 0
      %1451 = vmatpush1.bf16.msra.mxu0 %v1433
      %1452 = vmatprep.subr.bf16.mxu0 0
      %1453 = vmatpush1.bf16.msra.mxu0 %v1435
      %1454 = vmatprep.subr.bf16.mxu0 0
      %1455 = vmatpush1.bf16.msra.mxu0 %v1437
      %1456 = vmatprep.subr.bf16.mxu0 0
      %1457 = vmatpush1.bf16.msra.mxu0 %v1439
      %1458 = vmatprep.subr.bf16.mxu0 0
      %1459 = vmatpush1.bf16.msra.mxu0 0
      %1460 = vmatprep.subr.bf16.mxu0 0
      %1461 = vmatpush1.bf16.msra.mxu0 0
      %1462 = vmatprep.subr.bf16.mxu0 0
      %1463 = vmatpush1.bf16.msra.mxu0 0
      %1464 = vmatprep.subr.bf16.mxu0 0
      %1465 = vmatpush1.bf16.msra.mxu0 0
      %1466 = vmatprep.subr.bf16.mxu0 0
      %1467 = vmatpush1.bf16.msra.mxu0 0
      %1468 = vmatprep.subr.bf16.mxu0 0
      %1469 = vmatpush1.bf16.msra.mxu0 0
      %1470 = vmatprep.subr.bf16.mxu0 0
      %1471 = vmatpush1.bf16.msra.mxu0 0
      %1472 = vmatprep.subr.bf16.mxu0 0
      %1473 = vmatpush1.bf16.msra.mxu0 0
      %1474 = vmatprep.subr.bf16.mxu0 0
      %1475 = vmatpush1.bf16.msra.mxu0 0
      %1476 = vmatprep.subr.bf16.mxu0 0
      %1477 = vmatpush1.bf16.msra.mxu0 0
      %1478 = vmatprep.subr.bf16.mxu0 0
      %1479 = vmatpush1.bf16.msra.mxu0 0
      %1480 = vmatprep.subr.bf16.mxu0 0
      %1481 = vmatpush1.bf16.msra.mxu0 0
      %1482 = vmatprep.mubr.bf16.mxu0 0
      %1483 = vmatmul.mubr.bf16.gmra.mrb[0].mxu0 %v1445
      %v1484 = vpop.f32.mrb[0].mxu0
      %v1485 = vadd.f32 0.0, %v1484
      %v1486 = vpop.f32.mrb[0].mxu0
      %v1487 = vpop.f32.mrb[0].mxu0
      %v1488 = vadd.f32 0.0, %v1487
      %v1489 = vpop.f32.mrb[0].mxu0
      %1490 = vmatprep.mubr.bf16.mxu0 0
      %1491 = vmatmul.mubr.bf16.gmra.mrb[0].mxu0 %v1448
      %v1492 = vpop.f32.mrb[0].mxu0
      %v1493 = vadd.f32 0.0, %v1492
      %v1494 = vpop.f32.mrb[0].mxu0
      %v1495 = vpop.f32.mrb[0].mxu0
      %v1496 = vadd.f32 0.0, %v1495
      %v1497 = vpop.f32.mrb[0].mxu0
      %1498 = vdwg.mxu0
      %1501 = vrot.lane.b32.xlu0 %v1303, 120
      %v1502 = vpop.permute.xlu0 %1501
      %1503 = vrot.lane.b32.xlu0 %v1304, 120
      %v1504 = vpop.permute.xlu0 %1503
      %1505 = vrot.lane.b32.xlu0 %v1305, 120
      %v1506 = vpop.permute.xlu0 %1505
      %1507 = vrot.lane.b32.xlu0 %v1306, 120
      %v1508 = vpop.permute.xlu0 %1507
      %1509 = vrot.lane.b32.xlu0 %v1307, 120
      %v1510 = vpop.permute.xlu0 %1509
      %1511 = vrot.lane.b32.xlu0 %v1308, 120
      %v1512 = vpop.permute.xlu0 %1511
      %v1514 = vsel %vm1309, %v1502, 0
      %v1517 = vsel %vm1309, %v1504, 0
      %v1520 = vsel %vm1309, %v1506, 0
      %v1523 = vsel %vm1309, %v1508, 0
      %v1526 = vsel %vm1309, %v1510, 0
      %v1529 = vsel %vm1309, %v1512, 0
      %1531 = vmatprep.subr.bf16.mxu0 0
      %1532 = vmatpush1.bf16.xpose.msra.mxu0 %v1520
      %1533 = vmatprep.subr.bf16.mxu0 0
      %1534 = vmatpush1.bf16.xpose.msra.mxu0 %v1523
      %1535 = vmatprep.subr.bf16.mxu0 0
      %1536 = vmatpush1.bf16.xpose.msra.mxu0 %v1526
      %1537 = vmatprep.subr.bf16.mxu0 0
      %1538 = vmatpush1.bf16.xpose.msra.mxu0 %v1529
      %1539 = vmatprep.subr.bf16.mxu0 0
      %1540 = vmatpush1.bf16.xpose.msra.mxu0 0
      %1541 = vmatprep.subr.bf16.mxu0 0
      %1542 = vmatpush1.bf16.xpose.msra.mxu0 0
      %1543 = vmatprep.subr.bf16.mxu0 0
      %1544 = vmatpush1.bf16.xpose.msra.mxu0 0
      %1545 = vmatprep.subr.bf16.mxu0 0
      %1546 = vmatpush1.bf16.xpose.msra.mxu0 0
      %1547 = vmatprep.subr.bf16.mxu0 0
      %1548 = vmatpush1.bf16.xpose.msra.mxu0 0
      %1549 = vmatprep.subr.bf16.mxu0 0
      %1550 = vmatpush1.bf16.xpose.msra.mxu0 0
      %1551 = vmatprep.subr.bf16.mxu0 0
      %1552 = vmatpush1.bf16.xpose.msra.mxu0 0
      %1553 = vmatprep.subr.bf16.mxu0 0
      %1554 = vmatpush1.bf16.xpose.msra.mxu0 0
      %1555 = vmatprep.subr.bf16.mxu0 0
      %1556 = vmatpush1.bf16.xpose.msra.mxu0 0
      %1557 = vmatprep.subr.bf16.mxu0 0
      %1558 = vmatpush1.bf16.xpose.msra.mxu0 0
      %1559 = vmatprep.subr.bf16.mxu0 0
      %1560 = vmatpush1.bf16.xpose.msra.mxu0 0
      %1561 = vmatprep.subr.bf16.mxu0 0
      %1562 = vmatpush1.bf16.xpose.msra.mxu0 0
      %1563 = vmatprep.mubr.bf16.mxu0 0
      %1564 = vmatmul.mubr.bf16.gmra.mrb[0].mxu0 %v1514
      %v1565 = vpop.f32.mrb[0].mxu0
      %v1566 = vadd.f32 0.0, %v1565
      %v1567 = vpop.f32.mrb[0].mxu0
      %v1568 = vpop.f32.mrb[0].mxu0
      %v1569 = vadd.f32 0.0, %v1568
      %v1570 = vpop.f32.mrb[0].mxu0
      %1571 = vmatprep.mubr.bf16.mxu0 0
      %1572 = vmatmul.mubr.bf16.gmra.mrb[0].mxu0 %v1517
      %v1573 = vpop.f32.mrb[0].mxu0
      %v1574 = vadd.f32 0.0, %v1573
      %v1575 = vpop.f32.mrb[0].mxu0
      %v1576 = vpop.f32.mrb[0].mxu0
      %v1577 = vadd.f32 0.0, %v1576
      %v1578 = vpop.f32.mrb[0].mxu0
      %1579 = vdwg.mxu0
      %v1580 = vsel %vm1295, %v1566, -1.767767e+19
      %v1581 = vsel %vm1296, %v1569, -1.767767e+19
      %v1582 = vsel %vm1297, %v1574, -1.767767e+19
      %v1583 = vsel %vm1298, %v1577, -1.767767e+19
      %v1584 = vsel %vm1381, %v1580, -inf
      %1585 = vmax.xlane.f32.xlu0 %v1584
      %v1586 = vpop.xlane.xlu0 %1585
      %v1587 = vsel %vm1381, %v1581, -inf
      %1588 = vmax.xlane.f32.xlu0 %v1587
      %v1589 = vpop.xlane.xlu0 %1588
      %v1590 = vsel %vm1381, %v1582, -inf
      %1591 = vmax.xlane.f32.xlu0 %v1590
      %v1592 = vpop.xlane.xlu0 %1591
      %v1593 = vsel %vm1381, %v1583, -inf
      %1594 = vmax.xlane.f32.xlu0 %v1593
      %v1595 = vpop.xlane.xlu0 %1594
      %v1596 = vsub.f32 %v1580, %v1586
      %v1597 = vsub.f32 %v1581, %v1589
      %v1598 = vsub.f32 %v1582, %v1592
      %v1599 = vsub.f32 %v1583, %v1595
      %v1600 = vmul.f32 %v1596, 1.442695
      %v1601 = vpow.pop %v1600
      %v1602 = vmul.f32 %v1597, 1.442695
      %v1603 = vpow.pop %v1602
      %v1604 = vmul.f32 %v1598, 1.442695
      %v1605 = vpow.pop %v1604
      %v1606 = vmul.f32 %v1599, 1.442695
      %v1607 = vpow.pop %v1606
      %v1608 = vsel %vm1381, %v1601, 0.0
      %1609 = vadd.xlane.f32.xlu0 %v1608
      %v1610 = vpop.xlane.xlu0 %1609
      %v1611 = vsel %vm1381, %v1603, 0.0
      %1612 = vadd.xlane.f32.xlu0 %v1611
      %v1613 = vpop.xlane.xlu0 %1612
      %v1614 = vsel %vm1381, %v1605, 0.0
      %1615 = vadd.xlane.f32.xlu0 %v1614
      %v1616 = vpop.xlane.xlu0 %1615
      %v1617 = vsel %vm1381, %v1607, 0.0
      %1618 = vadd.xlane.f32.xlu0 %v1617
      %v1619 = vpop.xlane.xlu0 %1618
      %v1620 = vrcp.pop %v1610
      %v1621 = vrcp.pop %v1613
      %v1622 = vrcp.pop %v1616
      %v1623 = vrcp.pop %v1619
      %v1624 = vmul.f32 %v1601, %v1620
      %v1625 = vmul.f32 %v1603, %v1621
      %v1626 = vmul.f32 %v1605, %v1622
      %v1627 = vmul.f32 %v1607, %v1623
      %v1628 = vpack.c.bf16 %v1625, %v1624
      %v1629 = vpack.c.bf16 %v1627, %v1626
      %1630 = vrot.lane.b32.xlu0 %v1305, 88
      %v1631 = vpop.permute.xlu0 %1630
      %1632 = vrot.lane.b32.xlu0 %v1306, 88
      %v1633 = vpop.permute.xlu0 %1632
      %1634 = vrot.lane.b32.xlu0 %v1307, 88
      %v1635 = vpop.permute.xlu0 %1634
      %1636 = vrot.lane.b32.xlu0 %v1308, 88
      %v1637 = vpop.permute.xlu0 %1636
      %v1643 = vsel %vm1381, %v1628, 0
      %v1646 = vsel %vm1381, %v1629, 0
      %1648 = vmatprep.subr.bf16.mxu0 0
      %1649 = vmatpush1.bf16.msra.mxu0 %v1631
      %1650 = vmatprep.subr.bf16.mxu0 0
      %1651 = vmatpush1.bf16.msra.mxu0 %v1633
      %1652 = vmatprep.subr.bf16.mxu0 0
      %1653 = vmatpush1.bf16.msra.mxu0 %v1635
      %1654 = vmatprep.subr.bf16.mxu0 0
      %1655 = vmatpush1.bf16.msra.mxu0 %v1637
      %1656 = vmatprep.subr.bf16.mxu0 0
      %1657 = vmatpush1.bf16.msra.mxu0 0
      %1658 = vmatprep.subr.bf16.mxu0 0
      %1659 = vmatpush1.bf16.msra.mxu0 0
      %1660 = vmatprep.subr.bf16.mxu0 0
      %1661 = vmatpush1.bf16.msra.mxu0 0
      %1662 = vmatprep.subr.bf16.mxu0 0
      %1663 = vmatpush1.bf16.msra.mxu0 0
      %1664 = vmatprep.subr.bf16.mxu0 0
      %1665 = vmatpush1.bf16.msra.mxu0 0
      %1666 = vmatprep.subr.bf16.mxu0 0
      %1667 = vmatpush1.bf16.msra.mxu0 0
      %1668 = vmatprep.subr.bf16.mxu0 0
      %1669 = vmatpush1.bf16.msra.mxu0 0
      %1670 = vmatprep.subr.bf16.mxu0 0
      %1671 = vmatpush1.bf16.msra.mxu0 0
      %1672 = vmatprep.subr.bf16.mxu0 0
      %1673 = vmatpush1.bf16.msra.mxu0 0
      %1674 = vmatprep.subr.bf16.mxu0 0
      %1675 = vmatpush1.bf16.msra.mxu0 0
      %1676 = vmatprep.subr.bf16.mxu0 0
      %1677 = vmatpush1.bf16.msra.mxu0 0
      %1678 = vmatprep.subr.bf16.mxu0 0
      %1679 = vmatpush1.bf16.msra.mxu0 0
      %1680 = vmatprep.mubr.bf16.mxu0 0
      %1681 = vmatmul.mubr.bf16.gmra.mrb[0].mxu0 %v1643
      %v1682 = vpop.f32.mrb[0].mxu0
      %v1683 = vadd.f32 0.0, %v1682
      %v1684 = vpop.f32.mrb[0].mxu0
      %v1685 = vpop.f32.mrb[0].mxu0
      %v1686 = vadd.f32 0.0, %v1685
      %v1687 = vpop.f32.mrb[0].mxu0
      %1688 = vmatprep.mubr.bf16.mxu0 0
      %1689 = vmatmul.mubr.bf16.gmra.mrb[0].mxu0 %v1646
      %v1690 = vpop.f32.mrb[0].mxu0
      %v1691 = vadd.f32 0.0, %v1690
      %v1692 = vpop.f32.mrb[0].mxu0
      %v1693 = vpop.f32.mrb[0].mxu0
      %v1694 = vadd.f32 0.0, %v1693
      %v1695 = vpop.f32.mrb[0].mxu0
      %1696 = vdwg.mxu0
      %1697 = vrot.lane.b32.xlu0 %v1303, 112
      %v1698 = vpop.permute.xlu0 %1697
      %1699 = vrot.lane.b32.xlu0 %v1304, 112
      %v1700 = vpop.permute.xlu0 %1699
      %1701 = vrot.lane.b32.xlu0 %v1305, 112
      %v1702 = vpop.permute.xlu0 %1701
      %1703 = vrot.lane.b32.xlu0 %v1306, 112
      %v1704 = vpop.permute.xlu0 %1703
      %1705 = vrot.lane.b32.xlu0 %v1307, 112
      %v1706 = vpop.permute.xlu0 %1705
      %1707 = vrot.lane.b32.xlu0 %v1308, 112
      %v1708 = vpop.permute.xlu0 %1707
      %v1710 = vsel %vm1309, %v1698, 0
      %v1713 = vsel %vm1309, %v1700, 0
      %v1716 = vsel %vm1309, %v1702, 0
      %v1719 = vsel %vm1309, %v1704, 0
      %v1722 = vsel %vm1309, %v1706, 0
      %v1725 = vsel %vm1309, %v1708, 0
      %1727 = vmatprep.subr.bf16.mxu0 0
      %1728 = vmatpush1.bf16.xpose.msra.mxu0 %v1716
      %1729 = vmatprep.subr.bf16.mxu0 0
      %1730 = vmatpush1.bf16.xpose.msra.mxu0 %v1719
      %1731 = vmatprep.subr.bf16.mxu0 0
      %1732 = vmatpush1.bf16.xpose.msra.mxu0 %v1722
      %1733 = vmatprep.subr.bf16.mxu0 0
      %1734 = vmatpush1.bf16.xpose.msra.mxu0 %v1725
      %1735 = vmatprep.subr.bf16.mxu0 0
      %1736 = vmatpush1.bf16.xpose.msra.mxu0 0
      %1737 = vmatprep.subr.bf16.mxu0 0
      %1738 = vmatpush1.bf16.xpose.msra.mxu0 0
      %1739 = vmatprep.subr.bf16.mxu0 0
      %1740 = vmatpush1.bf16.xpose.msra.mxu0 0
      %1741 = vmatprep.subr.bf16.mxu0 0
      %1742 = vmatpush1.bf16.xpose.msra.mxu0 0
      %1743 = vmatprep.subr.bf16.mxu0 0
      %1744 = vmatpush1.bf16.xpose.msra.mxu0 0
      %1745 = vmatprep.subr.bf16.mxu0 0
      %1746 = vmatpush1.bf16.xpose.msra.mxu0 0
      %1747 = vmatprep.subr.bf16.mxu0 0
      %1748 = vmatpush1.bf16.xpose.msra.mxu0 0
      %1749 = vmatprep.subr.bf16.mxu0 0
      %1750 = vmatpush1.bf16.xpose.msra.mxu0 0
      %1751 = vmatprep.subr.bf16.mxu0 0
      %1752 = vmatpush1.bf16.xpose.msra.mxu0 0
      %1753 = vmatprep.subr.bf16.mxu0 0
      %1754 = vmatpush1.bf16.xpose.msra.mxu0 0
      %1755 = vmatprep.subr.bf16.mxu0 0
      %1756 = vmatpush1.bf16.xpose.msra.mxu0 0
      %1757 = vmatprep.subr.bf16.mxu0 0
      %1758 = vmatpush1.bf16.xpose.msra.mxu0 0
      %1759 = vmatprep.mubr.bf16.mxu0 0
      %1760 = vmatmul.mubr.bf16.gmra.mrb[0].mxu0 %v1710
      %v1761 = vpop.f32.mrb[0].mxu0
      %v1762 = vadd.f32 0.0, %v1761
      %v1763 = vpop.f32.mrb[0].mxu0
      %v1764 = vpop.f32.mrb[0].mxu0
      %v1765 = vadd.f32 0.0, %v1764
      %v1766 = vpop.f32.mrb[0].mxu0
      %1767 = vmatprep.mubr.bf16.mxu0 0
      %1768 = vmatmul.mubr.bf16.gmra.mrb[0].mxu0 %v1713
      %v1769 = vpop.f32.mrb[0].mxu0
      %v1770 = vadd.f32 0.0, %v1769
      %v1771 = vpop.f32.mrb[0].mxu0
      %v1772 = vpop.f32.mrb[0].mxu0
      %v1773 = vadd.f32 0.0, %v1772
      %v1774 = vpop.f32.mrb[0].mxu0
      %1775 = vdwg.mxu0
      %v1776 = vsel %vm1295, %v1762, -1.767767e+19
      %v1777 = vsel %vm1296, %v1765, -1.767767e+19
      %v1778 = vsel %vm1297, %v1770, -1.767767e+19
      %v1779 = vsel %vm1298, %v1773, -1.767767e+19
      %v1780 = vsel %vm1381, %v1776, -inf
      %1781 = vmax.xlane.f32.xlu0 %v1780
      %v1782 = vpop.xlane.xlu0 %1781
      %v1783 = vsel %vm1381, %v1777, -inf
      %1784 = vmax.xlane.f32.xlu0 %v1783
      %v1785 = vpop.xlane.xlu0 %1784
      %v1786 = vsel %vm1381, %v1778, -inf
      %1787 = vmax.xlane.f32.xlu0 %v1786
      %v1788 = vpop.xlane.xlu0 %1787
      %v1789 = vsel %vm1381, %v1779, -inf
      %1790 = vmax.xlane.f32.xlu0 %v1789
      %v1791 = vpop.xlane.xlu0 %1790
      %v1792 = vsub.f32 %v1776, %v1782
      %v1793 = vsub.f32 %v1777, %v1785
      %v1794 = vsub.f32 %v1778, %v1788
      %v1795 = vsub.f32 %v1779, %v1791
      %v1796 = vmul.f32 %v1792, 1.442695
      %v1797 = vpow.pop %v1796
      %v1798 = vmul.f32 %v1793, 1.442695
      %v1799 = vpow.pop %v1798
      %v1800 = vmul.f32 %v1794, 1.442695
      %v1801 = vpow.pop %v1800
      %v1802 = vmul.f32 %v1795, 1.442695
      %v1803 = vpow.pop %v1802
      %v1804 = vsel %vm1381, %v1797, 0.0
      %1805 = vadd.xlane.f32.xlu0 %v1804
      %v1806 = vpop.xlane.xlu0 %1805
      %v1807 = vsel %vm1381, %v1799, 0.0
      %1808 = vadd.xlane.f32.xlu0 %v1807
      %v1809 = vpop.xlane.xlu0 %1808
      %v1810 = vsel %vm1381, %v1801, 0.0
      %1811 = vadd.xlane.f32.xlu0 %v1810
      %v1812 = vpop.xlane.xlu0 %1811
      %v1813 = vsel %vm1381, %v1803, 0.0
      %1814 = vadd.xlane.f32.xlu0 %v1813
      %v1815 = vpop.xlane.xlu0 %1814
      %v1816 = vrcp.pop %v1806
      %v1817 = vrcp.pop %v1809
      %v1818 = vrcp.pop %v1812
      %v1819 = vrcp.pop %v1815
      %v1820 = vmul.f32 %v1797, %v1816
      %v1821 = vmul.f32 %v1799, %v1817
      %v1822 = vmul.f32 %v1801, %v1818
      %v1823 = vmul.f32 %v1803, %v1819
      %v1824 = vpack.c.bf16 %v1821, %v1820
      %v1825 = vpack.c.bf16 %v1823, %v1822
      %1826 = vrot.lane.b32.xlu0 %v1305, 80
      %v1827 = vpop.permute.xlu0 %1826
      %1828 = vrot.lane.b32.xlu0 %v1306, 80
      %v1829 = vpop.permute.xlu0 %1828
      %1830 = vrot.lane.b32.xlu0 %v1307, 80
      %v1831 = vpop.permute.xlu0 %1830
      %1832 = vrot.lane.b32.xlu0 %v1308, 80
      %v1833 = vpop.permute.xlu0 %1832
      %v1839 = vsel %vm1381, %v1824, 0
      %v1842 = vsel %vm1381, %v1825, 0
      %1844 = vmatprep.subr.bf16.mxu0 0
      %1845 = vmatpush1.bf16.msra.mxu0 %v1827
      %1846 = vmatprep.subr.bf16.mxu0 0
      %1847 = vmatpush1.bf16.msra.mxu0 %v1829
      %1848 = vmatprep.subr.bf16.mxu0 0
      %1849 = vmatpush1.bf16.msra.mxu0 %v1831
      %1850 = vmatprep.subr.bf16.mxu0 0
      %1851 = vmatpush1.bf16.msra.mxu0 %v1833
      %1852 = vmatprep.subr.bf16.mxu0 0
      %1853 = vmatpush1.bf16.msra.mxu0 0
      %1854 = vmatprep.subr.bf16.mxu0 0
      %1855 = vmatpush1.bf16.msra.mxu0 0
      %1856 = vmatprep.subr.bf16.mxu0 0
      %1857 = vmatpush1.bf16.msra.mxu0 0
      %1858 = vmatprep.subr.bf16.mxu0 0
      %1859 = vmatpush1.bf16.msra.mxu0 0
      %1860 = vmatprep.subr.bf16.mxu0 0
      %1861 = vmatpush1.bf16.msra.mxu0 0
      %1862 = vmatprep.subr.bf16.mxu0 0
      %1863 = vmatpush1.bf16.msra.mxu0 0
      %1864 = vmatprep.subr.bf16.mxu0 0
      %1865 = vmatpush1.bf16.msra.mxu0 0
      %1866 = vmatprep.subr.bf16.mxu0 0
      %1867 = vmatpush1.bf16.msra.mxu0 0
      %1868 = vmatprep.subr.bf16.mxu0 0
      %1869 = vmatpush1.bf16.msra.mxu0 0
      %1870 = vmatprep.subr.bf16.mxu0 0
      %1871 = vmatpush1.bf16.msra.mxu0 0
      %1872 = vmatprep.subr.bf16.mxu0 0
      %1873 = vmatpush1.bf16.msra.mxu0 0
      %1874 = vmatprep.subr.bf16.mxu0 0
      %1875 = vmatpush1.bf16.msra.mxu0 0
      %1876 = vmatprep.mubr.bf16.mxu0 0
      %1877 = vmatmul.mubr.bf16.gmra.mrb[0].mxu0 %v1839
      %v1878 = vpop.f32.mrb[0].mxu0
      %v1879 = vadd.f32 0.0, %v1878
      %v1880 = vpop.f32.mrb[0].mxu0
      %v1881 = vpop.f32.mrb[0].mxu0
      %v1882 = vadd.f32 0.0, %v1881
      %v1883 = vpop.f32.mrb[0].mxu0
      %1884 = vmatprep.mubr.bf16.mxu0 0
      %1885 = vmatmul.mubr.bf16.gmra.mrb[0].mxu0 %v1842
      %v1886 = vpop.f32.mrb[0].mxu0
      %v1887 = vadd.f32 0.0, %v1886
      %v1888 = vpop.f32.mrb[0].mxu0
      %v1889 = vpop.f32.mrb[0].mxu0
      %v1890 = vadd.f32 0.0, %v1889
      %v1891 = vpop.f32.mrb[0].mxu0
      %1892 = vdwg.mxu0
      %1893 = vrot.lane.b32.xlu0 %v1303, 104
      %v1894 = vpop.permute.xlu0 %1893
      %1895 = vrot.lane.b32.xlu0 %v1304, 104
      %v1896 = vpop.permute.xlu0 %1895
      %1897 = vrot.lane.b32.xlu0 %v1305, 104
      %v1898 = vpop.permute.xlu0 %1897
      %1899 = vrot.lane.b32.xlu0 %v1306, 104
      %v1900 = vpop.permute.xlu0 %1899
      %1901 = vrot.lane.b32.xlu0 %v1307, 104
      %v1902 = vpop.permute.xlu0 %1901
      %1903 = vrot.lane.b32.xlu0 %v1308, 104
      %v1904 = vpop.permute.xlu0 %1903
      %v1906 = vsel %vm1309, %v1894, 0
      %v1909 = vsel %vm1309, %v1896, 0
      %v1912 = vsel %vm1309, %v1898, 0
      %v1915 = vsel %vm1309, %v1900, 0
      %v1918 = vsel %vm1309, %v1902, 0
      %v1921 = vsel %vm1309, %v1904, 0
      %1923 = vmatprep.subr.bf16.mxu0 0
      %1924 = vmatpush1.bf16.xpose.msra.mxu0 %v1912
      %1925 = vmatprep.subr.bf16.mxu0 0
      %1926 = vmatpush1.bf16.xpose.msra.mxu0 %v1915
      %1927 = vmatprep.subr.bf16.mxu0 0
      %1928 = vmatpush1.bf16.xpose.msra.mxu0 %v1918
      %1929 = vmatprep.subr.bf16.mxu0 0
      %1930 = vmatpush1.bf16.xpose.msra.mxu0 %v1921
      %1931 = vmatprep.subr.bf16.mxu0 0
      %1932 = vmatpush1.bf16.xpose.msra.mxu0 0
      %1933 = vmatprep.subr.bf16.mxu0 0
      %1934 = vmatpush1.bf16.xpose.msra.mxu0 0
      %1935 = vmatprep.subr.bf16.mxu0 0
      %1936 = vmatpush1.bf16.xpose.msra.mxu0 0
      %1937 = vmatprep.subr.bf16.mxu0 0
      %1938 = vmatpush1.bf16.xpose.msra.mxu0 0
      %1939 = vmatprep.subr.bf16.mxu0 0
      %1940 = vmatpush1.bf16.xpose.msra.mxu0 0
      %1941 = vmatprep.subr.bf16.mxu0 0
      %1942 = vmatpush1.bf16.xpose.msra.mxu0 0
      %1943 = vmatprep.subr.bf16.mxu0 0
      %1944 = vmatpush1.bf16.xpose.msra.mxu0 0
      %1945 = vmatprep.subr.bf16.mxu0 0
      %1946 = vmatpush1.bf16.xpose.msra.mxu0 0
      %1947 = vmatprep.subr.bf16.mxu0 0
      %1948 = vmatpush1.bf16.xpose.msra.mxu0 0
      %1949 = vmatprep.subr.bf16.mxu0 0
      %1950 = vmatpush1.bf16.xpose.msra.mxu0 0
      %1951 = vmatprep.subr.bf16.mxu0 0
      %1952 = vmatpush1.bf16.xpose.msra.mxu0 0
      %1953 = vmatprep.subr.bf16.mxu0 0
      %1954 = vmatpush1.bf16.xpose.msra.mxu0 0
      %1955 = vmatprep.mubr.bf16.mxu0 0
      %1956 = vmatmul.mubr.bf16.gmra.mrb[0].mxu0 %v1906
      %v1957 = vpop.f32.mrb[0].mxu0
      %v1958 = vadd.f32 0.0, %v1957
      %v1959 = vpop.f32.mrb[0].mxu0
      %v1960 = vpop.f32.mrb[0].mxu0
      %v1961 = vadd.f32 0.0, %v1960
      %v1962 = vpop.f32.mrb[0].mxu0
      %1963 = vmatprep.mubr.bf16.mxu0 0
      %1964 = vmatmul.mubr.bf16.gmra.mrb[0].mxu0 %v1909
      %v1965 = vpop.f32.mrb[0].mxu0
      %v1966 = vadd.f32 0.0, %v1965
      %v1967 = vpop.f32.mrb[0].mxu0
      %v1968 = vpop.f32.mrb[0].mxu0
      %v1969 = vadd.f32 0.0, %v1968
      %v1970 = vpop.f32.mrb[0].mxu0
      %1971 = vdwg.mxu0
      %v1972 = vsel %vm1295, %v1958, -1.767767e+19
      %v1973 = vsel %vm1296, %v1961, -1.767767e+19
      %v1974 = vsel %vm1297, %v1966, -1.767767e+19
      %v1975 = vsel %vm1298, %v1969, -1.767767e+19
      %v1976 = vsel %vm1381, %v1972, -inf
      %1977 = vmax.xlane.f32.xlu0 %v1976
      %v1978 = vpop.xlane.xlu0 %1977
      %v1979 = vsel %vm1381, %v1973, -inf
      %1980 = vmax.xlane.f32.xlu0 %v1979
      %v1981 = vpop.xlane.xlu0 %1980
      %v1982 = vsel %vm1381, %v1974, -inf
      %1983 = vmax.xlane.f32.xlu0 %v1982
      %v1984 = vpop.xlane.xlu0 %1983
      %v1985 = vsel %vm1381, %v1975, -inf
      %1986 = vmax.xlane.f32.xlu0 %v1985
      %v1987 = vpop.xlane.xlu0 %1986
      %v1988 = vsub.f32 %v1972, %v1978
      %v1989 = vsub.f32 %v1973, %v1981
      %v1990 = vsub.f32 %v1974, %v1984
      %v1991 = vsub.f32 %v1975, %v1987
      %v1992 = vmul.f32 %v1988, 1.442695
      %v1993 = vpow.pop %v1992
      %v1994 = vmul.f32 %v1989, 1.442695
      %v1995 = vpow.pop %v1994
      %v1996 = vmul.f32 %v1990, 1.442695
      %v1997 = vpow.pop %v1996
      %v1998 = vmul.f32 %v1991, 1.442695
      %v1999 = vpow.pop %v1998
      %v2000 = vsel %vm1381, %v1993, 0.0
      %2001 = vadd.xlane.f32.xlu0 %v2000
      %v2002 = vpop.xlane.xlu0 %2001
      %v2003 = vsel %vm1381, %v1995, 0.0
      %2004 = vadd.xlane.f32.xlu0 %v2003
      %v2005 = vpop.xlane.xlu0 %2004
      %v2006 = vsel %vm1381, %v1997, 0.0
      %2007 = vadd.xlane.f32.xlu0 %v2006
      %v2008 = vpop.xlane.xlu0 %2007
      %v2009 = vsel %vm1381, %v1999, 0.0
      %2010 = vadd.xlane.f32.xlu0 %v2009
      %v2011 = vpop.xlane.xlu0 %2010
      %v2012 = vrcp.pop %v2002
      %v2013 = vrcp.pop %v2005
      %v2014 = vrcp.pop %v2008
      %v2015 = vrcp.pop %v2011
      %v2016 = vmul.f32 %v1993, %v2012
      %v2017 = vmul.f32 %v1995, %v2013
      %v2018 = vmul.f32 %v1997, %v2014
      %v2019 = vmul.f32 %v1999, %v2015
      %v2020 = vpack.c.bf16 %v2017, %v2016
      %v2021 = vpack.c.bf16 %v2019, %v2018
      %2022 = vrot.lane.b32.xlu0 %v1305, 72
      %v2023 = vpop.permute.xlu0 %2022
      %2024 = vrot.lane.b32.xlu0 %v1306, 72
      %v2025 = vpop.permute.xlu0 %2024
      %2026 = vrot.lane.b32.xlu0 %v1307, 72
      %v2027 = vpop.permute.xlu0 %2026
      %2028 = vrot.lane.b32.xlu0 %v1308, 72
      %v2029 = vpop.permute.xlu0 %2028
      %v2035 = vsel %vm1381, %v2020, 0
      %v2038 = vsel %vm1381, %v2021, 0
      %2040 = vmatprep.subr.bf16.mxu0 0
      %2041 = vmatpush1.bf16.msra.mxu0 %v2023
      %2042 = vmatprep.subr.bf16.mxu0 0
      %2043 = vmatpush1.bf16.msra.mxu0 %v2025
      %2044 = vmatprep.subr.bf16.mxu0 0
      %2045 = vmatpush1.bf16.msra.mxu0 %v2027
      %2046 = vmatprep.subr.bf16.mxu0 0
      %2047 = vmatpush1.bf16.msra.mxu0 %v2029
      %2048 = vmatprep.subr.bf16.mxu0 0
      %2049 = vmatpush1.bf16.msra.mxu0 0
      %2050 = vmatprep.subr.bf16.mxu0 0
      %2051 = vmatpush1.bf16.msra.mxu0 0
      %2052 = vmatprep.subr.bf16.mxu0 0
      %2053 = vmatpush1.bf16.msra.mxu0 0
      %2054 = vmatprep.subr.bf16.mxu0 0
      %2055 = vmatpush1.bf16.msra.mxu0 0
      %2056 = vmatprep.subr.bf16.mxu0 0
      %2057 = vmatpush1.bf16.msra.mxu0 0
      %2058 = vmatprep.subr.bf16.mxu0 0
      %2059 = vmatpush1.bf16.msra.mxu0 0
      %2060 = vmatprep.subr.bf16.mxu0 0
      %2061 = vmatpush1.bf16.msra.mxu0 0
      %2062 = vmatprep.subr.bf16.mxu0 0
      %2063 = vmatpush1.bf16.msra.mxu0 0
      %2064 = vmatprep.subr.bf16.mxu0 0
      %2065 = vmatpush1.bf16.msra.mxu0 0
      %2066 = vmatprep.subr.bf16.mxu0 0
      %2067 = vmatpush1.bf16.msra.mxu0 0
      %2068 = vmatprep.subr.bf16.mxu0 0
      %2069 = vmatpush1.bf16.msra.mxu0 0
      %2070 = vmatprep.subr.bf16.mxu0 0
      %2071 = vmatpush1.bf16.msra.mxu0 0
      %2072 = vmatprep.mubr.bf16.mxu0 0
      %2073 = vmatmul.mubr.bf16.gmra.mrb[0].mxu0 %v2035
      %v2074 = vpop.f32.mrb[0].mxu0
      %v2075 = vadd.f32 0.0, %v2074
      %v2076 = vpop.f32.mrb[0].mxu0
      %v2077 = vpop.f32.mrb[0].mxu0
      %v2078 = vadd.f32 0.0, %v2077
      %v2079 = vpop.f32.mrb[0].mxu0
      %2080 = vmatprep.mubr.bf16.mxu0 0
      %2081 = vmatmul.mubr.bf16.gmra.mrb[0].mxu0 %v2038
      %v2082 = vpop.f32.mrb[0].mxu0
      %v2083 = vadd.f32 0.0, %v2082
      %v2084 = vpop.f32.mrb[0].mxu0
      %v2085 = vpop.f32.mrb[0].mxu0
      %v2086 = vadd.f32 0.0, %v2085
      %v2087 = vpop.f32.mrb[0].mxu0
      %2088 = vdwg.mxu0
      %2093 = vrot.lane.b32.xlu0 %v1683, 8
      %v2094 = vpop.permute.xlu0 %2093
      %2095 = vrot.lane.b32.xlu0 %v1686, 8
      %v2096 = vpop.permute.xlu0 %2095
      %2097 = vrot.lane.b32.xlu0 %v1691, 8
      %v2098 = vpop.permute.xlu0 %2097
      %2099 = vrot.lane.b32.xlu0 %v1694, 8
      %v2100 = vpop.permute.xlu0 %2099
      %2109 = vrot.lane.b32.xlu0 %v1879, 16
      %v2110 = vpop.permute.xlu0 %2109
      %2111 = vrot.lane.b32.xlu0 %v1882, 16
      %v2112 = vpop.permute.xlu0 %2111
      %2113 = vrot.lane.b32.xlu0 %v1887, 16
      %v2114 = vpop.permute.xlu0 %2113
      %2115 = vrot.lane.b32.xlu0 %v1890, 16
      %v2116 = vpop.permute.xlu0 %2115
      %2125 = vrot.lane.b32.xlu0 %v2075, 24
      %v2126 = vpop.permute.xlu0 %2125
      %2127 = vrot.lane.b32.xlu0 %v2078, 24
      %v2128 = vpop.permute.xlu0 %2127
      %2129 = vrot.lane.b32.xlu0 %v2083, 24
      %v2130 = vpop.permute.xlu0 %2129
      %2131 = vrot.lane.b32.xlu0 %v2086, 24
      %v2132 = vpop.permute.xlu0 %2131
      %v2137 = vsel %vm1309, %v1485, %v2094
      %v2138 = vsel %vm1309, %v1488, %v2096
      %v2139 = vsel %vm1309, %v1493, %v2098
      %v2140 = vsel %vm1309, %v1496, %v2100
      %vm2141 = vcmask 130048
      %v2142 = vsel %vm2141, %v2137, %v2110
      %v2143 = vsel %vm2141, %v2138, %v2112
      %v2144 = vsel %vm2141, %v2139, %v2114
      %v2145 = vsel %vm2141, %v2140, %v2116
      %vm2146 = vcmask 195584
      %v2147 = vsel %vm2146, %v2142, %v2126
      %v2148 = vsel %vm2146, %v2143, %v2128
      %v2149 = vsel %vm2146, %v2144, %v2130
      %v2150 = vsel %vm2146, %v2145, %v2132
      %v2151 = vpack.c.bf16 %v2148, %v2147
      %v2152 = vpack.c.bf16 %v2150, %v2149
      %v2153 = vld [vmem:[%s23] sm:$0x1]
      %v2155 = vlaneseq
      %v2156 = vshrl.u32 %v2155, 7
      %v2157 = vsub.s32 0, %v2156
      %v2158 = vrot.slane %v2153, %v2157
      %v2164 = vunpack.c.l.b16 %v1299
      %v2165 = vunpack.c.l.b16 %v1300
      %v2166 = vunpack.c.l.b16 %v1301
      %v2167 = vunpack.c.l.b16 %v1302
      %v2168 = vpack.c.b16 %v2165, %v2164
      %v2169 = vpack.c.b16 %v2167, %v2166
      %v2173 = vsel %vm1134, %v2151, 0
      %v2176 = vsel %vm1134, %v2152, 0
      %2178 = vmatprep.subr.bf16.mxu0 0
      %2179 = vmatpush1.bf16.msra.mxu0 %v2168
      %2180 = vmatprep.subr.bf16.mxu0 0
      %2181 = vmatpush1.bf16.msra.mxu0 %v2169
      %2182 = vmatprep.subr.bf16.mxu0 0
      %2183 = vmatpush1.bf16.msra.mxu0 0
      %2184 = vmatprep.subr.bf16.mxu0 0
      %2185 = vmatpush1.bf16.msra.mxu0 0
      %2186 = vmatprep.subr.bf16.mxu0 0
      %2187 = vmatpush1.bf16.msra.mxu0 0
      %2188 = vmatprep.subr.bf16.mxu0 0
      %2189 = vmatpush1.bf16.msra.mxu0 0
      %2190 = vmatprep.subr.bf16.mxu0 0
      %2191 = vmatpush1.bf16.msra.mxu0 0
      %2192 = vmatprep.subr.bf16.mxu0 0
      %2193 = vmatpush1.bf16.msra.mxu0 0
      %2194 = vmatprep.subr.bf16.mxu0 0
      %2195 = vmatpush1.bf16.msra.mxu0 0
      %2196 = vmatprep.subr.bf16.mxu0 0
      %2197 = vmatpush1.bf16.msra.mxu0 0
      %2198 = vmatprep.subr.bf16.mxu0 0
      %2199 = vmatpush1.bf16.msra.mxu0 0
      %2200 = vmatprep.subr.bf16.mxu0 0
      %2201 = vmatpush1.bf16.msra.mxu0 0
      %2202 = vmatprep.subr.bf16.mxu0 0
      %2203 = vmatpush1.bf16.msra.mxu0 0
      %2204 = vmatprep.subr.bf16.mxu0 0
      %2205 = vmatpush1.bf16.msra.mxu0 0
      %2206 = vmatprep.subr.bf16.mxu0 0
      %2207 = vmatpush1.bf16.msra.mxu0 0
      %2208 = vmatprep.subr.bf16.mxu0 0
      %2209 = vmatpush1.bf16.msra.mxu0 0
      %2210 = vmatprep.mubr.bf16.mxu0 0
      %2211 = vmatmul.mubr.bf16.gmra.mrb[0].mxu0 %v2173
      %v2212 = vpop.f32.mrb[0].mxu0
      %v2213 = vadd.f32 %v2158, %v2212
      %v2214 = vpop.f32.mrb[0].mxu0
      %v2215 = vpop.f32.mrb[0].mxu0
      %v2216 = vadd.f32 %v2158, %v2215
      %v2217 = vpop.f32.mrb[0].mxu0
      %2218 = vmatprep.mubr.bf16.mxu0 0
      %2219 = vmatmul.mubr.bf16.gmra.mrb[0].mxu0 %v2176
      %v2220 = vpop.f32.mrb[0].mxu0
      %v2221 = vadd.f32 %v2158, %v2220
      %v2222 = vpop.f32.mrb[0].mxu0
      %v2223 = vpop.f32.mrb[0].mxu0
      %v2224 = vadd.f32 %v2158, %v2223
      %v2225 = vpop.f32.mrb[0].mxu0
      %2226 = vdwg.mxu0
      %v2227 = vld [vmem:[%s25] sm:$0x1]
      %v2228 = vld [vmem:[%s27] sm:$0x1]
      %v2229 = vadd.f32 %v2213, %v1093
      %v2230 = vadd.f32 %v2216, %v1094
      %v2231 = vadd.f32 %v2221, %v1095
      %v2232 = vadd.f32 %v2224, %v1096
      %v2233 = vsel %vm1134, %v2229, 0.0
      %2234 = vadd.xlane.f32.xlu0 %v2233
      %v2235 = vpop.xlane.xlu0 %2234
      %v2236 = vsel %vm1134, %v2230, 0.0
      %2237 = vadd.xlane.f32.xlu0 %v2236
      %v2238 = vpop.xlane.xlu0 %2237
      %v2239 = vsel %vm1134, %v2231, 0.0
      %2240 = vadd.xlane.f32.xlu0 %v2239
      %v2241 = vpop.xlane.xlu0 %2240
      %v2242 = vsel %vm1134, %v2232, 0.0
      %2243 = vadd.xlane.f32.xlu0 %v2242
      %v2244 = vpop.xlane.xlu0 %2243
      %v2245 = vrcp.pop 32.0
      %v2246 = vmul.f32 %v2235, %v2245
      %v2247 = vmul.f32 %v2238, %v2245
      %v2248 = vmul.f32 %v2241, %v2245
      %v2249 = vmul.f32 %v2244, %v2245
      %v2250 = vsub.f32 %v2229, %v2246
      %v2251 = vsub.f32 %v2230, %v2247
      %v2252 = vsub.f32 %v2231, %v2248
      %v2253 = vsub.f32 %v2232, %v2249
      %v2254 = vmul.f32 %v2250, %v2250
      %v2255 = vmul.f32 %v2251, %v2251
      %v2256 = vmul.f32 %v2252, %v2252
      %v2257 = vmul.f32 %v2253, %v2253
      %v2258 = vsel %vm1134, %v2254, 0.0
      %2259 = vadd.xlane.f32.xlu0 %v2258
      %v2260 = vpop.xlane.xlu0 %2259
      %v2261 = vsel %vm1134, %v2255, 0.0
      %2262 = vadd.xlane.f32.xlu0 %v2261
      %v2263 = vpop.xlane.xlu0 %2262
      %v2264 = vsel %vm1134, %v2256, 0.0
      %2265 = vadd.xlane.f32.xlu0 %v2264
      %v2266 = vpop.xlane.xlu0 %2265
      %v2267 = vsel %vm1134, %v2257, 0.0
      %2268 = vadd.xlane.f32.xlu0 %v2267
      %v2269 = vpop.xlane.xlu0 %2268
      %v2270 = vmul.f32 %v2260, %v2245
      %v2271 = vmul.f32 %v2263, %v2245
      %v2272 = vmul.f32 %v2266, %v2245
      %v2273 = vmul.f32 %v2269, %v2245
      %v2274 = vadd.f32 %v2270, 1e-05
      %v2275 = vadd.f32 %v2271, 1e-05
      %v2276 = vadd.f32 %v2272, 1e-05
      %v2277 = vadd.f32 %v2273, 1e-05
      %v2278 = vrsqrt.pop %v2274
      %v2279 = vrsqrt.pop %v2275
      %v2280 = vrsqrt.pop %v2276
      %v2281 = vrsqrt.pop %v2277
      %v2282 = vmul.f32 %v2250, %v2278
      %v2283 = vmul.f32 %v2251, %v2279
      %v2284 = vmul.f32 %v2252, %v2280
      %v2285 = vmul.f32 %v2253, %v2281
      %v2287 = vlaneseq
      %v2288 = vshrl.u32 %v2287, 7
      %v2289 = vsub.s32 0, %v2288
      %v2290 = vrot.slane %v2227, %v2289
      %v2292 = vmul.f32 %v2282, %v2290
      %v2293 = vmul.f32 %v2283, %v2290
      %v2294 = vmul.f32 %v2284, %v2290
      %v2295 = vmul.f32 %v2285, %v2290
      %v2297 = vlaneseq
      %v2298 = vshrl.u32 %v2297, 7
      %v2299 = vsub.s32 0, %v2298
      %v2300 = vrot.slane %v2228, %v2299
      %v2302 = vadd.f32 %v2292, %v2300
      %v2303 = vadd.f32 %v2293, %v2300
      %v2304 = vadd.f32 %v2294, %v2300
      %v2305 = vadd.f32 %v2295, %v2300
      %v2306 = vpack.c.bf16 %v2303, %v2302
      %v2307 = vpack.c.bf16 %v2305, %v2304
      %v2308 = vld [vmem:[%s29] sm:$0xf]
      %v2309 = vld [vmem:[%s29 + $0x4] sm:$0xf]
      %v2310 = vld [vmem:[%s29 + $0x8] sm:$0xf]
      %v2311 = vld [vmem:[%s29 + $0xc] sm:$0xf]
      %v2312 = vld [vmem:[%s31] sm:$0x1]
      %v2314 = vlaneseq
      %v2315 = vshrl.u32 %v2314, 7
      %v2316 = vsub.s32 0, %v2315
      %v2317 = vrot.slane %v2312, %v2316
      %v2323 = vunpack.c.l.b16 %v2308
      %v2324 = vunpack.c.l.b16 %v2309
      %v2325 = vunpack.c.l.b16 %v2310
      %v2326 = vunpack.c.l.b16 %v2311
      %v2327 = vpack.c.b16 %v2324, %v2323
      %v2328 = vpack.c.b16 %v2326, %v2325
      %v2332 = vsel %vm1134, %v2306, 0
      %v2335 = vsel %vm1134, %v2307, 0
      %2337 = vmatprep.subr.bf16.mxu0 0
      %2338 = vmatpush1.bf16.msra.mxu0 %v2327
      %2339 = vmatprep.subr.bf16.mxu0 0
      %2340 = vmatpush1.bf16.msra.mxu0 %v2328
      %2341 = vmatprep.subr.bf16.mxu0 0
      %2342 = vmatpush1.bf16.msra.mxu0 0
      %2343 = vmatprep.subr.bf16.mxu0 0
      %2344 = vmatpush1.bf16.msra.mxu0 0
      %2345 = vmatprep.subr.bf16.mxu0 0
      %2346 = vmatpush1.bf16.msra.mxu0 0
      %2347 = vmatprep.subr.bf16.mxu0 0
      %2348 = vmatpush1.bf16.msra.mxu0 0
      %2349 = vmatprep.subr.bf16.mxu0 0
      %2350 = vmatpush1.bf16.msra.mxu0 0
      %2351 = vmatprep.subr.bf16.mxu0 0
      %2352 = vmatpush1.bf16.msra.mxu0 0
      %2353 = vmatprep.subr.bf16.mxu0 0
      %2354 = vmatpush1.bf16.msra.mxu0 0
      %2355 = vmatprep.subr.bf16.mxu0 0
      %2356 = vmatpush1.bf16.msra.mxu0 0
      %2357 = vmatprep.subr.bf16.mxu0 0
      %2358 = vmatpush1.bf16.msra.mxu0 0
      %2359 = vmatprep.subr.bf16.mxu0 0
      %2360 = vmatpush1.bf16.msra.mxu0 0
      %2361 = vmatprep.subr.bf16.mxu0 0
      %2362 = vmatpush1.bf16.msra.mxu0 0
      %2363 = vmatprep.subr.bf16.mxu0 0
      %2364 = vmatpush1.bf16.msra.mxu0 0
      %2365 = vmatprep.subr.bf16.mxu0 0
      %2366 = vmatpush1.bf16.msra.mxu0 0
      %2367 = vmatprep.subr.bf16.mxu0 0
      %2368 = vmatpush1.bf16.msra.mxu0 0
      %2369 = vmatprep.mubr.bf16.mxu0 0
      %2370 = vmatmul.mubr.bf16.gmra.mrb[0].mxu0 %v2332
      %v2371 = vpop.f32.mrb[0].mxu0
      %v2372 = vadd.f32 %v2317, %v2371
      %v2373 = vpop.f32.mrb[0].mxu0
      %v2374 = vpop.f32.mrb[0].mxu0
      %v2375 = vadd.f32 %v2317, %v2374
      %v2376 = vpop.f32.mrb[0].mxu0
      %2377 = vmatprep.mubr.bf16.mxu0 0
      %2378 = vmatmul.mubr.bf16.gmra.mrb[0].mxu0 %v2335
      %v2379 = vpop.f32.mrb[0].mxu0
      %v2380 = vadd.f32 %v2317, %v2379
      %v2381 = vpop.f32.mrb[0].mxu0
      %v2382 = vpop.f32.mrb[0].mxu0
      %v2383 = vadd.f32 %v2317, %v2382
      %v2384 = vpop.f32.mrb[0].mxu0
      %2385 = vdwg.mxu0
      %v2386 = vld [vmem:[%s1068] sm:$0xff]
      %v2387 = vld [vmem:[%s1068 + $0x8] sm:$0xff]
      %v2388 = vld [vmem:[%s1068 + $0x10] sm:$0xff]
      %v2389 = vld [vmem:[%s1068 + $0x18] sm:$0xff]
      %v2390 = vpack.c.bf16 %v2387, %v2386
      %v2391 = vpack.c.bf16 %v2389, %v2388
      %v2392 = vld [vmem:[%s33] sm:$0xf]
      %v2393 = vld [vmem:[%s33 + $0x4] sm:$0xf]
      %v2394 = vld [vmem:[%s33 + $0x8] sm:$0xf]
      %v2395 = vld [vmem:[%s33 + $0xc] sm:$0xf]
      %v2396 = vld [vmem:[%s35] sm:$0x1]
      %v2398 = vlaneseq
      %v2399 = vshrl.u32 %v2398, 7
      %v2400 = vsub.s32 0, %v2399
      %v2401 = vrot.slane %v2396, %v2400
      %v2407 = vunpack.c.l.b16 %v2392
      %v2408 = vunpack.c.l.b16 %v2393
      %v2409 = vunpack.c.l.b16 %v2394
      %v2410 = vunpack.c.l.b16 %v2395
      %v2411 = vpack.c.b16 %v2408, %v2407
      %v2412 = vpack.c.b16 %v2410, %v2409
      %v2416 = vsel %vm1134, %v2390, 0
      %v2419 = vsel %vm1134, %v2391, 0
      %2421 = vmatprep.subr.bf16.mxu0 0
      %2422 = vmatpush1.bf16.msra.mxu0 %v2411
      %2423 = vmatprep.subr.bf16.mxu0 0
      %2424 = vmatpush1.bf16.msra.mxu0 %v2412
      %2425 = vmatprep.subr.bf16.mxu0 0
      %2426 = vmatpush1.bf16.msra.mxu0 0
      %2427 = vmatprep.subr.bf16.mxu0 0
      %2428 = vmatpush1.bf16.msra.mxu0 0
      %2429 = vmatprep.subr.bf16.mxu0 0
      %2430 = vmatpush1.bf16.msra.mxu0 0
      %2431 = vmatprep.subr.bf16.mxu0 0
      %2432 = vmatpush1.bf16.msra.mxu0 0
      %2433 = vmatprep.subr.bf16.mxu0 0
      %2434 = vmatpush1.bf16.msra.mxu0 0
      %2435 = vmatprep.subr.bf16.mxu0 0
      %2436 = vmatpush1.bf16.msra.mxu0 0
      %2437 = vmatprep.subr.bf16.mxu0 0
      %2438 = vmatpush1.bf16.msra.mxu0 0
      %2439 = vmatprep.subr.bf16.mxu0 0
      %2440 = vmatpush1.bf16.msra.mxu0 0
      %2441 = vmatprep.subr.bf16.mxu0 0
      %2442 = vmatpush1.bf16.msra.mxu0 0
      %2443 = vmatprep.subr.bf16.mxu0 0
      %2444 = vmatpush1.bf16.msra.mxu0 0
      %2445 = vmatprep.subr.bf16.mxu0 0
      %2446 = vmatpush1.bf16.msra.mxu0 0
      %2447 = vmatprep.subr.bf16.mxu0 0
      %2448 = vmatpush1.bf16.msra.mxu0 0
      %2449 = vmatprep.subr.bf16.mxu0 0
      %2450 = vmatpush1.bf16.msra.mxu0 0
      %2451 = vmatprep.subr.bf16.mxu0 0
      %2452 = vmatpush1.bf16.msra.mxu0 0
      %2453 = vmatprep.mubr.bf16.mxu0 0
      %2454 = vmatmul.mubr.bf16.gmra.mrb[0].mxu0 %v2416
      %v2455 = vpop.f32.mrb[0].mxu0
      %v2456 = vadd.f32 %v2401, %v2455
      %v2457 = vpop.f32.mrb[0].mxu0
      %v2458 = vpop.f32.mrb[0].mxu0
      %v2459 = vadd.f32 %v2401, %v2458
      %v2460 = vpop.f32.mrb[0].mxu0
      %2461 = vmatprep.mubr.bf16.mxu0 0
      %2462 = vmatmul.mubr.bf16.gmra.mrb[0].mxu0 %v2419
      %v2463 = vpop.f32.mrb[0].mxu0
      %v2464 = vadd.f32 %v2401, %v2463
      %v2465 = vpop.f32.mrb[0].mxu0
      %v2466 = vpop.f32.mrb[0].mxu0
      %v2467 = vadd.f32 %v2401, %v2466
      %v2468 = vpop.f32.mrb[0].mxu0
      %2469 = vdwg.mxu0
      %v2470 = vld [vmem:[%s1073] sm:$0xff]
      %v2471 = vld [vmem:[%s1073 + $0x8] sm:$0xff]
      %v2472 = vld [vmem:[%s1073 + $0x10] sm:$0xff]
      %v2473 = vld [vmem:[%s1073 + $0x18] sm:$0xff]
      %v2474 = vpack.c.bf16 %v2471, %v2470
      %v2475 = vpack.c.bf16 %v2473, %v2472
      %v2476 = vld [vmem:[%s37] sm:$0xf]
      %v2477 = vld [vmem:[%s37 + $0x4] sm:$0xf]
      %v2478 = vld [vmem:[%s37 + $0x8] sm:$0xf]
      %v2479 = vld [vmem:[%s37 + $0xc] sm:$0xf]
      %v2480 = vld [vmem:[%s39] sm:$0x1]
      %v2482 = vlaneseq
      %v2483 = vshrl.u32 %v2482, 7
      %v2484 = vsub.s32 0, %v2483
      %v2485 = vrot.slane %v2480, %v2484
      %v2491 = vunpack.c.l.b16 %v2476
      %v2492 = vunpack.c.l.b16 %v2477
      %v2493 = vunpack.c.l.b16 %v2478
      %v2494 = vunpack.c.l.b16 %v2479
      %v2495 = vpack.c.b16 %v2492, %v2491
      %v2496 = vpack.c.b16 %v2494, %v2493
      %v2500 = vsel %vm1134, %v2474, 0
      %v2503 = vsel %vm1134, %v2475, 0
      %2505 = vmatprep.subr.bf16.mxu0 0
      %2506 = vmatpush1.bf16.msra.mxu0 %v2495
      %2507 = vmatprep.subr.bf16.mxu0 0
      %2508 = vmatpush1.bf16.msra.mxu0 %v2496
      %2509 = vmatprep.subr.bf16.mxu0 0
      %2510 = vmatpush1.bf16.msra.mxu0 0
      %2511 = vmatprep.subr.bf16.mxu0 0
      %2512 = vmatpush1.bf16.msra.mxu0 0
      %2513 = vmatprep.subr.bf16.mxu0 0
      %2514 = vmatpush1.bf16.msra.mxu0 0
      %2515 = vmatprep.subr.bf16.mxu0 0
      %2516 = vmatpush1.bf16.msra.mxu0 0
      %2517 = vmatprep.subr.bf16.mxu0 0
      %2518 = vmatpush1.bf16.msra.mxu0 0
      %2519 = vmatprep.subr.bf16.mxu0 0
      %2520 = vmatpush1.bf16.msra.mxu0 0
      %2521 = vmatprep.subr.bf16.mxu0 0
      %2522 = vmatpush1.bf16.msra.mxu0 0
      %2523 = vmatprep.subr.bf16.mxu0 0
      %2524 = vmatpush1.bf16.msra.mxu0 0
      %2525 = vmatprep.subr.bf16.mxu0 0
      %2526 = vmatpush1.bf16.msra.mxu0 0
      %2527 = vmatprep.subr.bf16.mxu0 0
      %2528 = vmatpush1.bf16.msra.mxu0 0
      %2529 = vmatprep.subr.bf16.mxu0 0
      %2530 = vmatpush1.bf16.msra.mxu0 0
      %2531 = vmatprep.subr.bf16.mxu0 0
      %2532 = vmatpush1.bf16.msra.mxu0 0
      %2533 = vmatprep.subr.bf16.mxu0 0
      %2534 = vmatpush1.bf16.msra.mxu0 0
      %2535 = vmatprep.subr.bf16.mxu0 0
      %2536 = vmatpush1.bf16.msra.mxu0 0
      %2537 = vmatprep.mubr.bf16.mxu0 0
      %2538 = vmatmul.mubr.bf16.gmra.mrb[0].mxu0 %v2500
      %v2539 = vpop.f32.mrb[0].mxu0
      %v2540 = vadd.f32 %v2485, %v2539
      %v2541 = vpop.f32.mrb[0].mxu0
      %v2542 = vpop.f32.mrb[0].mxu0
      %v2543 = vadd.f32 %v2485, %v2542
      %v2544 = vpop.f32.mrb[0].mxu0
      %2545 = vmatprep.mubr.bf16.mxu0 0
      %2546 = vmatmul.mubr.bf16.gmra.mrb[0].mxu0 %v2503
      %v2547 = vpop.f32.mrb[0].mxu0
      %v2548 = vadd.f32 %v2485, %v2547
      %v2549 = vpop.f32.mrb[0].mxu0
      %v2550 = vpop.f32.mrb[0].mxu0
      %v2551 = vadd.f32 %v2485, %v2550
      %v2552 = vpop.f32.mrb[0].mxu0
      %2553 = vdwg.mxu0
      %v2554 = vld [vmem:[%s1081] sm:$0xff]
      %v2555 = vunpack.c.0.s8 %v2554
      %v2556 = vunpack.c.1.s8 %v2554
      %v2557 = vunpack.c.2.s8 %v2554
      %v2558 = vunpack.c.3.s8 %v2554
      %vm2559 = vcmp.ne.s32.totalorder %v2555, 0
      %vm2560 = vcmp.ne.s32.totalorder %v2556, 0
      %vm2561 = vcmp.ne.s32.totalorder %v2557, 0
      %vm2562 = vcmp.ne.s32.totalorder %v2558, 0
      %v2563 = vld [vmem:[%s41] sm:$0xf]
      %v2564 = vld [vmem:[%s41 + $0x4] sm:$0xf]
      %v2565 = vld [vmem:[%s41 + $0x8] sm:$0xf]
      %v2566 = vld [vmem:[%s41 + $0xc] sm:$0xf]
      %v2567 = vpack.c.bf16 %v2375, %v2372
      %v2568 = vpack.c.bf16 %v2383, %v2380
      %v2569 = vpack.c.bf16 %v2459, %v2456
      %v2570 = vpack.c.bf16 %v2467, %v2464
      %v2571 = vpack.c.bf16 %v2543, %v2540
      %v2572 = vpack.c.bf16 %v2551, %v2548
      %v2574 = vsel %vm1309, %v2567, 0
      %v2577 = vsel %vm1309, %v2568, 0
      %v2580 = vsel %vm1309, %v2569, 0
      %v2583 = vsel %vm1309, %v2570, 0
      %2585 = vmatprep.subr.bf16.mxu0 0
      %2586 = vmatpush1.bf16.xpose.msra.mxu0 %v2580
      %2587 = vmatprep.subr.bf16.mxu0 0
      %2588 = vmatpush1.bf16.xpose.msra.mxu0 %v2583
      %2589 = vmatprep.subr.bf16.mxu0 0
      %2590 = vmatpush1.bf16.xpose.msra.mxu0 0
      %2591 = vmatprep.subr.bf16.mxu0 0
      %2592 = vmatpush1.bf16.xpose.msra.mxu0 0
      %2593 = vmatprep.subr.bf16.mxu0 0
      %2594 = vmatpush1.bf16.xpose.msra.mxu0 0
      %2595 = vmatprep.subr.bf16.mxu0 0
      %2596 = vmatpush1.bf16.xpose.msra.mxu0 0
      %2597 = vmatprep.subr.bf16.mxu0 0
      %2598 = vmatpush1.bf16.xpose.msra.mxu0 0
      %2599 = vmatprep.subr.bf16.mxu0 0
      %2600 = vmatpush1.bf16.xpose.msra.mxu0 0
      %2601 = vmatprep.subr.bf16.mxu0 0
      %2602 = vmatpush1.bf16.xpose.msra.mxu0 0
      %2603 = vmatprep.subr.bf16.mxu0 0
      %2604 = vmatpush1.bf16.xpose.msra.mxu0 0
      %2605 = vmatprep.subr.bf16.mxu0 0
      %2606 = vmatpush1.bf16.xpose.msra.mxu0 0
      %2607 = vmatprep.subr.bf16.mxu0 0
      %2608 = vmatpush1.bf16.xpose.msra.mxu0 0
      %2609 = vmatprep.subr.bf16.mxu0 0
      %2610 = vmatpush1.bf16.xpose.msra.mxu0 0
      %2611 = vmatprep.subr.bf16.mxu0 0
      %2612 = vmatpush1.bf16.xpose.msra.mxu0 0
      %2613 = vmatprep.subr.bf16.mxu0 0
      %2614 = vmatpush1.bf16.xpose.msra.mxu0 0
      %2615 = vmatprep.subr.bf16.mxu0 0
      %2616 = vmatpush1.bf16.xpose.msra.mxu0 0
      %2617 = vmatprep.mubr.bf16.mxu0 0
      %2618 = vmatmul.mubr.bf16.gmra.mrb[0].mxu0 %v2574
      %v2619 = vpop.f32.mrb[0].mxu0
      %v2620 = vadd.f32 0.0, %v2619
      %v2621 = vpop.f32.mrb[0].mxu0
      %v2622 = vpop.f32.mrb[0].mxu0
      %v2623 = vadd.f32 0.0, %v2622
      %v2624 = vpop.f32.mrb[0].mxu0
      %2625 = vmatprep.mubr.bf16.mxu0 0
      %2626 = vmatmul.mubr.bf16.gmra.mrb[0].mxu0 %v2577
      %v2627 = vpop.f32.mrb[0].mxu0
      %v2628 = vadd.f32 0.0, %v2627
      %v2629 = vpop.f32.mrb[0].mxu0
      %v2630 = vpop.f32.mrb[0].mxu0
      %v2631 = vadd.f32 0.0, %v2630
      %v2632 = vpop.f32.mrb[0].mxu0
      %2633 = vdwg.mxu0
      %v2634 = vsel %vm2559, %v2620, -1.767767e+19
      %v2635 = vsel %vm2560, %v2623, -1.767767e+19
      %v2636 = vsel %vm2561, %v2628, -1.767767e+19
      %v2637 = vsel %vm2562, %v2631, -1.767767e+19
      %v2638 = vsel %vm1134, %v2634, -inf
      %2639 = vmax.xlane.f32.xlu0 %v2638
      %v2640 = vpop.xlane.xlu0 %2639
      %v2641 = vsel %vm1134, %v2635, -inf
      %2642 = vmax.xlane.f32.xlu0 %v2641
      %v2643 = vpop.xlane.xlu0 %2642
      %v2644 = vsel %vm1134, %v2636, -inf
      %2645 = vmax.xlane.f32.xlu0 %v2644
      %v2646 = vpop.xlane.xlu0 %2645
      %v2647 = vsel %vm1134, %v2637, -inf
      %2648 = vmax.xlane.f32.xlu0 %v2647
      %v2649 = vpop.xlane.xlu0 %2648
      %v2650 = vsub.f32 %v2634, %v2640
      %v2651 = vsub.f32 %v2635, %v2643
      %v2652 = vsub.f32 %v2636, %v2646
      %v2653 = vsub.f32 %v2637, %v2649
      %v2654 = vmul.f32 %v2650, 1.442695
      %v2655 = vpow.pop %v2654
      %v2656 = vmul.f32 %v2651, 1.442695
      %v2657 = vpow.pop %v2656
      %v2658 = vmul.f32 %v2652, 1.442695
      %v2659 = vpow.pop %v2658
      %v2660 = vmul.f32 %v2653, 1.442695
      %v2661 = vpow.pop %v2660
      %v2662 = vsel %vm1134, %v2655, 0.0
      %2663 = vadd.xlane.f32.xlu0 %v2662
      %v2664 = vpop.xlane.xlu0 %2663
      %v2665 = vsel %vm1134, %v2657, 0.0
      %2666 = vadd.xlane.f32.xlu0 %v2665
      %v2667 = vpop.xlane.xlu0 %2666
      %v2668 = vsel %vm1134, %v2659, 0.0
      %2669 = vadd.xlane.f32.xlu0 %v2668
      %v2670 = vpop.xlane.xlu0 %2669
      %v2671 = vsel %vm1134, %v2661, 0.0
      %2672 = vadd.xlane.f32.xlu0 %v2671
      %v2673 = vpop.xlane.xlu0 %2672
      %v2674 = vrcp.pop %v2664
      %v2675 = vrcp.pop %v2667
      %v2676 = vrcp.pop %v2670
      %v2677 = vrcp.pop %v2673
      %v2678 = vmul.f32 %v2655, %v2674
      %v2679 = vmul.f32 %v2657, %v2675
      %v2680 = vmul.f32 %v2659, %v2676
      %v2681 = vmul.f32 %v2661, %v2677
      %v2682 = vpack.c.bf16 %v2679, %v2678
      %v2683 = vpack.c.bf16 %v2681, %v2680
      %v2685 = vsel %vm1134, %v2682, 0
      %v2688 = vsel %vm1134, %v2683, 0
      %2690 = vmatprep.subr.bf16.mxu0 0
      %2691 = vmatpush1.bf16.msra.mxu0 %v2571
      %2692 = vmatprep.subr.bf16.mxu0 0
      %2693 = vmatpush1.bf16.msra.mxu0 %v2572
      %2694 = vmatprep.subr.bf16.mxu0 0
      %2695 = vmatpush1.bf16.msra.mxu0 0
      %2696 = vmatprep.subr.bf16.mxu0 0
      %2697 = vmatpush1.bf16.msra.mxu0 0
      %2698 = vmatprep.subr.bf16.mxu0 0
      %2699 = vmatpush1.bf16.msra.mxu0 0
      %2700 = vmatprep.subr.bf16.mxu0 0
      %2701 = vmatpush1.bf16.msra.mxu0 0
      %2702 = vmatprep.subr.bf16.mxu0 0
      %2703 = vmatpush1.bf16.msra.mxu0 0
      %2704 = vmatprep.subr.bf16.mxu0 0
      %2705 = vmatpush1.bf16.msra.mxu0 0
      %2706 = vmatprep.subr.bf16.mxu0 0
      %2707 = vmatpush1.bf16.msra.mxu0 0
      %2708 = vmatprep.subr.bf16.mxu0 0
      %2709 = vmatpush1.bf16.msra.mxu0 0
      %2710 = vmatprep.subr.bf16.mxu0 0
      %2711 = vmatpush1.bf16.msra.mxu0 0
      %2712 = vmatprep.subr.bf16.mxu0 0
      %2713 = vmatpush1.bf16.msra.mxu0 0
      %2714 = vmatprep.subr.bf16.mxu0 0
      %2715 = vmatpush1.bf16.msra.mxu0 0
      %2716 = vmatprep.subr.bf16.mxu0 0
      %2717 = vmatpush1.bf16.msra.mxu0 0
      %2718 = vmatprep.subr.bf16.mxu0 0
      %2719 = vmatpush1.bf16.msra.mxu0 0
      %2720 = vmatprep.subr.bf16.mxu0 0
      %2721 = vmatpush1.bf16.msra.mxu0 0
      %2722 = vmatprep.mubr.bf16.mxu0 0
      %2723 = vmatmul.mubr.bf16.gmra.mrb[0].mxu0 %v2685
      %v2724 = vpop.f32.mrb[0].mxu0
      %v2725 = vadd.f32 0.0, %v2724
      %v2726 = vpop.f32.mrb[0].mxu0
      %v2727 = vpop.f32.mrb[0].mxu0
      %v2728 = vadd.f32 0.0, %v2727
      %v2729 = vpop.f32.mrb[0].mxu0
      %2730 = vmatprep.mubr.bf16.mxu0 0
      %2731 = vmatmul.mubr.bf16.gmra.mrb[0].mxu0 %v2688
      %v2732 = vpop.f32.mrb[0].mxu0
      %v2733 = vadd.f32 0.0, %v2732
      %v2734 = vpop.f32.mrb[0].mxu0
      %v2735 = vpop.f32.mrb[0].mxu0
      %v2736 = vadd.f32 0.0, %v2735
      %v2737 = vpop.f32.mrb[0].mxu0
      %2738 = vdwg.mxu0
      %2741 = vrot.lane.b32.xlu0 %v2567, 120
      %v2742 = vpop.permute.xlu0 %2741
      %2743 = vrot.lane.b32.xlu0 %v2568, 120
      %v2744 = vpop.permute.xlu0 %2743
      %2747 = vrot.lane.b32.xlu0 %v2569, 120
      %v2748 = vpop.permute.xlu0 %2747
      %2749 = vrot.lane.b32.xlu0 %v2570, 120
      %v2750 = vpop.permute.xlu0 %2749
      %v2752 = vsel %vm1309, %v2742, 0
      %v2755 = vsel %vm1309, %v2744, 0
      %v2758 = vsel %vm1309, %v2748, 0
      %v2761 = vsel %vm1309, %v2750, 0
      %2763 = vmatprep.subr.bf16.mxu0 0
      %2764 = vmatpush1.bf16.xpose.msra.mxu0 %v2758
      %2765 = vmatprep.subr.bf16.mxu0 0
      %2766 = vmatpush1.bf16.xpose.msra.mxu0 %v2761
      %2767 = vmatprep.subr.bf16.mxu0 0
      %2768 = vmatpush1.bf16.xpose.msra.mxu0 0
      %2769 = vmatprep.subr.bf16.mxu0 0
      %2770 = vmatpush1.bf16.xpose.msra.mxu0 0
      %2771 = vmatprep.subr.bf16.mxu0 0
      %2772 = vmatpush1.bf16.xpose.msra.mxu0 0
      %2773 = vmatprep.subr.bf16.mxu0 0
      %2774 = vmatpush1.bf16.xpose.msra.mxu0 0
      %2775 = vmatprep.subr.bf16.mxu0 0
      %2776 = vmatpush1.bf16.xpose.msra.mxu0 0
      %2777 = vmatprep.subr.bf16.mxu0 0
      %2778 = vmatpush1.bf16.xpose.msra.mxu0 0
      %2779 = vmatprep.subr.bf16.mxu0 0
      %2780 = vmatpush1.bf16.xpose.msra.mxu0 0
      %2781 = vmatprep.subr.bf16.mxu0 0
      %2782 = vmatpush1.bf16.xpose.msra.mxu0 0
      %2783 = vmatprep.subr.bf16.mxu0 0
      %2784 = vmatpush1.bf16.xpose.msra.mxu0 0
      %2785 = vmatprep.subr.bf16.mxu0 0
      %2786 = vmatpush1.bf16.xpose.msra.mxu0 0
      %2787 = vmatprep.subr.bf16.mxu0 0
      %2788 = vmatpush1.bf16.xpose.msra.mxu0 0
      %2789 = vmatprep.subr.bf16.mxu0 0
      %2790 = vmatpush1.bf16.xpose.msra.mxu0 0
      %2791 = vmatprep.subr.bf16.mxu0 0
      %2792 = vmatpush1.bf16.xpose.msra.mxu0 0
      %2793 = vmatprep.subr.bf16.mxu0 0
      %2794 = vmatpush1.bf16.xpose.msra.mxu0 0
      %2795 = vmatprep.mubr.bf16.mxu0 0
      %2796 = vmatmul.mubr.bf16.gmra.mrb[0].mxu0 %v2752
      %v2797 = vpop.f32.mrb[0].mxu0
      %v2798 = vadd.f32 0.0, %v2797
      %v2799 = vpop.f32.mrb[0].mxu0
      %v2800 = vpop.f32.mrb[0].mxu0
      %v2801 = vadd.f32 0.0, %v2800
      %v2802 = vpop.f32.mrb[0].mxu0
      %2803 = vmatprep.mubr.bf16.mxu0 0
      %2804 = vmatmul.mubr.bf16.gmra.mrb[0].mxu0 %v2755
      %v2805 = vpop.f32.mrb[0].mxu0
      %v2806 = vadd.f32 0.0, %v2805
      %v2807 = vpop.f32.mrb[0].mxu0
      %v2808 = vpop.f32.mrb[0].mxu0
      %v2809 = vadd.f32 0.0, %v2808
      %v2810 = vpop.f32.mrb[0].mxu0
      %2811 = vdwg.mxu0
      %v2812 = vsel %vm2559, %v2798, -1.767767e+19
      %v2813 = vsel %vm2560, %v2801, -1.767767e+19
      %v2814 = vsel %vm2561, %v2806, -1.767767e+19
      %v2815 = vsel %vm2562, %v2809, -1.767767e+19
      %v2816 = vsel %vm1134, %v2812, -inf
      %2817 = vmax.xlane.f32.xlu0 %v2816
      %v2818 = vpop.xlane.xlu0 %2817
      %v2819 = vsel %vm1134, %v2813, -inf
      %2820 = vmax.xlane.f32.xlu0 %v2819
      %v2821 = vpop.xlane.xlu0 %2820
      %v2822 = vsel %vm1134, %v2814, -inf
      %2823 = vmax.xlane.f32.xlu0 %v2822
      %v2824 = vpop.xlane.xlu0 %2823
      %v2825 = vsel %vm1134, %v2815, -inf
      %2826 = vmax.xlane.f32.xlu0 %v2825
      %v2827 = vpop.xlane.xlu0 %2826
      %v2828 = vsub.f32 %v2812, %v2818
      %v2829 = vsub.f32 %v2813, %v2821
      %v2830 = vsub.f32 %v2814, %v2824
      %v2831 = vsub.f32 %v2815, %v2827
      %v2832 = vmul.f32 %v2828, 1.442695
      %v2833 = vpow.pop %v2832
      %v2834 = vmul.f32 %v2829, 1.442695
      %v2835 = vpow.pop %v2834
      %v2836 = vmul.f32 %v2830, 1.442695
      %v2837 = vpow.pop %v2836
      %v2838 = vmul.f32 %v2831, 1.442695
      %v2839 = vpow.pop %v2838
      %v2840 = vsel %vm1134, %v2833, 0.0
      %2841 = vadd.xlane.f32.xlu0 %v2840
      %v2842 = vpop.xlane.xlu0 %2841
      %v2843 = vsel %vm1134, %v2835, 0.0
      %2844 = vadd.xlane.f32.xlu0 %v2843
      %v2845 = vpop.xlane.xlu0 %2844
      %v2846 = vsel %vm1134, %v2837, 0.0
      %2847 = vadd.xlane.f32.xlu0 %v2846
      %v2848 = vpop.xlane.xlu0 %2847
      %v2849 = vsel %vm1134, %v2839, 0.0
      %2850 = vadd.xlane.f32.xlu0 %v2849
      %v2851 = vpop.xlane.xlu0 %2850
      %v2852 = vrcp.pop %v2842
      %v2853 = vrcp.pop %v2845
      %v2854 = vrcp.pop %v2848
      %v2855 = vrcp.pop %v2851
      %v2856 = vmul.f32 %v2833, %v2852
      %v2857 = vmul.f32 %v2835, %v2853
      %v2858 = vmul.f32 %v2837, %v2854
      %v2859 = vmul.f32 %v2839, %v2855
      %v2860 = vpack.c.bf16 %v2857, %v2856
      %v2861 = vpack.c.bf16 %v2859, %v2858
      %2864 = vrot.lane.b32.xlu0 %v2571, 120
      %v2865 = vpop.permute.xlu0 %2864
      %2866 = vrot.lane.b32.xlu0 %v2572, 120
      %v2867 = vpop.permute.xlu0 %2866
      %v2871 = vsel %vm1134, %v2860, 0
      %v2874 = vsel %vm1134, %v2861, 0
      %2876 = vmatprep.subr.bf16.mxu0 0
      %2877 = vmatpush1.bf16.msra.mxu0 %v2865
      %2878 = vmatprep.subr.bf16.mxu0 0
      %2879 = vmatpush1.bf16.msra.mxu0 %v2867
      %2880 = vmatprep.subr.bf16.mxu0 0
      %2881 = vmatpush1.bf16.msra.mxu0 0
      %2882 = vmatprep.subr.bf16.mxu0 0
      %2883 = vmatpush1.bf16.msra.mxu0 0
      %2884 = vmatprep.subr.bf16.mxu0 0
      %2885 = vmatpush1.bf16.msra.mxu0 0
      %2886 = vmatprep.subr.bf16.mxu0 0
      %2887 = vmatpush1.bf16.msra.mxu0 0
      %2888 = vmatprep.subr.bf16.mxu0 0
      %2889 = vmatpush1.bf16.msra.mxu0 0
      %2890 = vmatprep.subr.bf16.mxu0 0
      %2891 = vmatpush1.bf16.msra.mxu0 0
      %2892 = vmatprep.subr.bf16.mxu0 0
      %2893 = vmatpush1.bf16.msra.mxu0 0
      %2894 = vmatprep.subr.bf16.mxu0 0
      %2895 = vmatpush1.bf16.msra.mxu0 0
      %2896 = vmatprep.subr.bf16.mxu0 0
      %2897 = vmatpush1.bf16.msra.mxu0 0
      %2898 = vmatprep.subr.bf16.mxu0 0
      %2899 = vmatpush1.bf16.msra.mxu0 0
      %2900 = vmatprep.subr.bf16.mxu0 0
      %2901 = vmatpush1.bf16.msra.mxu0 0
      %2902 = vmatprep.subr.bf16.mxu0 0
      %2903 = vmatpush1.bf16.msra.mxu0 0
      %2904 = vmatprep.subr.bf16.mxu0 0
      %2905 = vmatpush1.bf16.msra.mxu0 0
      %2906 = vmatprep.subr.bf16.mxu0 0
      %2907 = vmatpush1.bf16.msra.mxu0 0
      %2908 = vmatprep.mubr.bf16.mxu0 0
      %2909 = vmatmul.mubr.bf16.gmra.mrb[0].mxu0 %v2871
      %v2910 = vpop.f32.mrb[0].mxu0
      %v2911 = vadd.f32 0.0, %v2910
      %v2912 = vpop.f32.mrb[0].mxu0
      %v2913 = vpop.f32.mrb[0].mxu0
      %v2914 = vadd.f32 0.0, %v2913
      %v2915 = vpop.f32.mrb[0].mxu0
      %2916 = vmatprep.mubr.bf16.mxu0 0
      %2917 = vmatmul.mubr.bf16.gmra.mrb[0].mxu0 %v2874
      %v2918 = vpop.f32.mrb[0].mxu0
      %v2919 = vadd.f32 0.0, %v2918
      %v2920 = vpop.f32.mrb[0].mxu0
      %v2921 = vpop.f32.mrb[0].mxu0
      %v2922 = vadd.f32 0.0, %v2921
      %v2923 = vpop.f32.mrb[0].mxu0
      %2924 = vdwg.mxu0
      %2925 = vrot.lane.b32.xlu0 %v2567, 112
      %v2926 = vpop.permute.xlu0 %2925
      %2927 = vrot.lane.b32.xlu0 %v2568, 112
      %v2928 = vpop.permute.xlu0 %2927
      %2929 = vrot.lane.b32.xlu0 %v2569, 112
      %v2930 = vpop.permute.xlu0 %2929
      %2931 = vrot.lane.b32.xlu0 %v2570, 112
      %v2932 = vpop.permute.xlu0 %2931
      %v2934 = vsel %vm1309, %v2926, 0
      %v2937 = vsel %vm1309, %v2928, 0
      %v2940 = vsel %vm1309, %v2930, 0
      %v2943 = vsel %vm1309, %v2932, 0
      %2945 = vmatprep.subr.bf16.mxu0 0
      %2946 = vmatpush1.bf16.xpose.msra.mxu0 %v2940
      %2947 = vmatprep.subr.bf16.mxu0 0
      %2948 = vmatpush1.bf16.xpose.msra.mxu0 %v2943
      %2949 = vmatprep.subr.bf16.mxu0 0
      %2950 = vmatpush1.bf16.xpose.msra.mxu0 0
      %2951 = vmatprep.subr.bf16.mxu0 0
      %2952 = vmatpush1.bf16.xpose.msra.mxu0 0
      %2953 = vmatprep.subr.bf16.mxu0 0
      %2954 = vmatpush1.bf16.xpose.msra.mxu0 0
      %2955 = vmatprep.subr.bf16.mxu0 0
      %2956 = vmatpush1.bf16.xpose.msra.mxu0 0
      %2957 = vmatprep.subr.bf16.mxu0 0
      %2958 = vmatpush1.bf16.xpose.msra.mxu0 0
      %2959 = vmatprep.subr.bf16.mxu0 0
      %2960 = vmatpush1.bf16.xpose.msra.mxu0 0
      %2961 = vmatprep.subr.bf16.mxu0 0
      %2962 = vmatpush1.bf16.xpose.msra.mxu0 0
      %2963 = vmatprep.subr.bf16.mxu0 0
      %2964 = vmatpush1.bf16.xpose.msra.mxu0 0
      %2965 = vmatprep.subr.bf16.mxu0 0
      %2966 = vmatpush1.bf16.xpose.msra.mxu0 0
      %2967 = vmatprep.subr.bf16.mxu0 0
      %2968 = vmatpush1.bf16.xpose.msra.mxu0 0
      %2969 = vmatprep.subr.bf16.mxu0 0
      %2970 = vmatpush1.bf16.xpose.msra.mxu0 0
      %2971 = vmatprep.subr.bf16.mxu0 0
      %2972 = vmatpush1.bf16.xpose.msra.mxu0 0
      %2973 = vmatprep.subr.bf16.mxu0 0
      %2974 = vmatpush1.bf16.xpose.msra.mxu0 0
      %2975 = vmatprep.subr.bf16.mxu0 0
      %2976 = vmatpush1.bf16.xpose.msra.mxu0 0
      %2977 = vmatprep.mubr.bf16.mxu0 0
      %2978 = vmatmul.mubr.bf16.gmra.mrb[0].mxu0 %v2934
      %v2979 = vpop.f32.mrb[0].mxu0
      %v2980 = vadd.f32 0.0, %v2979
      %v2981 = vpop.f32.mrb[0].mxu0
      %v2982 = vpop.f32.mrb[0].mxu0
      %v2983 = vadd.f32 0.0, %v2982
      %v2984 = vpop.f32.mrb[0].mxu0
      %2985 = vmatprep.mubr.bf16.mxu0 0
      %2986 = vmatmul.mubr.bf16.gmra.mrb[0].mxu0 %v2937
      %v2987 = vpop.f32.mrb[0].mxu0
      %v2988 = vadd.f32 0.0, %v2987
      %v2989 = vpop.f32.mrb[0].mxu0
      %v2990 = vpop.f32.mrb[0].mxu0
      %v2991 = vadd.f32 0.0, %v2990
      %v2992 = vpop.f32.mrb[0].mxu0
      %2993 = vdwg.mxu0
      %v2994 = vsel %vm2559, %v2980, -1.767767e+19
      %v2995 = vsel %vm2560, %v2983, -1.767767e+19
      %v2996 = vsel %vm2561, %v2988, -1.767767e+19
      %v2997 = vsel %vm2562, %v2991, -1.767767e+19
      %v2998 = vsel %vm1134, %v2994, -inf
      %2999 = vmax.xlane.f32.xlu0 %v2998
      %v3000 = vpop.xlane.xlu0 %2999
      %v3001 = vsel %vm1134, %v2995, -inf
      %3002 = vmax.xlane.f32.xlu0 %v3001
      %v3003 = vpop.xlane.xlu0 %3002
      %v3004 = vsel %vm1134, %v2996, -inf
      %3005 = vmax.xlane.f32.xlu0 %v3004
      %v3006 = vpop.xlane.xlu0 %3005
      %v3007 = vsel %vm1134, %v2997, -inf
      %3008 = vmax.xlane.f32.xlu0 %v3007
      %v3009 = vpop.xlane.xlu0 %3008
      %v3010 = vsub.f32 %v2994, %v3000
      %v3011 = vsub.f32 %v2995, %v3003
      %v3012 = vsub.f32 %v2996, %v3006
      %v3013 = vsub.f32 %v2997, %v3009
      %v3014 = vmul.f32 %v3010, 1.442695
      %v3015 = vpow.pop %v3014
      %v3016 = vmul.f32 %v3011, 1.442695
      %v3017 = vpow.pop %v3016
      %v3018 = vmul.f32 %v3012, 1.442695
      %v3019 = vpow.pop %v3018
      %v3020 = vmul.f32 %v3013, 1.442695
      %v3021 = vpow.pop %v3020
      %v3022 = vsel %vm1134, %v3015, 0.0
      %3023 = vadd.xlane.f32.xlu0 %v3022
      %v3024 = vpop.xlane.xlu0 %3023
      %v3025 = vsel %vm1134, %v3017, 0.0
      %3026 = vadd.xlane.f32.xlu0 %v3025
      %v3027 = vpop.xlane.xlu0 %3026
      %v3028 = vsel %vm1134, %v3019, 0.0
      %3029 = vadd.xlane.f32.xlu0 %v3028
      %v3030 = vpop.xlane.xlu0 %3029
      %v3031 = vsel %vm1134, %v3021, 0.0
      %3032 = vadd.xlane.f32.xlu0 %v3031
      %v3033 = vpop.xlane.xlu0 %3032
      %v3034 = vrcp.pop %v3024
      %v3035 = vrcp.pop %v3027
      %v3036 = vrcp.pop %v3030
      %v3037 = vrcp.pop %v3033
      %v3038 = vmul.f32 %v3015, %v3034
      %v3039 = vmul.f32 %v3017, %v3035
      %v3040 = vmul.f32 %v3019, %v3036
      %v3041 = vmul.f32 %v3021, %v3037
      %v3042 = vpack.c.bf16 %v3039, %v3038
      %v3043 = vpack.c.bf16 %v3041, %v3040
      %3044 = vrot.lane.b32.xlu0 %v2571, 112
      %v3045 = vpop.permute.xlu0 %3044
      %3046 = vrot.lane.b32.xlu0 %v2572, 112
      %v3047 = vpop.permute.xlu0 %3046
      %v3051 = vsel %vm1134, %v3042, 0
      %v3054 = vsel %vm1134, %v3043, 0
      %3056 = vmatprep.subr.bf16.mxu0 0
      %3057 = vmatpush1.bf16.msra.mxu0 %v3045
      %3058 = vmatprep.subr.bf16.mxu0 0
      %3059 = vmatpush1.bf16.msra.mxu0 %v3047
      %3060 = vmatprep.subr.bf16.mxu0 0
      %3061 = vmatpush1.bf16.msra.mxu0 0
      %3062 = vmatprep.subr.bf16.mxu0 0
      %3063 = vmatpush1.bf16.msra.mxu0 0
      %3064 = vmatprep.subr.bf16.mxu0 0
      %3065 = vmatpush1.bf16.msra.mxu0 0
      %3066 = vmatprep.subr.bf16.mxu0 0
      %3067 = vmatpush1.bf16.msra.mxu0 0
      %3068 = vmatprep.subr.bf16.mxu0 0
      %3069 = vmatpush1.bf16.msra.mxu0 0
      %3070 = vmatprep.subr.bf16.mxu0 0
      %3071 = vmatpush1.bf16.msra.mxu0 0
      %3072 = vmatprep.subr.bf16.mxu0 0
      %3073 = vmatpush1.bf16.msra.mxu0 0
      %3074 = vmatprep.subr.bf16.mxu0 0
      %3075 = vmatpush1.bf16.msra.mxu0 0
      %3076 = vmatprep.subr.bf16.mxu0 0
      %3077 = vmatpush1.bf16.msra.mxu0 0
      %3078 = vmatprep.subr.bf16.mxu0 0
      %3079 = vmatpush1.bf16.msra.mxu0 0
      %3080 = vmatprep.subr.bf16.mxu0 0
      %3081 = vmatpush1.bf16.msra.mxu0 0
      %3082 = vmatprep.subr.bf16.mxu0 0
      %3083 = vmatpush1.bf16.msra.mxu0 0
      %3084 = vmatprep.subr.bf16.mxu0 0
      %3085 = vmatpush1.bf16.msra.mxu0 0
      %3086 = vmatprep.subr.bf16.mxu0 0
      %3087 = vmatpush1.bf16.msra.mxu0 0
      %3088 = vmatprep.mubr.bf16.mxu0 0
      %3089 = vmatmul.mubr.bf16.gmra.mrb[0].mxu0 %v3051
      %v3090 = vpop.f32.mrb[0].mxu0
      %v3091 = vadd.f32 0.0, %v3090
      %v3092 = vpop.f32.mrb[0].mxu0
      %v3093 = vpop.f32.mrb[0].mxu0
      %v3094 = vadd.f32 0.0, %v3093
      %v3095 = vpop.f32.mrb[0].mxu0
      %3096 = vmatprep.mubr.bf16.mxu0 0
      %3097 = vmatmul.mubr.bf16.gmra.mrb[0].mxu0 %v3054
      %v3098 = vpop.f32.mrb[0].mxu0
      %v3099 = vadd.f32 0.0, %v3098
      %v3100 = vpop.f32.mrb[0].mxu0
      %v3101 = vpop.f32.mrb[0].mxu0
      %v3102 = vadd.f32 0.0, %v3101
      %v3103 = vpop.f32.mrb[0].mxu0
      %3104 = vdwg.mxu0
      %3105 = vrot.lane.b32.xlu0 %v2567, 104
      %v3106 = vpop.permute.xlu0 %3105
      %3107 = vrot.lane.b32.xlu0 %v2568, 104
      %v3108 = vpop.permute.xlu0 %3107
      %3109 = vrot.lane.b32.xlu0 %v2569, 104
      %v3110 = vpop.permute.xlu0 %3109
      %3111 = vrot.lane.b32.xlu0 %v2570, 104
      %v3112 = vpop.permute.xlu0 %3111
      %v3114 = vsel %vm1309, %v3106, 0
      %v3117 = vsel %vm1309, %v3108, 0
      %v3120 = vsel %vm1309, %v3110, 0
      %v3123 = vsel %vm1309, %v3112, 0
      %3125 = vmatprep.subr.bf16.mxu0 0
      %3126 = vmatpush1.bf16.xpose.msra.mxu0 %v3120
      %3127 = vmatprep.subr.bf16.mxu0 0
      %3128 = vmatpush1.bf16.xpose.msra.mxu0 %v3123
      %3129 = vmatprep.subr.bf16.mxu0 0
      %3130 = vmatpush1.bf16.xpose.msra.mxu0 0
      %3131 = vmatprep.subr.bf16.mxu0 0
      %3132 = vmatpush1.bf16.xpose.msra.mxu0 0
      %3133 = vmatprep.subr.bf16.mxu0 0
      %3134 = vmatpush1.bf16.xpose.msra.mxu0 0
      %3135 = vmatprep.subr.bf16.mxu0 0
      %3136 = vmatpush1.bf16.xpose.msra.mxu0 0
      %3137 = vmatprep.subr.bf16.mxu0 0
      %3138 = vmatpush1.bf16.xpose.msra.mxu0 0
      %3139 = vmatprep.subr.bf16.mxu0 0
      %3140 = vmatpush1.bf16.xpose.msra.mxu0 0
      %3141 = vmatprep.subr.bf16.mxu0 0
      %3142 = vmatpush1.bf16.xpose.msra.mxu0 0
      %3143 = vmatprep.subr.bf16.mxu0 0
      %3144 = vmatpush1.bf16.xpose.msra.mxu0 0
      %3145 = vmatprep.subr.bf16.mxu0 0
      %3146 = vmatpush1.bf16.xpose.msra.mxu0 0
      %3147 = vmatprep.subr.bf16.mxu0 0
      %3148 = vmatpush1.bf16.xpose.msra.mxu0 0
      %3149 = vmatprep.subr.bf16.mxu0 0
      %3150 = vmatpush1.bf16.xpose.msra.mxu0 0
      %3151 = vmatprep.subr.bf16.mxu0 0
      %3152 = vmatpush1.bf16.xpose.msra.mxu0 0
      %3153 = vmatprep.subr.bf16.mxu0 0
      %3154 = vmatpush1.bf16.xpose.msra.mxu0 0
      %3155 = vmatprep.subr.bf16.mxu0 0
      %3156 = vmatpush1.bf16.xpose.msra.mxu0 0
      %3157 = vmatprep.mubr.bf16.mxu0 0
      %3158 = vmatmul.mubr.bf16.gmra.mrb[0].mxu0 %v3114
      %v3159 = vpop.f32.mrb[0].mxu0
      %v3160 = vadd.f32 0.0, %v3159
      %v3161 = vpop.f32.mrb[0].mxu0
      %v3162 = vpop.f32.mrb[0].mxu0
      %v3163 = vadd.f32 0.0, %v3162
      %v3164 = vpop.f32.mrb[0].mxu0
      %3165 = vmatprep.mubr.bf16.mxu0 0
      %3166 = vmatmul.mubr.bf16.gmra.mrb[0].mxu0 %v3117
      %v3167 = vpop.f32.mrb[0].mxu0
      %v3168 = vadd.f32 0.0, %v3167
      %v3169 = vpop.f32.mrb[0].mxu0
      %v3170 = vpop.f32.mrb[0].mxu0
      %v3171 = vadd.f32 0.0, %v3170
      %v3172 = vpop.f32.mrb[0].mxu0
      %3173 = vdwg.mxu0
      %v3174 = vsel %vm2559, %v3160, -1.767767e+19
      %v3175 = vsel %vm2560, %v3163, -1.767767e+19
      %v3176 = vsel %vm2561, %v3168, -1.767767e+19
      %v3177 = vsel %vm2562, %v3171, -1.767767e+19
      %v3178 = vsel %vm1134, %v3174, -inf
      %3179 = vmax.xlane.f32.xlu0 %v3178
      %v3180 = vpop.xlane.xlu0 %3179
      %v3181 = vsel %vm1134, %v3175, -inf
      %3182 = vmax.xlane.f32.xlu0 %v3181
      %v3183 = vpop.xlane.xlu0 %3182
      %v3184 = vsel %vm1134, %v3176, -inf
      %3185 = vmax.xlane.f32.xlu0 %v3184
      %v3186 = vpop.xlane.xlu0 %3185
      %v3187 = vsel %vm1134, %v3177, -inf
      %3188 = vmax.xlane.f32.xlu0 %v3187
      %v3189 = vpop.xlane.xlu0 %3188
      %v3190 = vsub.f32 %v3174, %v3180
      %v3191 = vsub.f32 %v3175, %v3183
      %v3192 = vsub.f32 %v3176, %v3186
      %v3193 = vsub.f32 %v3177, %v3189
      %v3194 = vmul.f32 %v3190, 1.442695
      %v3195 = vpow.pop %v3194
      %v3196 = vmul.f32 %v3191, 1.442695
      %v3197 = vpow.pop %v3196
      %v3198 = vmul.f32 %v3192, 1.442695
      %v3199 = vpow.pop %v3198
      %v3200 = vmul.f32 %v3193, 1.442695
      %v3201 = vpow.pop %v3200
      %v3202 = vsel %vm1134, %v3195, 0.0
      %3203 = vadd.xlane.f32.xlu0 %v3202
      %v3204 = vpop.xlane.xlu0 %3203
      %v3205 = vsel %vm1134, %v3197, 0.0
      %3206 = vadd.xlane.f32.xlu0 %v3205
      %v3207 = vpop.xlane.xlu0 %3206
      %v3208 = vsel %vm1134, %v3199, 0.0
      %3209 = vadd.xlane.f32.xlu0 %v3208
      %v3210 = vpop.xlane.xlu0 %3209
      %v3211 = vsel %vm1134, %v3201, 0.0
      %3212 = vadd.xlane.f32.xlu0 %v3211
      %v3213 = vpop.xlane.xlu0 %3212
      %v3214 = vrcp.pop %v3204
      %v3215 = vrcp.pop %v3207
      %v3216 = vrcp.pop %v3210
      %v3217 = vrcp.pop %v3213
      %v3218 = vmul.f32 %v3195, %v3214
      %v3219 = vmul.f32 %v3197, %v3215
      %v3220 = vmul.f32 %v3199, %v3216
      %v3221 = vmul.f32 %v3201, %v3217
      %v3222 = vpack.c.bf16 %v3219, %v3218
      %v3223 = vpack.c.bf16 %v3221, %v3220
      %3224 = vrot.lane.b32.xlu0 %v2571, 104
      %v3225 = vpop.permute.xlu0 %3224
      %3226 = vrot.lane.b32.xlu0 %v2572, 104
      %v3227 = vpop.permute.xlu0 %3226
      %v3231 = vsel %vm1134, %v3222, 0
      %v3234 = vsel %vm1134, %v3223, 0
      %3236 = vmatprep.subr.bf16.mxu0 0
      %3237 = vmatpush1.bf16.msra.mxu0 %v3225
      %3238 = vmatprep.subr.bf16.mxu0 0
      %3239 = vmatpush1.bf16.msra.mxu0 %v3227
      %3240 = vmatprep.subr.bf16.mxu0 0
      %3241 = vmatpush1.bf16.msra.mxu0 0
      %3242 = vmatprep.subr.bf16.mxu0 0
      %3243 = vmatpush1.bf16.msra.mxu0 0
      %3244 = vmatprep.subr.bf16.mxu0 0
      %3245 = vmatpush1.bf16.msra.mxu0 0
      %3246 = vmatprep.subr.bf16.mxu0 0
      %3247 = vmatpush1.bf16.msra.mxu0 0
      %3248 = vmatprep.subr.bf16.mxu0 0
      %3249 = vmatpush1.bf16.msra.mxu0 0
      %3250 = vmatprep.subr.bf16.mxu0 0
      %3251 = vmatpush1.bf16.msra.mxu0 0
      %3252 = vmatprep.subr.bf16.mxu0 0
      %3253 = vmatpush1.bf16.msra.mxu0 0
      %3254 = vmatprep.subr.bf16.mxu0 0
      %3255 = vmatpush1.bf16.msra.mxu0 0
      %3256 = vmatprep.subr.bf16.mxu0 0
      %3257 = vmatpush1.bf16.msra.mxu0 0
      %3258 = vmatprep.subr.bf16.mxu0 0
      %3259 = vmatpush1.bf16.msra.mxu0 0
      %3260 = vmatprep.subr.bf16.mxu0 0
      %3261 = vmatpush1.bf16.msra.mxu0 0
      %3262 = vmatprep.subr.bf16.mxu0 0
      %3263 = vmatpush1.bf16.msra.mxu0 0
      %3264 = vmatprep.subr.bf16.mxu0 0
      %3265 = vmatpush1.bf16.msra.mxu0 0
      %3266 = vmatprep.subr.bf16.mxu0 0
      %3267 = vmatpush1.bf16.msra.mxu0 0
      %3268 = vmatprep.mubr.bf16.mxu0 0
      %3269 = vmatmul.mubr.bf16.gmra.mrb[0].mxu0 %v3231
      %v3270 = vpop.f32.mrb[0].mxu0
      %v3271 = vadd.f32 0.0, %v3270
      %v3272 = vpop.f32.mrb[0].mxu0
      %v3273 = vpop.f32.mrb[0].mxu0
      %v3274 = vadd.f32 0.0, %v3273
      %v3275 = vpop.f32.mrb[0].mxu0
      %3276 = vmatprep.mubr.bf16.mxu0 0
      %3277 = vmatmul.mubr.bf16.gmra.mrb[0].mxu0 %v3234
      %v3278 = vpop.f32.mrb[0].mxu0
      %v3279 = vadd.f32 0.0, %v3278
      %v3280 = vpop.f32.mrb[0].mxu0
      %v3281 = vpop.f32.mrb[0].mxu0
      %v3282 = vadd.f32 0.0, %v3281
      %v3283 = vpop.f32.mrb[0].mxu0
      %3284 = vdwg.mxu0
      %3289 = vrot.lane.b32.xlu0 %v2911, 8
      %v3290 = vpop.permute.xlu0 %3289
      %3291 = vrot.lane.b32.xlu0 %v2914, 8
      %v3292 = vpop.permute.xlu0 %3291
      %3293 = vrot.lane.b32.xlu0 %v2919, 8
      %v3294 = vpop.permute.xlu0 %3293
      %3295 = vrot.lane.b32.xlu0 %v2922, 8
      %v3296 = vpop.permute.xlu0 %3295
      %3305 = vrot.lane.b32.xlu0 %v3091, 16
      %v3306 = vpop.permute.xlu0 %3305
      %3307 = vrot.lane.b32.xlu0 %v3094, 16
      %v3308 = vpop.permute.xlu0 %3307
      %3309 = vrot.lane.b32.xlu0 %v3099, 16
      %v3310 = vpop.permute.xlu0 %3309
      %3311 = vrot.lane.b32.xlu0 %v3102, 16
      %v3312 = vpop.permute.xlu0 %3311
      %3321 = vrot.lane.b32.xlu0 %v3271, 24
      %v3322 = vpop.permute.xlu0 %3321
      %3323 = vrot.lane.b32.xlu0 %v3274, 24
      %v3324 = vpop.permute.xlu0 %3323
      %3325 = vrot.lane.b32.xlu0 %v3279, 24
      %v3326 = vpop.permute.xlu0 %3325
      %3327 = vrot.lane.b32.xlu0 %v3282, 24
      %v3328 = vpop.permute.xlu0 %3327
      %v3333 = vsel %vm1309, %v2725, %v3290
      %v3334 = vsel %vm1309, %v2728, %v3292
      %v3335 = vsel %vm1309, %v2733, %v3294
      %v3336 = vsel %vm1309, %v2736, %v3296
      %v3337 = vsel %vm2141, %v3333, %v3306
      %v3338 = vsel %vm2141, %v3334, %v3308
      %v3339 = vsel %vm2141, %v3335, %v3310
      %v3340 = vsel %vm2141, %v3336, %v3312
      %v3341 = vsel %vm2146, %v3337, %v3322
      %v3342 = vsel %vm2146, %v3338, %v3324
      %v3343 = vsel %vm2146, %v3339, %v3326
      %v3344 = vsel %vm2146, %v3340, %v3328
      %v3345 = vpack.c.bf16 %v3342, %v3341
      %v3346 = vpack.c.bf16 %v3344, %v3343
      %v3347 = vld [vmem:[%s43] sm:$0x1]
      %v3349 = vlaneseq
      %v3350 = vshrl.u32 %v3349, 7
      %v3351 = vsub.s32 0, %v3350
      %v3352 = vrot.slane %v3347, %v3351
      %v3358 = vunpack.c.l.b16 %v2563
      %v3359 = vunpack.c.l.b16 %v2564
      %v3360 = vunpack.c.l.b16 %v2565
      %v3361 = vunpack.c.l.b16 %v2566
      %v3362 = vpack.c.b16 %v3359, %v3358
      %v3363 = vpack.c.b16 %v3361, %v3360
      %v3367 = vsel %vm1134, %v3345, 0
      %v3370 = vsel %vm1134, %v3346, 0
      %3372 = vmatprep.subr.bf16.mxu0 0
      %3373 = vmatpush1.bf16.msra.mxu0 %v3362
      %3374 = vmatprep.subr.bf16.mxu0 0
      %3375 = vmatpush1.bf16.msra.mxu0 %v3363
      %3376 = vmatprep.subr.bf16.mxu0 0
      %3377 = vmatpush1.bf16.msra.mxu0 0
      %3378 = vmatprep.subr.bf16.mxu0 0
      %3379 = vmatpush1.bf16.msra.mxu0 0
      %3380 = vmatprep.subr.bf16.mxu0 0
      %3381 = vmatpush1.bf16.msra.mxu0 0
      %3382 = vmatprep.subr.bf16.mxu0 0
      %3383 = vmatpush1.bf16.msra.mxu0 0
      %3384 = vmatprep.subr.bf16.mxu0 0
      %3385 = vmatpush1.bf16.msra.mxu0 0
      %3386 = vmatprep.subr.bf16.mxu0 0
      %3387 = vmatpush1.bf16.msra.mxu0 0
      %3388 = vmatprep.subr.bf16.mxu0 0
      %3389 = vmatpush1.bf16.msra.mxu0 0
      %3390 = vmatprep.subr.bf16.mxu0 0
      %3391 = vmatpush1.bf16.msra.mxu0 0
      %3392 = vmatprep.subr.bf16.mxu0 0
      %3393 = vmatpush1.bf16.msra.mxu0 0
      %3394 = vmatprep.subr.bf16.mxu0 0
      %3395 = vmatpush1.bf16.msra.mxu0 0
      %3396 = vmatprep.subr.bf16.mxu0 0
      %3397 = vmatpush1.bf16.msra.mxu0 0
      %3398 = vmatprep.subr.bf16.mxu0 0
      %3399 = vmatpush1.bf16.msra.mxu0 0
      %3400 = vmatprep.subr.bf16.mxu0 0
      %3401 = vmatpush1.bf16.msra.mxu0 0
      %3402 = vmatprep.subr.bf16.mxu0 0
      %3403 = vmatpush1.bf16.msra.mxu0 0
      %3404 = vmatprep.mubr.bf16.mxu0 0
      %3405 = vmatmul.mubr.bf16.gmra.mrb[0].mxu0 %v3367
      %v3406 = vpop.f32.mrb[0].mxu0
      %v3407 = vadd.f32 %v3352, %v3406
      %v3408 = vpop.f32.mrb[0].mxu0
      %v3409 = vpop.f32.mrb[0].mxu0
      %v3410 = vadd.f32 %v3352, %v3409
      %v3411 = vpop.f32.mrb[0].mxu0
      %3412 = vmatprep.mubr.bf16.mxu0 0
      %3413 = vmatmul.mubr.bf16.gmra.mrb[0].mxu0 %v3370
      %v3414 = vpop.f32.mrb[0].mxu0
      %v3415 = vadd.f32 %v3352, %v3414
      %v3416 = vpop.f32.mrb[0].mxu0
      %v3417 = vpop.f32.mrb[0].mxu0
      %v3418 = vadd.f32 %v3352, %v3417
      %v3419 = vpop.f32.mrb[0].mxu0
      %3420 = vdwg.mxu0
      %v3421 = vld [vmem:[%s45] sm:$0x1]
      %v3422 = vld [vmem:[%s47] sm:$0x1]
      %v3423 = vadd.f32 %v3407, %v2302
      %v3424 = vadd.f32 %v3410, %v2303
      %v3425 = vadd.f32 %v3415, %v2304
      %v3426 = vadd.f32 %v3418, %v2305
      %v3427 = vsel %vm1134, %v3423, 0.0
      %3428 = vadd.xlane.f32.xlu0 %v3427
      %v3429 = vpop.xlane.xlu0 %3428
      %v3430 = vsel %vm1134, %v3424, 0.0
      %3431 = vadd.xlane.f32.xlu0 %v3430
      %v3432 = vpop.xlane.xlu0 %3431
      %v3433 = vsel %vm1134, %v3425, 0.0
      %3434 = vadd.xlane.f32.xlu0 %v3433
      %v3435 = vpop.xlane.xlu0 %3434
      %v3436 = vsel %vm1134, %v3426, 0.0
      %3437 = vadd.xlane.f32.xlu0 %v3436
      %v3438 = vpop.xlane.xlu0 %3437
      %v3439 = vmul.f32 %v3429, %v2245
      %v3440 = vmul.f32 %v3432, %v2245
      %v3441 = vmul.f32 %v3435, %v2245
      %v3442 = vmul.f32 %v3438, %v2245
      %v3443 = vsub.f32 %v3423, %v3439
      %v3444 = vsub.f32 %v3424, %v3440
      %v3445 = vsub.f32 %v3425, %v3441
      %v3446 = vsub.f32 %v3426, %v3442
      %v3447 = vmul.f32 %v3443, %v3443
      %v3448 = vmul.f32 %v3444, %v3444
      %v3449 = vmul.f32 %v3445, %v3445
      %v3450 = vmul.f32 %v3446, %v3446
      %v3451 = vsel %vm1134, %v3447, 0.0
      %3452 = vadd.xlane.f32.xlu0 %v3451
      %v3453 = vpop.xlane.xlu0 %3452
      %v3454 = vsel %vm1134, %v3448, 0.0
      %3455 = vadd.xlane.f32.xlu0 %v3454
      %v3456 = vpop.xlane.xlu0 %3455
      %v3457 = vsel %vm1134, %v3449, 0.0
      %3458 = vadd.xlane.f32.xlu0 %v3457
      %v3459 = vpop.xlane.xlu0 %3458
      %v3460 = vsel %vm1134, %v3450, 0.0
      %3461 = vadd.xlane.f32.xlu0 %v3460
      %v3462 = vpop.xlane.xlu0 %3461
      %v3463 = vmul.f32 %v3453, %v2245
      %v3464 = vmul.f32 %v3456, %v2245
      %v3465 = vmul.f32 %v3459, %v2245
      %v3466 = vmul.f32 %v3462, %v2245
      %v3467 = vadd.f32 %v3463, 1e-05
      %v3468 = vadd.f32 %v3464, 1e-05
      %v3469 = vadd.f32 %v3465, 1e-05
      %v3470 = vadd.f32 %v3466, 1e-05
      %v3471 = vrsqrt.pop %v3467
      %v3472 = vrsqrt.pop %v3468
      %v3473 = vrsqrt.pop %v3469
      %v3474 = vrsqrt.pop %v3470
      %v3475 = vmul.f32 %v3443, %v3471
      %v3476 = vmul.f32 %v3444, %v3472
      %v3477 = vmul.f32 %v3445, %v3473
      %v3478 = vmul.f32 %v3446, %v3474
      %v3480 = vlaneseq
      %v3481 = vshrl.u32 %v3480, 7
      %v3482 = vsub.s32 0, %v3481
      %v3483 = vrot.slane %v3421, %v3482
      %v3485 = vmul.f32 %v3475, %v3483
      %v3486 = vmul.f32 %v3476, %v3483
      %v3487 = vmul.f32 %v3477, %v3483
      %v3488 = vmul.f32 %v3478, %v3483
      %v3490 = vlaneseq
      %v3491 = vshrl.u32 %v3490, 7
      %v3492 = vsub.s32 0, %v3491
      %v3493 = vrot.slane %v3422, %v3492
      %v3495 = vadd.f32 %v3485, %v3493
      %v3496 = vadd.f32 %v3486, %v3493
      %v3497 = vadd.f32 %v3487, %v3493
      %v3498 = vadd.f32 %v3488, %v3493
      %v3499 = vpack.c.bf16 %v3496, %v3495
      %v3500 = vpack.c.bf16 %v3498, %v3497
      %v3501 = vld [vmem:[%s49] sm:$0xf]
      %v3502 = vld [vmem:[%s49 + $0x4] sm:$0xf]
      %v3503 = vld [vmem:[%s49 + $0x8] sm:$0xf]
      %v3504 = vld [vmem:[%s49 + $0xc] sm:$0xf]
      %v3505 = vld [vmem:[%s51] sm:$0x1]
      %v3507 = vlaneseq
      %v3508 = vshrl.u32 %v3507, 7
      %v3509 = vsub.s32 0, %v3508
      %v3510 = vrot.slane %v3505, %v3509
      %v3516 = vunpack.c.l.b16 %v3501
      %v3517 = vunpack.c.l.b16 %v3502
      %v3518 = vunpack.c.l.b16 %v3503
      %v3519 = vunpack.c.l.b16 %v3504
      %v3520 = vpack.c.b16 %v3517, %v3516
      %v3521 = vpack.c.b16 %v3519, %v3518
      %v3525 = vsel %vm1134, %v3499, 0
      %v3528 = vsel %vm1134, %v3500, 0
      %3530 = vmatprep.subr.bf16.mxu0 0
      %3531 = vmatpush1.bf16.msra.mxu0 %v3520
      %3532 = vmatprep.subr.bf16.mxu0 0
      %3533 = vmatpush1.bf16.msra.mxu0 %v3521
      %3534 = vmatprep.subr.bf16.mxu0 0
      %3535 = vmatpush1.bf16.msra.mxu0 0
      %3536 = vmatprep.subr.bf16.mxu0 0
      %3537 = vmatpush1.bf16.msra.mxu0 0
      %3538 = vmatprep.subr.bf16.mxu0 0
      %3539 = vmatpush1.bf16.msra.mxu0 0
      %3540 = vmatprep.subr.bf16.mxu0 0
      %3541 = vmatpush1.bf16.msra.mxu0 0
      %3542 = vmatprep.subr.bf16.mxu0 0
      %3543 = vmatpush1.bf16.msra.mxu0 0
      %3544 = vmatprep.subr.bf16.mxu0 0
      %3545 = vmatpush1.bf16.msra.mxu0 0
      %3546 = vmatprep.subr.bf16.mxu0 0
      %3547 = vmatpush1.bf16.msra.mxu0 0
      %3548 = vmatprep.subr.bf16.mxu0 0
      %3549 = vmatpush1.bf16.msra.mxu0 0
      %3550 = vmatprep.subr.bf16.mxu0 0
      %3551 = vmatpush1.bf16.msra.mxu0 0
      %3552 = vmatprep.subr.bf16.mxu0 0
      %3553 = vmatpush1.bf16.msra.mxu0 0
      %3554 = vmatprep.subr.bf16.mxu0 0
      %3555 = vmatpush1.bf16.msra.mxu0 0
      %3556 = vmatprep.subr.bf16.mxu0 0
      %3557 = vmatpush1.bf16.msra.mxu0 0
      %3558 = vmatprep.subr.bf16.mxu0 0
      %3559 = vmatpush1.bf16.msra.mxu0 0
      %3560 = vmatprep.subr.bf16.mxu0 0
      %3561 = vmatpush1.bf16.msra.mxu0 0
      %3562 = vmatprep.mubr.bf16.mxu0 0
      %3563 = vmatmul.mubr.bf16.gmra.mrb[0].mxu0 %v3525
      %v3564 = vpop.f32.mrb[0].mxu0
      %v3565 = vadd.f32 %v3510, %v3564
      %v3566 = vpop.f32.mrb[0].mxu0
      %v3567 = vpop.f32.mrb[0].mxu0
      %v3568 = vadd.f32 %v3510, %v3567
      %v3569 = vpop.f32.mrb[0].mxu0
      %3570 = vmatprep.mubr.bf16.mxu0 0
      %3571 = vmatmul.mubr.bf16.gmra.mrb[0].mxu0 %v3528
      %v3572 = vpop.f32.mrb[0].mxu0
      %v3573 = vadd.f32 %v3510, %v3572
      %v3574 = vpop.f32.mrb[0].mxu0
      %v3575 = vpop.f32.mrb[0].mxu0
      %v3576 = vadd.f32 %v3510, %v3575
      %v3577 = vpop.f32.mrb[0].mxu0
      %3578 = vdwg.mxu0
      %v3579 = vmax.f32 %v3565, 0.0
      %v3580 = vmax.f32 %v3568, 0.0
      %v3581 = vmax.f32 %v3573, 0.0
      %v3582 = vmax.f32 %v3576, 0.0
      %v3583 = vpack.c.bf16 %v3580, %v3579
      %v3584 = vpack.c.bf16 %v3582, %v3581
      %v3585 = vld [vmem:[%s53] sm:$0xf]
      %v3586 = vld [vmem:[%s53 + $0x4] sm:$0xf]
      %v3587 = vld [vmem:[%s53 + $0x8] sm:$0xf]
      %v3588 = vld [vmem:[%s53 + $0xc] sm:$0xf]
      %v3589 = vld [vmem:[%s53 + $0x10] sm:$0xf]
      %v3590 = vld [vmem:[%s53 + $0x14] sm:$0xf]
      %v3591 = vld [vmem:[%s53 + $0x18] sm:$0xf]
      %v3592 = vld [vmem:[%s53 + $0x1c] sm:$0xf]
      %v3593 = vld [vmem:[%s55] sm:$0x1]
      %v3595 = vlaneseq
      %v3596 = vshrl.u32 %v3595, 7
      %v3597 = vsub.s32 0, %v3596
      %v3598 = vrot.slane %v3593, %v3597
      %v3608 = vunpack.c.l.b16 %v3585
      %v3609 = vunpack.c.l.b16 %v3586
      %v3610 = vunpack.c.l.b16 %v3587
      %v3611 = vunpack.c.l.b16 %v3588
      %v3612 = vunpack.c.l.b16 %v3589
      %v3613 = vunpack.c.l.b16 %v3590
      %v3614 = vunpack.c.l.b16 %v3591
      %v3615 = vunpack.c.l.b16 %v3592
      %v3616 = vpack.c.b16 %v3609, %v3608
      %v3617 = vpack.c.b16 %v3611, %v3610
      %v3618 = vpack.c.b16 %v3613, %v3612
      %v3619 = vpack.c.b16 %v3615, %v3614
      %v3625 = vsel %vm1381, %v3583, 0
      %v3628 = vsel %vm1381, %v3584, 0
      %3630 = vmatprep.subr.bf16.mxu0 0
      %3631 = vmatpush1.bf16.msra.mxu0 %v3616
      %3632 = vmatprep.subr.bf16.mxu0 0
      %3633 = vmatpush1.bf16.msra.mxu0 %v3617
      %3634 = vmatprep.subr.bf16.mxu0 0
      %3635 = vmatpush1.bf16.msra.mxu0 %v3618
      %3636 = vmatprep.subr.bf16.mxu0 0
      %3637 = vmatpush1.bf16.msra.mxu0 %v3619
      %3638 = vmatprep.subr.bf16.mxu0 0
      %3639 = vmatpush1.bf16.msra.mxu0 0
      %3640 = vmatprep.subr.bf16.mxu0 0
      %3641 = vmatpush1.bf16.msra.mxu0 0
      %3642 = vmatprep.subr.bf16.mxu0 0
      %3643 = vmatpush1.bf16.msra.mxu0 0
      %3644 = vmatprep.subr.bf16.mxu0 0
      %3645 = vmatpush1.bf16.msra.mxu0 0
      %3646 = vmatprep.subr.bf16.mxu0 0
      %3647 = vmatpush1.bf16.msra.mxu0 0
      %3648 = vmatprep.subr.bf16.mxu0 0
      %3649 = vmatpush1.bf16.msra.mxu0 0
      %3650 = vmatprep.subr.bf16.mxu0 0
      %3651 = vmatpush1.bf16.msra.mxu0 0
      %3652 = vmatprep.subr.bf16.mxu0 0
      %3653 = vmatpush1.bf16.msra.mxu0 0
      %3654 = vmatprep.subr.bf16.mxu0 0
      %3655 = vmatpush1.bf16.msra.mxu0 0
      %3656 = vmatprep.subr.bf16.mxu0 0
      %3657 = vmatpush1.bf16.msra.mxu0 0
      %3658 = vmatprep.subr.bf16.mxu0 0
      %3659 = vmatpush1.bf16.msra.mxu0 0
      %3660 = vmatprep.subr.bf16.mxu0 0
      %3661 = vmatpush1.bf16.msra.mxu0 0
      %3662 = vmatprep.mubr.bf16.mxu0 0
      %3663 = vmatmul.mubr.bf16.gmra.mrb[0].mxu0 %v3625
      %v3664 = vpop.f32.mrb[0].mxu0
      %v3665 = vadd.f32 %v3598, %v3664
      %v3666 = vpop.f32.mrb[0].mxu0
      %v3667 = vpop.f32.mrb[0].mxu0
      %v3668 = vadd.f32 %v3598, %v3667
      %v3669 = vpop.f32.mrb[0].mxu0
      %3670 = vmatprep.mubr.bf16.mxu0 0
      %3671 = vmatmul.mubr.bf16.gmra.mrb[0].mxu0 %v3628
      %v3672 = vpop.f32.mrb[0].mxu0
      %v3673 = vadd.f32 %v3598, %v3672
      %v3674 = vpop.f32.mrb[0].mxu0
      %v3675 = vpop.f32.mrb[0].mxu0
      %v3676 = vadd.f32 %v3598, %v3675
      %v3677 = vpop.f32.mrb[0].mxu0
      %3678 = vdwg.mxu0
      %v3679 = vld [vmem:[%s57] sm:$0x1]
      %v3680 = vld [vmem:[%s59] sm:$0x1]
      %v3681 = vadd.f32 %v3665, %v3495
      %v3682 = vadd.f32 %v3668, %v3496
      %v3683 = vadd.f32 %v3673, %v3497
      %v3684 = vadd.f32 %v3676, %v3498
      %v3685 = vsel %vm1134, %v3681, 0.0
      %3686 = vadd.xlane.f32.xlu0 %v3685
      %v3687 = vpop.xlane.xlu0 %3686
      %v3688 = vsel %vm1134, %v3682, 0.0
      %3689 = vadd.xlane.f32.xlu0 %v3688
      %v3690 = vpop.xlane.xlu0 %3689
      %v3691 = vsel %vm1134, %v3683, 0.0
      %3692 = vadd.xlane.f32.xlu0 %v3691
      %v3693 = vpop.xlane.xlu0 %3692
      %v3694 = vsel %vm1134, %v3684, 0.0
      %3695 = vadd.xlane.f32.xlu0 %v3694
      %v3696 = vpop.xlane.xlu0 %3695
      %v3697 = vmul.f32 %v3687, %v2245
      %v3698 = vmul.f32 %v3690, %v2245
      %v3699 = vmul.f32 %v3693, %v2245
      %v3700 = vmul.f32 %v3696, %v2245
      %v3701 = vsub.f32 %v3681, %v3697
      %v3702 = vsub.f32 %v3682, %v3698
      %v3703 = vsub.f32 %v3683, %v3699
      %v3704 = vsub.f32 %v3684, %v3700
      %v3705 = vmul.f32 %v3701, %v3701
      %v3706 = vmul.f32 %v3702, %v3702
      %v3707 = vmul.f32 %v3703, %v3703
      %v3708 = vmul.f32 %v3704, %v3704
      %v3709 = vsel %vm1134, %v3705, 0.0
      %3710 = vadd.xlane.f32.xlu0 %v3709
      %v3711 = vpop.xlane.xlu0 %3710
      %v3712 = vsel %vm1134, %v3706, 0.0
      %3713 = vadd.xlane.f32.xlu0 %v3712
      %v3714 = vpop.xlane.xlu0 %3713
      %v3715 = vsel %vm1134, %v3707, 0.0
      %3716 = vadd.xlane.f32.xlu0 %v3715
      %v3717 = vpop.xlane.xlu0 %3716
      %v3718 = vsel %vm1134, %v3708, 0.0
      %3719 = vadd.xlane.f32.xlu0 %v3718
      %v3720 = vpop.xlane.xlu0 %3719
      %v3721 = vmul.f32 %v3711, %v2245
      %v3722 = vmul.f32 %v3714, %v2245
      %v3723 = vmul.f32 %v3717, %v2245
      %v3724 = vmul.f32 %v3720, %v2245
      %v3725 = vadd.f32 %v3721, 1e-05
      %v3726 = vadd.f32 %v3722, 1e-05
      %v3727 = vadd.f32 %v3723, 1e-05
      %v3728 = vadd.f32 %v3724, 1e-05
      %v3729 = vrsqrt.pop %v3725
      %v3730 = vrsqrt.pop %v3726
      %v3731 = vrsqrt.pop %v3727
      %v3732 = vrsqrt.pop %v3728
      %v3733 = vmul.f32 %v3701, %v3729
      %v3734 = vmul.f32 %v3702, %v3730
      %v3735 = vmul.f32 %v3703, %v3731
      %v3736 = vmul.f32 %v3704, %v3732
      %v3738 = vlaneseq
      %v3739 = vshrl.u32 %v3738, 7
      %v3740 = vsub.s32 0, %v3739
      %v3741 = vrot.slane %v3679, %v3740
      %v3743 = vmul.f32 %v3733, %v3741
      %v3744 = vmul.f32 %v3734, %v3741
      %v3745 = vmul.f32 %v3735, %v3741
      %v3746 = vmul.f32 %v3736, %v3741
      %v3748 = vlaneseq
      %v3749 = vshrl.u32 %v3748, 7
      %v3750 = vsub.s32 0, %v3749
      %v3751 = vrot.slane %v3680, %v3750
      %v3753 = vadd.f32 %v3743, %v3751
      %v3754 = vadd.f32 %v3744, %v3751
      %v3755 = vadd.f32 %v3745, %v3751
      %v3756 = vadd.f32 %v3746, %v3751
      %3757 = vst.msk [vmem:[%s1090] sm:$0xff] %vm1134, %v3753
      %3758 = vst.msk [vmem:[%s1090 + $0x8] sm:$0xff] %vm1134, %v3754
      %3759 = vst.msk [vmem:[%s1090 + $0x10] sm:$0xff] %vm1134, %v3755
      %3760 = vst.msk [vmem:[%s1090 + $0x18] sm:$0xff] %vm1134, %v3756
      %s3761 = smul.u32 4, %s77
      %p3762 = scmp.lt.s32.totalorder %s76, 1
      %s3763 = scalar_select %p3762, %s76, 1
      %p3764 = scmp.lt.s32.totalorder %s3761, 7
      %s3765 = scalar_select %p3764, %s3761, 7
      %s3766 = smul.addr %s3763, 8
      %s3767 = sadd.s32 %s3765, %s3766
      %s3768 = smul.addr %s3767, 8
      %s3769 = scalar_lea.vmem %s61, %s3768
      // Predicated region
      $region141: #{tpu_custom_call.1} parent=139 // pred_check
        %p3770 = pneg %p770
      $region142: #{tpu_custom_call.1} parent=139 // pred_check_branch
        %3772 = sbr.rel (%p3770) target = $region144
      $region143: #{tpu_custom_call.1} parent=139 // pred_region
        %s3773 = smul.u32 4, %s77
      $region144: #{tpu_custom_call.1} parent=139 // pred_fallthru
        _
    $region140: #{tpu_custom_call.1} parent=5 // pred_fallthru
      _
    %p3774 = scmp.le.s32.totalorder 2, %s67
    // Predicated region
    $region145: #{tpu_custom_call.1} parent=5 // pred_check
      %p3775 = pneg %p3774
    $region146: #{tpu_custom_call.1} parent=5 // pred_check_branch
      %3777 = sbr.rel (%p3775) target = $region148
    $region147: #{tpu_custom_call.1} parent=5 // pred_region
      %s3778 = ssub.s32 %s67, 2
      // Predicated region
      $region149: #{tpu_custom_call.1} parent=147 // pred_check
        %p3779 = pneg %p776
      $region150: #{tpu_custom_call.1} parent=147 // pred_check_branch
        %3781 = sbr.rel (%p3779) target = $region152
      $region151: #{tpu_custom_call.1} parent=147 // pred_region
        %s3782 = smul.u32 4, %s79
        %p3783 = scmp.lt.s32.totalorder %s78, 1
        %s3784 = scalar_select %p3783, %s78, 1
        %p3785 = scmp.lt.s32.totalorder %s3782, 7
        %s3786 = scalar_select %p3785, %s3782, 7
        %s3787 = smul.addr %s3784, 8
        %s3788 = sadd.s32 %s3786, %s3787
        %s3789 = smul.addr %s3788, 8
        %s3790 = scalar_lea.vmem %s61, %s3789
      $region152: #{tpu_custom_call.1} parent=147 // pred_fallthru
        _
    $region148: #{tpu_custom_call.1} parent=5 // pred_fallthru
      _
  $region6: #{tpu_custom_call.1} parent=0 // loop_footer
    %s71 = sadd.s32 1, %s67
  $region7: #{tpu_custom_call.1} parent=0 // loop_footer_branch
    %66 = sbr.rel target = $region3
  $region8: #{tpu_custom_call.1} parent=0 // loop_exit
    _

</llo_original>
